<compile_context>
chip_gen: v5e
topology: v5e:2x2
jax: 0.10.0
libtpu: 0.0.40
codegen_flags: <defaults>
</compile_context>

<pallas_src>
import functools
from math import pi

import jax
import jax.numpy as jnp
from jax import random
from jax.experimental import pallas as pl
from jax.experimental.pallas import tpu as pltpu  # noqa: F401  (TPU backend)
from jax.scipy.special import gammaln, digamma

# ----------------------------- hyperparameters ------------------------------
BATCH = 8
NX = 256          # 1 * 16 * 16 flattened image (nn.Flatten on NCHW)
NH = 256
NZ = 32
NW = 32
NCLASSES = 8
NUMHIDDEN = 3
DSCALE = 1.0
WSCALE = 1.0
YSCALE = 1.0
ZSCALE = 1.0
CONCENTRATION = 0.5
BN_EPS = 1e-5
LEAKY_SLOPE = 0.01
EPS = 1e-6

PARAMS_PER_NET = 2 * (NUMHIDDEN + 1)          # (W, b) per layer
NET_ORDER = ("Qwz", "Qy", "Qd", "Px", "Pz")

# misc output slab layout (lane-dense, padded to 128 lanes)
MISC_WIDTH = 128
_MISC_USED = NW + NZ + 3 * NCLASSES           # w | z | qy_logits | qd_logits | q_y
MISC_PAD = MISC_WIDTH - _MISC_USED            # 40 zero lanes


# ------------------------------ Pallas kernel --------------------------------
def _fused_forward_kernel(x_ref, noise_w_ref, noise_z_ref, *refs):
    """Whole VAE forward in one kernel invocation (no grid, all in VMEM).

    Ref layout after the three data refs:
        [ (W,b) x 4 for Qwz, Qy, Qd, Px, Pz ]  -- 40 refs, bf16 W / f32 b
        [ wz_out (B,128), misc_out (B,128), rec_out (B,NX), zw_out (B,2*K*NZ) ]
    """
    pos = 0
    nets = []
    for _ in range(len(NET_ORDER)):
        nets.append(refs[pos:pos + PARAMS_PER_NET])
        pos += PARAMS_PER_NET
    qwz_p, qy_p, qd_p, px_p, pz_p = nets
    wz_out, misc_out, rec_out, zw_out = refs[pos:pos + 4]

    def mlp(h, prms):
        nl = len(prms) // 2
        for l in range(nl):
            W = prms[2 * l][...]                       # bf16 (K, N)
            b = prms[2 * l + 1][...]                   # f32  (1, N)
            h = jnp.dot(h.astype(W.dtype), W,
                        preferred_element_type=jnp.float32) + b
            if l < nl - 1:
                h = jnp.maximum(h, LEAKY_SLOPE * h)    # LeakyReLU
        return h

    # ----- Qwz encoder -----
    x = x_ref[...]
    wz = mlp(x, qwz_p)                                 # (B, 2*(NW+NZ)) = (B,128)
    wz_out[...] = wz.astype(wz_out.dtype)

    # Unflatten(1, (2, nz+nw)) convention: row 0 = means, row 1 = logvars.
    mu_w = wz[:, :NW]
    mu_z = wz[:, NW:NW + NZ]
    logvar_w = wz[:, NW + NZ:2 * NW + NZ]
    logvar_z = wz[:, 2 * NW + NZ:]

    # ----- reparameterization (noise supplied as tiny f32 inputs) -----
    w = mu_w + noise_w_ref[...] * jnp.exp(0.5 * logvar_w)
    z = mu_z + noise_z_ref[...] * jnp.exp(0.5 * logvar_z)
    wz_cat = jnp.concatenate([w, z], axis=-1)          # (B, NW+NZ)

    # ----- Qy / Qd heads -----
    qy_logits = mlp(wz_cat, qy_p)                      # (B, NCLASSES)
    qd_logits = mlp(wz_cat, qd_p)                      # (B, NCLASSES)

    m = jnp.max(qy_logits, axis=-1, keepdims=True)
    e = jnp.exp(qy_logits - m)
    q_y = e / jnp.sum(e, axis=-1, keepdims=True)
    q_y = EPS / NCLASSES + (1.0 - EPS) * q_y

    # ----- Px / Pz decoders -----
    rec = mlp(z, px_p)                                 # (B, NX)
    zw = mlp(w, pz_p)                                  # (B, 2*NCLASSES*NZ)
    rec_out[...] = rec.astype(rec_out.dtype)
    zw_out[...] = zw.astype(zw_out.dtype)

    # ----- lane-dense misc slab: single unmasked (B, 128) store -----
    B = x.shape[0]
    pad = jnp.zeros((B, MISC_PAD), jnp.float32)
    misc_out[...] = jnp.concatenate(
        [w, z, qy_logits, qd_logits, q_y, pad], axis=-1).astype(misc_out.dtype)


def fused_forward(x, noise_w, noise_z, params):
    """Single pallas_call for the whole forward. No grid: every array is one
    full-extent VMEM block (~2 MB bf16 weights total, far under VMEM)."""
    B = x.shape[0]
    args = [x, noise_w, noise_z]
    for net in NET_ORDER:
        for layer in params[net]:
            args.append(layer["W"])
            args.append(layer["b"])
    out_shape = (
        jax.ShapeDtypeStruct((B, 2 * (NW + NZ)), jnp.float32),      # wz_flat
        jax.ShapeDtypeStruct((B, MISC_WIDTH), jnp.float32),         # misc slab
        jax.ShapeDtypeStruct((B, NX), jnp.float32),                 # rec
        jax.ShapeDtypeStruct((B, 2 * NCLASSES * NZ), jnp.float32),  # z_w flat
    )
    return pl.pallas_call(_fused_forward_kernel, out_shape=out_shape)(*args)


# ------------------------------ parameter init ------------------------------
def init_mlp(key, sizes):
    """PyTorch-Linear-style init; eval-mode BatchNorm affine (gamma=1, beta=0,
    running stats (0,1)) folded into W/b of the hidden layers. Weights are
    stored bf16 (MXU-native), biases stay f32."""
    layers = []
    nl = len(sizes) - 1
    for i in range(nl):
        fan_in, fan_out = sizes[i], sizes[i + 1]
        key, k1, k2 = random.split(key, 3)
        bound = 1.0 / jnp.sqrt(float(fan_in))
        W = random.uniform(k1, (fan_in, fan_out), jnp.float32, -bound, bound)
        b = random.uniform(k2, (fan_out,), jnp.float32, -bound, bound)
        if i < nl - 1:
            bn_scale = 1.0 / jnp.sqrt(1.0 + BN_EPS)   # fold BN(eval) affine
            W = W * bn_scale
            b = b * bn_scale
        layers.append(dict(W=W.astype(jnp.bfloat16),
                           b=b.reshape(1, fan_out).astype(jnp.float32)))
    return layers, key


def init_model(key):
    hid = NUMHIDDEN * [NH]
    params = {}
    params["Qwz"], key = init_mlp(key, [NX] + hid + [2 * NW + 2 * NZ])
    params["Qy"], key = init_mlp(key, [NW + NZ] + hid + [NCLASSES])
    params["Qd"], key = init_mlp(key, [NW + NZ] + hid + [NCLASSES])
    params["Px"], key = init_mlp(key, [NZ] + hid + [NX])
    params["Pz"], key = init_mlp(key, [NW] + hid + [2 * NCLASSES * NZ])
    logsigma_x = jnp.zeros((NX,), jnp.float32)   # nn.Parameter(zeros(nx))
    return params, logsigma_x


# ------------------------------ helper math ---------------------------------
def softclip(x, lo, hi):
    # ut.softclip(logsigma_x, -8, 8): soft clamp to [lo, hi]
    return lo + jax.nn.softplus(x - lo) - jax.nn.softplus(x - hi)


def kld2normal(mu, logvar, mu2, logvar2):
    # KL( N(mu, exp(logvar)) || N(mu2, exp(logvar2)) ), elementwise
    return 0.5 * (-1.0 + logvar2 - logvar + jnp.exp(logvar - logvar2)
                  + (mu - mu2) ** 2 / jnp.exp(logvar2))


def dirichlet_kl(alpha, beta):
    # KL( Dir(alpha) || Dir(beta) ); alpha (B, K), beta (K,)
    a0 = alpha.sum(-1)
    b0 = beta.sum(-1)
    t1 = gammaln(a0) - gammaln(b0)
    t2 = (gammaln(beta) - gammaln(alpha)).sum(-1)
    t3 = ((alpha - beta) * (digamma(alpha) - digamma(a0)[..., None])).sum(-1)
    return t1 + t2 + t3


# ------------------------------ forward pass ---------------------------------
def forward_impl(params, logsigma_x, x_img, key):
    eps = EPS
    B = x_img.shape[0]
    x = x_img.reshape(B, -1)                     # nn.Flatten on NCHW

    k_w, k_z, k_dir = random.split(key, 3)
    noise_w = random.normal(k_w, (B, NW), jnp.float32)
    noise_z = random.normal(k_z, (B, NZ), jnp.float32)

    # ----- whole network in one fused Pallas kernel -----
    wz_flat, misc, rec, zw_flat = fused_forward(x, noise_w, noise_z, params)

    wz = wz_flat.reshape(B, 2, NW + NZ)
    mu_w = wz_flat[:, :NW]
    mu_z = wz_flat[:, NW:NW + NZ]
    logvar_w = wz_flat[:, NW + NZ:2 * NW + NZ]
    logvar_z = wz_flat[:, 2 * NW + NZ:]

    off = NW + NZ
    w = misc[:, :NW]
    z = misc[:, NW:off]
    q_y_logits = misc[:, off:off + NCLASSES]
    d_logits = misc[:, off + NCLASSES:off + 2 * NCLASSES]
    q_y = misc[:, off + 2 * NCLASSES:off + 3 * NCLASSES]

    alpha = jnp.exp(d_logits)                    # Dirichlet concentration D_y

    # ----- reconstruction (Gauss) -----
    ls_x = softclip(logsigma_x, -8.0, 8.0)
    sigma_x = jnp.exp(ls_x)
    log_prob = (-0.5 * ((x - rec) / sigma_x) ** 2
                - ls_x - 0.5 * jnp.log(2.0 * pi))
    loss_rec = -log_prob.sum(-1).mean()

    # ----- Pz KL term -----
    z_w = zw_flat.reshape(B, NCLASSES, 2 * NZ)
    mu_z_w = z_w[:, :, :NZ]
    logvar_z_w = z_w[:, :, NZ:]
    loss_z_mat = ZSCALE * kld2normal(mu_z[:, None, :], logvar_z[:, None, :],
                                     mu_z_w, logvar_z_w).sum(-1)  # (B, K)

    # ----- Dirichlet sample / priors -----
    lp_y = jnp.full((NCLASSES,), jnp.log(1.0 / NCLASSES), jnp.float32)
    p_y = random.dirichlet(k_dir, alpha)         # D_y.rsample()
    p_y = eps / NCLASSES + (1.0 - eps) * p_y

    # y is None branch (Type1004C: weight by q_y)
    loss_z = (q_y * loss_z_mat).sum(-1).mean()
    loss_y_alt = YSCALE * (q_y * (jnp.log(q_y) - jnp.log(p_y))).sum(-1).mean()
    loss_y_alt2 = jnp.float32(0.0)

    kld_w = -0.5 * (1.0 + logvar_w - mu_w ** 2 - jnp.exp(logvar_w))
    loss_w = WSCALE * kld_w.sum(-1).mean()

    q_y_mean = q_y.mean(0)
    loss_l = (q_y_mean * (jnp.log(q_y_mean) - lp_y)).sum()
    loss_l_alt = (q_y * (jnp.log(q_y) - lp_y)).sum(-1).mean()
    loss_y = -1.0 * q_y.max(-1).mean()

    beta = jnp.full((NCLASSES,), CONCENTRATION, jnp.float32)
    loss_d = DSCALE * dirichlet_kl(alpha, beta).mean()

    total_loss = (loss_rec + loss_z + loss_w + loss_d
                  + loss_y_alt + loss_y_alt2)
    num_clusters = jnp.sum(
        jnp.where(q_y > 0.5, q_y, 0.0).sum(0) > 0).astype(jnp.int32)

    losses = dict(rec=loss_rec, loss_z=loss_z, loss_w=loss_w, loss_l=loss_l,
                  loss_l_alt=loss_l_alt, loss_y=loss_y, loss_d=loss_d,
                  loss_y_alt=loss_y_alt, loss_y_alt2=loss_y_alt2,
                  total_loss=total_loss, num_clusters=num_clusters)
    output = dict(wz=wz, mu_z=mu_z, mu_w=mu_w, logvar_z=logvar_z,
                  logvar_w=logvar_w, q_y=q_y, d_logits=d_logits,
                  w=w, z=z, rec=rec, p_y=p_y, losses=losses)
    return output


forward = jax.jit(forward_impl)


# ---------------------------------- main -------------------------------------
if __name__ == "__main__":
    root = random.PRNGKey(0)
    k_param, k_data, k_noise = random.split(root, 3)

    params, logsigma_x = init_model(k_param)
    x = random.uniform(k_data, (BATCH, 1, 16, 16), jnp.float32)   # NCHW input

    out = forward(params, logsigma_x, x, k_noise)
    out = jax.block_until_ready(out)

    total = float(out["losses"]["total_loss"])
    if not jnp.isfinite(total):
        raise RuntimeError("non-finite total loss")
    print("KERNEL_OK")
</pallas_src>

<mosaic_0001>
module attributes {stable_mosaic.version = 11 : i64} {
  func.func @_fused_forward_kernel(%arg0: memref<8x256xf32, #tpu.memory_space<vmem>>, %arg1: memref<8x32xf32, #tpu.memory_space<vmem>>, %arg2: memref<8x32xf32, #tpu.memory_space<vmem>>, %arg3: memref<256x256xbf16, #tpu.memory_space<vmem>>, %arg4: memref<1x256xf32, #tpu.memory_space<vmem>>, %arg5: memref<256x256xbf16, #tpu.memory_space<vmem>>, %arg6: memref<1x256xf32, #tpu.memory_space<vmem>>, %arg7: memref<256x256xbf16, #tpu.memory_space<vmem>>, %arg8: memref<1x256xf32, #tpu.memory_space<vmem>>, %arg9: memref<256x128xbf16, #tpu.memory_space<vmem>>, %arg10: memref<1x128xf32, #tpu.memory_space<vmem>>, %arg11: memref<64x256xbf16, #tpu.memory_space<vmem>>, %arg12: memref<1x256xf32, #tpu.memory_space<vmem>>, %arg13: memref<256x256xbf16, #tpu.memory_space<vmem>>, %arg14: memref<1x256xf32, #tpu.memory_space<vmem>>, %arg15: memref<256x256xbf16, #tpu.memory_space<vmem>>, %arg16: memref<1x256xf32, #tpu.memory_space<vmem>>, %arg17: memref<256x8xbf16, #tpu.memory_space<vmem>>, %arg18: memref<1x8xf32, #tpu.memory_space<vmem>>, %arg19: memref<64x256xbf16, #tpu.memory_space<vmem>>, %arg20: memref<1x256xf32, #tpu.memory_space<vmem>>, %arg21: memref<256x256xbf16, #tpu.memory_space<vmem>>, %arg22: memref<1x256xf32, #tpu.memory_space<vmem>>, %arg23: memref<256x256xbf16, #tpu.memory_space<vmem>>, %arg24: memref<1x256xf32, #tpu.memory_space<vmem>>, %arg25: memref<256x8xbf16, #tpu.memory_space<vmem>>, %arg26: memref<1x8xf32, #tpu.memory_space<vmem>>, %arg27: memref<32x256xbf16, #tpu.memory_space<vmem>>, %arg28: memref<1x256xf32, #tpu.memory_space<vmem>>, %arg29: memref<256x256xbf16, #tpu.memory_space<vmem>>, %arg30: memref<1x256xf32, #tpu.memory_space<vmem>>, %arg31: memref<256x256xbf16, #tpu.memory_space<vmem>>, %arg32: memref<1x256xf32, #tpu.memory_space<vmem>>, %arg33: memref<256x256xbf16, #tpu.memory_space<vmem>>, %arg34: memref<1x256xf32, #tpu.memory_space<vmem>>, %arg35: memref<32x256xbf16, #tpu.memory_space<vmem>>, %arg36: memref<1x256xf32, #tpu.memory_space<vmem>>, %arg37: memref<256x256xbf16, #tpu.memory_space<vmem>>, %arg38: memref<1x256xf32, #tpu.memory_space<vmem>>, %arg39: memref<256x256xbf16, #tpu.memory_space<vmem>>, %arg40: memref<1x256xf32, #tpu.memory_space<vmem>>, %arg41: memref<256x512xbf16, #tpu.memory_space<vmem>>, %arg42: memref<1x512xf32, #tpu.memory_space<vmem>>, %arg43: memref<8x128xf32, #tpu.memory_space<vmem>>, %arg44: memref<8x128xf32, #tpu.memory_space<vmem>>, %arg45: memref<8x256xf32, #tpu.memory_space<vmem>>, %arg46: memref<8x512xf32, #tpu.memory_space<vmem>>) attributes {dimension_semantics = [], scalar_prefetch = 0 : i64, scratch_operands = 0 : i64, tpu.core_type = #tpu.core_type<tc>} {
    %c0 = arith.constant 0 : index
    %c0_0 = arith.constant 0 : index
    %0 = vector.load %arg0[%c0, %c0_0] : memref<8x256xf32, #tpu.memory_space<vmem>>, vector<8x256xf32>
    %c0_1 = arith.constant 0 : index
    %c0_2 = arith.constant 0 : index
    %1 = vector.load %arg3[%c0_1, %c0_2] : memref<256x256xbf16, #tpu.memory_space<vmem>>, vector<256x256xbf16>
    %c0_3 = arith.constant 0 : index
    %c0_4 = arith.constant 0 : index
    %2 = vector.load %arg4[%c0_3, %c0_4] : memref<1x256xf32, #tpu.memory_space<vmem>>, vector<1x256xf32>
    %3 = arith.truncf %0 : vector<8x256xf32> to vector<8x256xbf16>
    %cst = arith.constant dense<0.000000e+00> : vector<8x256xf32>
    %4 = tpu.matmul %3, %1, %cst {dimension_numbers = #tpu.dot_dimension_numbers<[1], [0], [0], [1], [0, 0, 1, 1], [], []>} : vector<8x256xbf16>, vector<256x256xbf16>, vector<8x256xf32> -> vector<8x256xf32>
    %5 = vector.broadcast %2 : vector<1x256xf32> to vector<8x256xf32>
    %6 = arith.addf %4, %5 : vector<8x256xf32>
    %cst_5 = arith.constant 0.00999999977 : f32
    %7 = vector.broadcast %cst_5 : f32 to vector<8x256xf32>
    %8 = arith.mulf %7, %6 : vector<8x256xf32>
    %9 = arith.maximumf %6, %8 : vector<8x256xf32>
    %c0_6 = arith.constant 0 : index
    %c0_7 = arith.constant 0 : index
    %10 = vector.load %arg5[%c0_6, %c0_7] : memref<256x256xbf16, #tpu.memory_space<vmem>>, vector<256x256xbf16>
    %c0_8 = arith.constant 0 : index
    %c0_9 = arith.constant 0 : index
    %11 = vector.load %arg6[%c0_8, %c0_9] : memref<1x256xf32, #tpu.memory_space<vmem>>, vector<1x256xf32>
    %12 = arith.truncf %9 : vector<8x256xf32> to vector<8x256xbf16>
    %cst_10 = arith.constant dense<0.000000e+00> : vector<8x256xf32>
    %13 = tpu.matmul %12, %10, %cst_10 {dimension_numbers = #tpu.dot_dimension_numbers<[1], [0], [0], [1], [0, 0, 1, 1], [], []>} : vector<8x256xbf16>, vector<256x256xbf16>, vector<8x256xf32> -> vector<8x256xf32>
    %14 = vector.broadcast %11 : vector<1x256xf32> to vector<8x256xf32>
    %15 = arith.addf %13, %14 : vector<8x256xf32>
    %cst_11 = arith.constant 0.00999999977 : f32
    %16 = vector.broadcast %cst_11 : f32 to vector<8x256xf32>
    %17 = arith.mulf %16, %15 : vector<8x256xf32>
    %18 = arith.maximumf %15, %17 : vector<8x256xf32>
    %c0_12 = arith.constant 0 : index
    %c0_13 = arith.constant 0 : index
    %19 = vector.load %arg7[%c0_12, %c0_13] : memref<256x256xbf16, #tpu.memory_space<vmem>>, vector<256x256xbf16>
    %c0_14 = arith.constant 0 : index
    %c0_15 = arith.constant 0 : index
    %20 = vector.load %arg8[%c0_14, %c0_15] : memref<1x256xf32, #tpu.memory_space<vmem>>, vector<1x256xf32>
    %21 = arith.truncf %18 : vector<8x256xf32> to vector<8x256xbf16>
    %cst_16 = arith.constant dense<0.000000e+00> : vector<8x256xf32>
    %22 = tpu.matmul %21, %19, %cst_16 {dimension_numbers = #tpu.dot_dimension_numbers<[1], [0], [0], [1], [0, 0, 1, 1], [], []>} : vector<8x256xbf16>, vector<256x256xbf16>, vector<8x256xf32> -> vector<8x256xf32>
    %23 = vector.broadcast %20 : vector<1x256xf32> to vector<8x256xf32>
    %24 = arith.addf %22, %23 : vector<8x256xf32>
    %cst_17 = arith.constant 0.00999999977 : f32
    %25 = vector.broadcast %cst_17 : f32 to vector<8x256xf32>
    %26 = arith.mulf %25, %24 : vector<8x256xf32>
    %27 = arith.maximumf %24, %26 : vector<8x256xf32>
    %c0_18 = arith.constant 0 : index
    %c0_19 = arith.constant 0 : index
    %28 = vector.load %arg9[%c0_18, %c0_19] : memref<256x128xbf16, #tpu.memory_space<vmem>>, vector<256x128xbf16>
    %c0_20 = arith.constant 0 : index
    %c0_21 = arith.constant 0 : index
    %29 = vector.load %arg10[%c0_20, %c0_21] : memref<1x128xf32, #tpu.memory_space<vmem>>, vector<1x128xf32>
    %30 = arith.truncf %27 : vector<8x256xf32> to vector<8x256xbf16>
    %cst_22 = arith.constant dense<0.000000e+00> : vector<8x128xf32>
    %31 = tpu.matmul %30, %28, %cst_22 {dimension_numbers = #tpu.dot_dimension_numbers<[1], [0], [0], [1], [0, 0, 1, 1], [], []>} : vector<8x256xbf16>, vector<256x128xbf16>, vector<8x128xf32> -> vector<8x128xf32>
    %32 = vector.broadcast %29 : vector<1x128xf32> to vector<8x128xf32>
    %33 = arith.addf %31, %32 : vector<8x128xf32>
    %c0_23 = arith.constant 0 : index
    %c0_24 = arith.constant 0 : index
    %34 = vector.load %arg43[%c0_23, %c0_24] : memref<8x128xf32, #tpu.memory_space<vmem>>, vector<8x128xf32>
    tpu.vector_store %arg43[%c0_23, %c0_24], %33 {strides = array<i32>} : memref<8x128xf32, #tpu.memory_space<vmem>>, vector<8x128xf32>,
    %35 = vector.extract_strided_slice %33 {offsets = [0, 0], sizes = [8, 32], strides = [1, 1]} : vector<8x128xf32> to vector<8x32xf32>
    %36 = vector.extract_strided_slice %33 {offsets = [0, 32], sizes = [8, 32], strides = [1, 1]} : vector<8x128xf32> to vector<8x32xf32>
    %37 = vector.extract_strided_slice %33 {offsets = [0, 64], sizes = [8, 32], strides = [1, 1]} : vector<8x128xf32> to vector<8x32xf32>
    %38 = vector.extract_strided_slice %33 {offsets = [0, 96], sizes = [8, 32], strides = [1, 1]} : vector<8x128xf32> to vector<8x32xf32>
    %c0_25 = arith.constant 0 : index
    %c0_26 = arith.constant 0 : index
    %39 = vector.load %arg1[%c0_25, %c0_26] : memref<8x32xf32, #tpu.memory_space<vmem>>, vector<8x32xf32>
    %cst_27 = arith.constant 5.000000e-01 : f32
    %40 = vector.broadcast %cst_27 : f32 to vector<8x32xf32>
    %41 = arith.mulf %40, %37 : vector<8x32xf32>
    %42 = math.exp %41 : vector<8x32xf32>
    %43 = arith.mulf %39, %42 : vector<8x32xf32>
    %44 = arith.addf %35, %43 : vector<8x32xf32>
    %c0_28 = arith.constant 0 : index
    %c0_29 = arith.constant 0 : index
    %45 = vector.load %arg2[%c0_28, %c0_29] : memref<8x32xf32, #tpu.memory_space<vmem>>, vector<8x32xf32>
    %cst_30 = arith.constant 5.000000e-01 : f32
    %46 = vector.broadcast %cst_30 : f32 to vector<8x32xf32>
    %47 = arith.mulf %46, %38 : vector<8x32xf32>
    %48 = math.exp %47 : vector<8x32xf32>
    %49 = arith.mulf %45, %48 : vector<8x32xf32>
    %50 = arith.addf %36, %49 : vector<8x32xf32>
    %51 = tpu.concatenate %44, %50 in 1 : vector<8x32xf32>, vector<8x32xf32> -> vector<8x64xf32>
    %c0_31 = arith.constant 0 : index
    %c0_32 = arith.constant 0 : index
    %52 = vector.load %arg11[%c0_31, %c0_32] : memref<64x256xbf16, #tpu.memory_space<vmem>>, vector<64x256xbf16>
    %c0_33 = arith.constant 0 : index
    %c0_34 = arith.constant 0 : index
    %53 = vector.load %arg12[%c0_33, %c0_34] : memref<1x256xf32, #tpu.memory_space<vmem>>, vector<1x256xf32>
    %54 = arith.truncf %51 : vector<8x64xf32> to vector<8x64xbf16>
    %cst_35 = arith.constant dense<0.000000e+00> : vector<8x256xf32>
    %55 = tpu.matmul %54, %52, %cst_35 {dimension_numbers = #tpu.dot_dimension_numbers<[1], [0], [0], [1], [0, 0, 1, 1], [], []>} : vector<8x64xbf16>, vector<64x256xbf16>, vector<8x256xf32> -> vector<8x256xf32>
    %56 = vector.broadcast %53 : vector<1x256xf32> to vector<8x256xf32>
    %57 = arith.addf %55, %56 : vector<8x256xf32>
    %cst_36 = arith.constant 0.00999999977 : f32
    %58 = vector.broadcast %cst_36 : f32 to vector<8x256xf32>
    %59 = arith.mulf %58, %57 : vector<8x256xf32>
    %60 = arith.maximumf %57, %59 : vector<8x256xf32>
    %c0_37 = arith.constant 0 : index
    %c0_38 = arith.constant 0 : index
    %61 = vector.load %arg13[%c0_37, %c0_38] : memref<256x256xbf16, #tpu.memory_space<vmem>>, vector<256x256xbf16>
    %c0_39 = arith.constant 0 : index
    %c0_40 = arith.constant 0 : index
    %62 = vector.load %arg14[%c0_39, %c0_40] : memref<1x256xf32, #tpu.memory_space<vmem>>, vector<1x256xf32>
    %63 = arith.truncf %60 : vector<8x256xf32> to vector<8x256xbf16>
    %cst_41 = arith.constant dense<0.000000e+00> : vector<8x256xf32>
    %64 = tpu.matmul %63, %61, %cst_41 {dimension_numbers = #tpu.dot_dimension_numbers<[1], [0], [0], [1], [0, 0, 1, 1], [], []>} : vector<8x256xbf16>, vector<256x256xbf16>, vector<8x256xf32> -> vector<8x256xf32>
    %65 = vector.broadcast %62 : vector<1x256xf32> to vector<8x256xf32>
    %66 = arith.addf %64, %65 : vector<8x256xf32>
    %cst_42 = arith.constant 0.00999999977 : f32
    %67 = vector.broadcast %cst_42 : f32 to vector<8x256xf32>
    %68 = arith.mulf %67, %66 : vector<8x256xf32>
    %69 = arith.maximumf %66, %68 : vector<8x256xf32>
    %c0_43 = arith.constant 0 : index
    %c0_44 = arith.constant 0 : index
    %70 = vector.load %arg15[%c0_43, %c0_44] : memref<256x256xbf16, #tpu.memory_space<vmem>>, vector<256x256xbf16>
    %c0_45 = arith.constant 0 : index
    %c0_46 = arith.constant 0 : index
    %71 = vector.load %arg16[%c0_45, %c0_46] : memref<1x256xf32, #tpu.memory_space<vmem>>, vector<1x256xf32>
    %72 = arith.truncf %69 : vector<8x256xf32> to vector<8x256xbf16>
    %cst_47 = arith.constant dense<0.000000e+00> : vector<8x256xf32>
    %73 = tpu.matmul %72, %70, %cst_47 {dimension_numbers = #tpu.dot_dimension_numbers<[1], [0], [0], [1], [0, 0, 1, 1], [], []>} : vector<8x256xbf16>, vector<256x256xbf16>, vector<8x256xf32> -> vector<8x256xf32>
    %74 = vector.broadcast %71 : vector<1x256xf32> to vector<8x256xf32>
    %75 = arith.addf %73, %74 : vector<8x256xf32>
    %cst_48 = arith.constant 0.00999999977 : f32
    %76 = vector.broadcast %cst_48 : f32 to vector<8x256xf32>
    %77 = arith.mulf %76, %75 : vector<8x256xf32>
    %78 = arith.maximumf %75, %77 : vector<8x256xf32>
    %c0_49 = arith.constant 0 : index
    %c0_50 = arith.constant 0 : index
    %79 = vector.load %arg17[%c0_49, %c0_50] : memref<256x8xbf16, #tpu.memory_space<vmem>>, vector<256x8xbf16>
    %c0_51 = arith.constant 0 : index
    %c0_52 = arith.constant 0 : index
    %80 = vector.load %arg18[%c0_51, %c0_52] : memref<1x8xf32, #tpu.memory_space<vmem>>, vector<1x8xf32>
    %81 = arith.truncf %78 : vector<8x256xf32> to vector<8x256xbf16>
    %cst_53 = arith.constant dense<0.000000e+00> : vector<8x8xf32>
    %82 = tpu.matmul %81, %79, %cst_53 {dimension_numbers = #tpu.dot_dimension_numbers<[1], [0], [0], [1], [0, 0, 1, 1], [], []>} : vector<8x256xbf16>, vector<256x8xbf16>, vector<8x8xf32> -> vector<8x8xf32>
    %83 = vector.broadcast %80 : vector<1x8xf32> to vector<8x8xf32>
    %84 = arith.addf %82, %83 : vector<8x8xf32>
    %c0_54 = arith.constant 0 : index
    %c0_55 = arith.constant 0 : index
    %85 = vector.load %arg19[%c0_54, %c0_55] : memref<64x256xbf16, #tpu.memory_space<vmem>>, vector<64x256xbf16>
    %c0_56 = arith.constant 0 : index
    %c0_57 = arith.constant 0 : index
    %86 = vector.load %arg20[%c0_56, %c0_57] : memref<1x256xf32, #tpu.memory_space<vmem>>, vector<1x256xf32>
    %87 = arith.truncf %51 : vector<8x64xf32> to vector<8x64xbf16>
    %cst_58 = arith.constant dense<0.000000e+00> : vector<8x256xf32>
    %88 = tpu.matmul %87, %85, %cst_58 {dimension_numbers = #tpu.dot_dimension_numbers<[1], [0], [0], [1], [0, 0, 1, 1], [], []>} : vector<8x64xbf16>, vector<64x256xbf16>, vector<8x256xf32> -> vector<8x256xf32>
    %89 = vector.broadcast %86 : vector<1x256xf32> to vector<8x256xf32>
    %90 = arith.addf %88, %89 : vector<8x256xf32>
    %cst_59 = arith.constant 0.00999999977 : f32
    %91 = vector.broadcast %cst_59 : f32 to vector<8x256xf32>
    %92 = arith.mulf %91, %90 : vector<8x256xf32>
    %93 = arith.maximumf %90, %92 : vector<8x256xf32>
    %c0_60 = arith.constant 0 : index
    %c0_61 = arith.constant 0 : index
    %94 = vector.load %arg21[%c0_60, %c0_61] : memref<256x256xbf16, #tpu.memory_space<vmem>>, vector<256x256xbf16>
    %c0_62 = arith.constant 0 : index
    %c0_63 = arith.constant 0 : index
    %95 = vector.load %arg22[%c0_62, %c0_63] : memref<1x256xf32, #tpu.memory_space<vmem>>, vector<1x256xf32>
    %96 = arith.truncf %93 : vector<8x256xf32> to vector<8x256xbf16>
    %cst_64 = arith.constant dense<0.000000e+00> : vector<8x256xf32>
    %97 = tpu.matmul %96, %94, %cst_64 {dimension_numbers = #tpu.dot_dimension_numbers<[1], [0], [0], [1], [0, 0, 1, 1], [], []>} : vector<8x256xbf16>, vector<256x256xbf16>, vector<8x256xf32> -> vector<8x256xf32>
    %98 = vector.broadcast %95 : vector<1x256xf32> to vector<8x256xf32>
    %99 = arith.addf %97, %98 : vector<8x256xf32>
    %cst_65 = arith.constant 0.00999999977 : f32
    %100 = vector.broadcast %cst_65 : f32 to vector<8x256xf32>
    %101 = arith.mulf %100, %99 : vector<8x256xf32>
    %102 = arith.maximumf %99, %101 : vector<8x256xf32>
    %c0_66 = arith.constant 0 : index
    %c0_67 = arith.constant 0 : index
    %103 = vector.load %arg23[%c0_66, %c0_67] : memref<256x256xbf16, #tpu.memory_space<vmem>>, vector<256x256xbf16>
    %c0_68 = arith.constant 0 : index
    %c0_69 = arith.constant 0 : index
    %104 = vector.load %arg24[%c0_68, %c0_69] : memref<1x256xf32, #tpu.memory_space<vmem>>, vector<1x256xf32>
    %105 = arith.truncf %102 : vector<8x256xf32> to vector<8x256xbf16>
    %cst_70 = arith.constant dense<0.000000e+00> : vector<8x256xf32>
    %106 = tpu.matmul %105, %103, %cst_70 {dimension_numbers = #tpu.dot_dimension_numbers<[1], [0], [0], [1], [0, 0, 1, 1], [], []>} : vector<8x256xbf16>, vector<256x256xbf16>, vector<8x256xf32> -> vector<8x256xf32>
    %107 = vector.broadcast %104 : vector<1x256xf32> to vector<8x256xf32>
    %108 = arith.addf %106, %107 : vector<8x256xf32>
    %cst_71 = arith.constant 0.00999999977 : f32
    %109 = vector.broadcast %cst_71 : f32 to vector<8x256xf32>
    %110 = arith.mulf %109, %108 : vector<8x256xf32>
    %111 = arith.maximumf %108, %110 : vector<8x256xf32>
    %c0_72 = arith.constant 0 : index
    %c0_73 = arith.constant 0 : index
    %112 = vector.load %arg25[%c0_72, %c0_73] : memref<256x8xbf16, #tpu.memory_space<vmem>>, vector<256x8xbf16>
    %c0_74 = arith.constant 0 : index
    %c0_75 = arith.constant 0 : index
    %113 = vector.load %arg26[%c0_74, %c0_75] : memref<1x8xf32, #tpu.memory_space<vmem>>, vector<1x8xf32>
    %114 = arith.truncf %111 : vector<8x256xf32> to vector<8x256xbf16>
    %cst_76 = arith.constant dense<0.000000e+00> : vector<8x8xf32>
    %115 = tpu.matmul %114, %112, %cst_76 {dimension_numbers = #tpu.dot_dimension_numbers<[1], [0], [0], [1], [0, 0, 1, 1], [], []>} : vector<8x256xbf16>, vector<256x8xbf16>, vector<8x8xf32> -> vector<8x8xf32>
    %116 = vector.broadcast %113 : vector<1x8xf32> to vector<8x8xf32>
    %117 = arith.addf %115, %116 : vector<8x8xf32>
    %cst_77 = arith.constant dense<0xFF800000> : vector<8xf32>
    %118 = vector.multi_reduction <maximumf>, %84, %cst_77 [1] : vector<8x8xf32> to vector<8xf32>
    %119 = vector.shape_cast %118 : vector<8xf32> to vector<8x1xf32>
    %120 = vector.broadcast %119 : vector<8x1xf32> to vector<8x8xf32>
    %121 = arith.subf %84, %120 : vector<8x8xf32>
    %122 = math.exp %121 : vector<8x8xf32>
    %cst_78 = arith.constant dense<0.000000e+00> : vector<8xf32>
    %123 = vector.multi_reduction <add>, %122, %cst_78 [1] : vector<8x8xf32> to vector<8xf32>
    %124 = vector.shape_cast %123 : vector<8xf32> to vector<8x1xf32>
    %125 = vector.broadcast %124 : vector<8x1xf32> to vector<8x8xf32>
    %126 = arith.divf %122, %125 : vector<8x8xf32>
    %cst_79 = arith.constant 0.999998986 : f32
    %127 = vector.broadcast %cst_79 : f32 to vector<8x8xf32>
    %128 = arith.mulf %127, %126 : vector<8x8xf32>
    %cst_80 = arith.constant 1.250000e-07 : f32
    %129 = vector.broadcast %cst_80 : f32 to vector<8x8xf32>
    %130 = arith.addf %129, %128 : vector<8x8xf32>
    %c0_81 = arith.constant 0 : index
    %c0_82 = arith.constant 0 : index
    %131 = vector.load %arg27[%c0_81, %c0_82] : memref<32x256xbf16, #tpu.memory_space<vmem>>, vector<32x256xbf16>
    %c0_83 = arith.constant 0 : index
    %c0_84 = arith.constant 0 : index
    %132 = vector.load %arg28[%c0_83, %c0_84] : memref<1x256xf32, #tpu.memory_space<vmem>>, vector<1x256xf32>
    %133 = arith.truncf %50 : vector<8x32xf32> to vector<8x32xbf16>
    %cst_85 = arith.constant dense<0.000000e+00> : vector<8x256xf32>
    %134 = tpu.matmul %133, %131, %cst_85 {dimension_numbers = #tpu.dot_dimension_numbers<[1], [0], [0], [1], [0, 0, 1, 1], [], []>} : vector<8x32xbf16>, vector<32x256xbf16>, vector<8x256xf32> -> vector<8x256xf32>
    %135 = vector.broadcast %132 : vector<1x256xf32> to vector<8x256xf32>
    %136 = arith.addf %134, %135 : vector<8x256xf32>
    %cst_86 = arith.constant 0.00999999977 : f32
    %137 = vector.broadcast %cst_86 : f32 to vector<8x256xf32>
    %138 = arith.mulf %137, %136 : vector<8x256xf32>
    %139 = arith.maximumf %136, %138 : vector<8x256xf32>
    %c0_87 = arith.constant 0 : index
    %c0_88 = arith.constant 0 : index
    %140 = vector.load %arg29[%c0_87, %c0_88] : memref<256x256xbf16, #tpu.memory_space<vmem>>, vector<256x256xbf16>
    %c0_89 = arith.constant 0 : index
    %c0_90 = arith.constant 0 : index
    %141 = vector.load %arg30[%c0_89, %c0_90] : memref<1x256xf32, #tpu.memory_space<vmem>>, vector<1x256xf32>
    %142 = arith.truncf %139 : vector<8x256xf32> to vector<8x256xbf16>
    %cst_91 = arith.constant dense<0.000000e+00> : vector<8x256xf32>
    %143 = tpu.matmul %142, %140, %cst_91 {dimension_numbers = #tpu.dot_dimension_numbers<[1], [0], [0], [1], [0, 0, 1, 1], [], []>} : vector<8x256xbf16>, vector<256x256xbf16>, vector<8x256xf32> -> vector<8x256xf32>
    %144 = vector.broadcast %141 : vector<1x256xf32> to vector<8x256xf32>
    %145 = arith.addf %143, %144 : vector<8x256xf32>
    %cst_92 = arith.constant 0.00999999977 : f32
    %146 = vector.broadcast %cst_92 : f32 to vector<8x256xf32>
    %147 = arith.mulf %146, %145 : vector<8x256xf32>
    %148 = arith.maximumf %145, %147 : vector<8x256xf32>
    %c0_93 = arith.constant 0 : index
    %c0_94 = arith.constant 0 : index
    %149 = vector.load %arg31[%c0_93, %c0_94] : memref<256x256xbf16, #tpu.memory_space<vmem>>, vector<256x256xbf16>
    %c0_95 = arith.constant 0 : index
    %c0_96 = arith.constant 0 : index
    %150 = vector.load %arg32[%c0_95, %c0_96] : memref<1x256xf32, #tpu.memory_space<vmem>>, vector<1x256xf32>
    %151 = arith.truncf %148 : vector<8x256xf32> to vector<8x256xbf16>
    %cst_97 = arith.constant dense<0.000000e+00> : vector<8x256xf32>
    %152 = tpu.matmul %151, %149, %cst_97 {dimension_numbers = #tpu.dot_dimension_numbers<[1], [0], [0], [1], [0, 0, 1, 1], [], []>} : vector<8x256xbf16>, vector<256x256xbf16>, vector<8x256xf32> -> vector<8x256xf32>
    %153 = vector.broadcast %150 : vector<1x256xf32> to vector<8x256xf32>
    %154 = arith.addf %152, %153 : vector<8x256xf32>
    %cst_98 = arith.constant 0.00999999977 : f32
    %155 = vector.broadcast %cst_98 : f32 to vector<8x256xf32>
    %156 = arith.mulf %155, %154 : vector<8x256xf32>
    %157 = arith.maximumf %154, %156 : vector<8x256xf32>
    %c0_99 = arith.constant 0 : index
    %c0_100 = arith.constant 0 : index
    %158 = vector.load %arg33[%c0_99, %c0_100] : memref<256x256xbf16, #tpu.memory_space<vmem>>, vector<256x256xbf16>
    %c0_101 = arith.constant 0 : index
    %c0_102 = arith.constant 0 : index
    %159 = vector.load %arg34[%c0_101, %c0_102] : memref<1x256xf32, #tpu.memory_space<vmem>>, vector<1x256xf32>
    %160 = arith.truncf %157 : vector<8x256xf32> to vector<8x256xbf16>
    %cst_103 = arith.constant dense<0.000000e+00> : vector<8x256xf32>
    %161 = tpu.matmul %160, %158, %cst_103 {dimension_numbers = #tpu.dot_dimension_numbers<[1], [0], [0], [1], [0, 0, 1, 1], [], []>} : vector<8x256xbf16>, vector<256x256xbf16>, vector<8x256xf32> -> vector<8x256xf32>
    %162 = vector.broadcast %159 : vector<1x256xf32> to vector<8x256xf32>
    %163 = arith.addf %161, %162 : vector<8x256xf32>
    %c0_104 = arith.constant 0 : index
    %c0_105 = arith.constant 0 : index
    %164 = vector.load %arg35[%c0_104, %c0_105] : memref<32x256xbf16, #tpu.memory_space<vmem>>, vector<32x256xbf16>
    %c0_106 = arith.constant 0 : index
    %c0_107 = arith.constant 0 : index
    %165 = vector.load %arg36[%c0_106, %c0_107] : memref<1x256xf32, #tpu.memory_space<vmem>>, vector<1x256xf32>
    %166 = arith.truncf %44 : vector<8x32xf32> to vector<8x32xbf16>
    %cst_108 = arith.constant dense<0.000000e+00> : vector<8x256xf32>
    %167 = tpu.matmul %166, %164, %cst_108 {dimension_numbers = #tpu.dot_dimension_numbers<[1], [0], [0], [1], [0, 0, 1, 1], [], []>} : vector<8x32xbf16>, vector<32x256xbf16>, vector<8x256xf32> -> vector<8x256xf32>
    %168 = vector.broadcast %165 : vector<1x256xf32> to vector<8x256xf32>
    %169 = arith.addf %167, %168 : vector<8x256xf32>
    %cst_109 = arith.constant 0.00999999977 : f32
    %170 = vector.broadcast %cst_109 : f32 to vector<8x256xf32>
    %171 = arith.mulf %170, %169 : vector<8x256xf32>
    %172 = arith.maximumf %169, %171 : vector<8x256xf32>
    %c0_110 = arith.constant 0 : index
    %c0_111 = arith.constant 0 : index
    %173 = vector.load %arg37[%c0_110, %c0_111] : memref<256x256xbf16, #tpu.memory_space<vmem>>, vector<256x256xbf16>
    %c0_112 = arith.constant 0 : index
    %c0_113 = arith.constant 0 : index
    %174 = vector.load %arg38[%c0_112, %c0_113] : memref<1x256xf32, #tpu.memory_space<vmem>>, vector<1x256xf32>
    %175 = arith.truncf %172 : vector<8x256xf32> to vector<8x256xbf16>
    %cst_114 = arith.constant dense<0.000000e+00> : vector<8x256xf32>
    %176 = tpu.matmul %175, %173, %cst_114 {dimension_numbers = #tpu.dot_dimension_numbers<[1], [0], [0], [1], [0, 0, 1, 1], [], []>} : vector<8x256xbf16>, vector<256x256xbf16>, vector<8x256xf32> -> vector<8x256xf32>
    %177 = vector.broadcast %174 : vector<1x256xf32> to vector<8x256xf32>
    %178 = arith.addf %176, %177 : vector<8x256xf32>
    %cst_115 = arith.constant 0.00999999977 : f32
    %179 = vector.broadcast %cst_115 : f32 to vector<8x256xf32>
    %180 = arith.mulf %179, %178 : vector<8x256xf32>
    %181 = arith.maximumf %178, %180 : vector<8x256xf32>
    %c0_116 = arith.constant 0 : index
    %c0_117 = arith.constant 0 : index
    %182 = vector.load %arg39[%c0_116, %c0_117] : memref<256x256xbf16, #tpu.memory_space<vmem>>, vector<256x256xbf16>
    %c0_118 = arith.constant 0 : index
    %c0_119 = arith.constant 0 : index
    %183 = vector.load %arg40[%c0_118, %c0_119] : memref<1x256xf32, #tpu.memory_space<vmem>>, vector<1x256xf32>
    %184 = arith.truncf %181 : vector<8x256xf32> to vector<8x256xbf16>
    %cst_120 = arith.constant dense<0.000000e+00> : vector<8x256xf32>
    %185 = tpu.matmul %184, %182, %cst_120 {dimension_numbers = #tpu.dot_dimension_numbers<[1], [0], [0], [1], [0, 0, 1, 1], [], []>} : vector<8x256xbf16>, vector<256x256xbf16>, vector<8x256xf32> -> vector<8x256xf32>
    %186 = vector.broadcast %183 : vector<1x256xf32> to vector<8x256xf32>
    %187 = arith.addf %185, %186 : vector<8x256xf32>
    %cst_121 = arith.constant 0.00999999977 : f32
    %188 = vector.broadcast %cst_121 : f32 to vector<8x256xf32>
    %189 = arith.mulf %188, %187 : vector<8x256xf32>
    %190 = arith.maximumf %187, %189 : vector<8x256xf32>
    %c0_122 = arith.constant 0 : index
    %c0_123 = arith.constant 0 : index
    %191 = vector.load %arg41[%c0_122, %c0_123] : memref<256x512xbf16, #tpu.memory_space<vmem>>, vector<256x512xbf16>
    %c0_124 = arith.constant 0 : index
    %c0_125 = arith.constant 0 : index
    %192 = vector.load %arg42[%c0_124, %c0_125] : memref<1x512xf32, #tpu.memory_space<vmem>>, vector<1x512xf32>
    %193 = arith.truncf %190 : vector<8x256xf32> to vector<8x256xbf16>
    %cst_126 = arith.constant dense<0.000000e+00> : vector<8x512xf32>
    %194 = tpu.matmul %193, %191, %cst_126 {dimension_numbers = #tpu.dot_dimension_numbers<[1], [0], [0], [1], [0, 0, 1, 1], [], []>} : vector<8x256xbf16>, vector<256x512xbf16>, vector<8x512xf32> -> vector<8x512xf32>
    %195 = vector.broadcast %192 : vector<1x512xf32> to vector<8x512xf32>
    %196 = arith.addf %194, %195 : vector<8x512xf32>
    %c0_127 = arith.constant 0 : index
    %c0_128 = arith.constant 0 : index
    %197 = vector.load %arg45[%c0_127, %c0_128] : memref<8x256xf32, #tpu.memory_space<vmem>>, vector<8x256xf32>
    tpu.vector_store %arg45[%c0_127, %c0_128], %163 {strides = array<i32>} : memref<8x256xf32, #tpu.memory_space<vmem>>, vector<8x256xf32>,
    %c0_129 = arith.constant 0 : index
    %c0_130 = arith.constant 0 : index
    %198 = vector.load %arg46[%c0_129, %c0_130] : memref<8x512xf32, #tpu.memory_space<vmem>>, vector<8x512xf32>
    tpu.vector_store %arg46[%c0_129, %c0_130], %196 {strides = array<i32>} : memref<8x512xf32, #tpu.memory_space<vmem>>, vector<8x512xf32>,
    %cst_131 = arith.constant 0.000000e+00 : f32
    %199 = vector.broadcast %cst_131 : f32 to vector<8x40xf32>
    %200 = tpu.concatenate %44, %50, %84, %117, %130, %199 in 1 : vector<8x32xf32>, vector<8x32xf32>, vector<8x8xf32>, vector<8x8xf32>, vector<8x8xf32>, vector<8x40xf32> -> vector<8x128xf32>
    %c0_132 = arith.constant 0 : index
    %c0_133 = arith.constant 0 : index
    %201 = vector.load %arg44[%c0_132, %c0_133] : memref<8x128xf32, #tpu.memory_space<vmem>>, vector<8x128xf32>
    tpu.vector_store %arg44[%c0_132, %c0_133], %200 {strides = array<i32>} : memref<8x128xf32, #tpu.memory_space<vmem>>, vector<8x128xf32>,
    return
  }
}

</mosaic_0001>

<llo_original>
// kernel: forward_impl.5
$region0: #{forward_impl.5}
  #allocation0 [shape = 'u32[]', space=smem, size = 0x4, offset = 0x4, fixed_abs, tag = 'smem constant byte address 0x4 - core index']
  #allocation1 [shape = 'u32[72,128]{1,0:T(1,128)}', space=vmem, size = 0x9000, scoped, tag = 'internal scratch']
  %s0 = inlined_call_operand.smem [shape: u32[47], index: -1, kind: input, shape index: {}]
  %s1 = sld [smem:[%s0]]
  %s2 = scalar_lea.smem %s0, 1
  %s3 = sld [smem:[%s2]]
  %s4 = scalar_lea.smem %s0, 2
  %s5 = sld [smem:[%s4]]
  %s6 = scalar_lea.smem %s0, 3
  %s7 = sld [smem:[%s6]]
  %s8 = scalar_lea.smem %s0, 4
  %s9 = sld [smem:[%s8]]
  %s10 = scalar_lea.smem %s0, 5
  %s11 = sld [smem:[%s10]]
  %s12 = scalar_lea.smem %s0, 6
  %s13 = sld [smem:[%s12]]
  %s14 = scalar_lea.smem %s0, 7
  %s15 = sld [smem:[%s14]]
  %s16 = scalar_lea.smem %s0, 8
  %s17 = sld [smem:[%s16]]
  %s18 = scalar_lea.smem %s0, 9
  %s19 = sld [smem:[%s18]]
  %s20 = scalar_lea.smem %s0, 10
  %s21 = sld [smem:[%s20]]
  %s22 = scalar_lea.smem %s0, 11
  %s23 = sld [smem:[%s22]]
  %s24 = scalar_lea.smem %s0, 12
  %s25 = sld [smem:[%s24]]
  %s26 = scalar_lea.smem %s0, 13
  %s27 = sld [smem:[%s26]]
  %s28 = scalar_lea.smem %s0, 14
  %s29 = sld [smem:[%s28]]
  %s30 = scalar_lea.smem %s0, 15
  %s31 = sld [smem:[%s30]]
  %s32 = scalar_lea.smem %s0, 16
  %s33 = sld [smem:[%s32]]
  %s34 = scalar_lea.smem %s0, 17
  %s35 = sld [smem:[%s34]]
  %s36 = scalar_lea.smem %s0, 18
  %s37 = sld [smem:[%s36]]
  %s38 = scalar_lea.smem %s0, 19
  %s39 = sld [smem:[%s38]]
  %s40 = scalar_lea.smem %s0, 20
  %s41 = sld [smem:[%s40]]
  %s42 = scalar_lea.smem %s0, 21
  %s43 = sld [smem:[%s42]]
  %s44 = scalar_lea.smem %s0, 22
  %s45 = sld [smem:[%s44]]
  %s46 = scalar_lea.smem %s0, 23
  %s47 = sld [smem:[%s46]]
  %s48 = scalar_lea.smem %s0, 24
  %s49 = sld [smem:[%s48]]
  %s50 = scalar_lea.smem %s0, 25
  %s51 = sld [smem:[%s50]]
  %s52 = scalar_lea.smem %s0, 26
  %s53 = sld [smem:[%s52]]
  %s54 = scalar_lea.smem %s0, 27
  %s55 = sld [smem:[%s54]]
  %s56 = scalar_lea.smem %s0, 28
  %s57 = sld [smem:[%s56]]
  %s58 = scalar_lea.smem %s0, 29
  %s59 = sld [smem:[%s58]]
  %s60 = scalar_lea.smem %s0, 30
  %s61 = sld [smem:[%s60]]
  %s62 = scalar_lea.smem %s0, 31
  %s63 = sld [smem:[%s62]]
  %s64 = scalar_lea.smem %s0, 32
  %s65 = sld [smem:[%s64]]
  %s66 = scalar_lea.smem %s0, 33
  %s67 = sld [smem:[%s66]]
  %s68 = scalar_lea.smem %s0, 34
  %s69 = sld [smem:[%s68]]
  %s70 = scalar_lea.smem %s0, 35
  %s71 = sld [smem:[%s70]]
  %s72 = scalar_lea.smem %s0, 36
  %s73 = sld [smem:[%s72]]
  %s74 = scalar_lea.smem %s0, 37
  %s75 = sld [smem:[%s74]]
  %s76 = scalar_lea.smem %s0, 38
  %s77 = sld [smem:[%s76]]
  %s78 = scalar_lea.smem %s0, 39
  %s79 = sld [smem:[%s78]]
  %s80 = scalar_lea.smem %s0, 40
  %s81 = sld [smem:[%s80]]
  %s82 = scalar_lea.smem %s0, 41
  %s83 = sld [smem:[%s82]]
  %s84 = scalar_lea.smem %s0, 42
  %s85 = sld [smem:[%s84]]
  %s86 = scalar_lea.smem %s0, 43
  %s87 = sld [smem:[%s86]]
  %s88 = scalar_lea.smem %s0, 44
  %s89 = sld [smem:[%s88]]
  %s90 = scalar_lea.smem %s0, 45
  %s91 = sld [smem:[%s90]]
  %s92 = scalar_lea.smem %s0, 46
  %s93 = sld [smem:[%s92]]
  %94 = xla_tuple %s87, %s89, %s91, %s93
  %s95 = sld [smem:[#allocation0]]
  $region314: #{forward_impl.5} parent=0
    _
  %s97 = ssub.s32 1, %s95
  %s98 = scalar_select 0, %s97, %s95
  $region1: #{forward_impl.5} parent=0
    #allocation2 [shape = 'u8[131072]{0}', space=vmem, size = 0x20000, scoped, tag = 'input window, operand 5, single buffered']
    #allocation3 [shape = 's32[1]{0}', space=sflag, size = 0x4, scoped, tag = 'scoped memory for forward_impl.5']
    #allocation4 [shape = 'u8[131072]{0}', space=vmem, size = 0x20000, scoped, tag = 'input window, operand 7, single buffered']
    #allocation5 [shape = 's32[1]{0}', space=sflag, size = 0x4, scoped, tag = 'scoped memory for forward_impl.5']
    #allocation6 [shape = 'u8[512]{0}', space=vmem, size = 0x400, scoped, tag = 'input window, operand 10, single buffered']
    #allocation7 [shape = 'u8[131072]{0}', space=vmem, size = 0x20000, scoped, tag = 'input window, operand 13, single buffered']
    #allocation8 [shape = 's32[1]{0}', space=sflag, size = 0x4, scoped, tag = 'scoped memory for forward_impl.5']
    #allocation9 [shape = 'u8[131072]{0}', space=vmem, size = 0x20000, scoped, tag = 'input window, operand 15, single buffered']
    #allocation10 [shape = 'u8[512]{0}', space=vmem, size = 0x400, scoped, tag = 'input window, operand 18, single buffered']
    #allocation11 [shape = 's32[1]{0}', space=sflag, size = 0x4, scoped, tag = 'scoped memory for forward_impl.5']
    #allocation12 [shape = 'u8[32768]{0}', space=vmem, size = 0x8000, scoped, tag = 'input window, operand 19, single buffered']
    #allocation13 [shape = 'u8[131072]{0}', space=vmem, size = 0x20000, scoped, tag = 'input window, operand 21, single buffered']
    #allocation14 [shape = 's32[1]{0}', space=sflag, size = 0x4, scoped, tag = 'scoped memory for forward_impl.5']
    #allocation15 [shape = 'u8[1024]{0}', space=vmem, size = 0x400, scoped, tag = 'input window, operand 22, single buffered']
    #allocation16 [shape = 'u8[131072]{0}', space=vmem, size = 0x20000, scoped, tag = 'input window, operand 23, single buffered']
    #allocation17 [shape = 's32[1]{0}', space=sflag, size = 0x4, scoped, tag = 'scoped memory for forward_impl.5']
    #allocation18 [shape = 'u8[1024]{0}', space=vmem, size = 0x400, scoped, tag = 'input window, operand 24, single buffered']
    #allocation19 [shape = 'u8[512]{0}', space=vmem, size = 0x400, scoped, tag = 'input window, operand 26, single buffered']
    #allocation20 [shape = 's32[1]{0}', space=sflag, size = 0x4, scoped, tag = 'scoped memory for forward_impl.5']
    #allocation21 [shape = 'u8[16384]{0}', space=vmem, size = 0x4000, scoped, tag = 'input window, operand 27, single buffered']
    #allocation22 [shape = 'u8[1024]{0}', space=vmem, size = 0x400, scoped, tag = 'input window, operand 28, single buffered']
    #allocation23 [shape = 's32[1]{0}', space=sflag, size = 0x4, scoped, tag = 'scoped memory for forward_impl.5']
    #allocation24 [shape = 'u8[131072]{0}', space=vmem, size = 0x20000, scoped, tag = 'input window, operand 29, single buffered']
    #allocation25 [shape = 'u8[1024]{0}', space=vmem, size = 0x400, scoped, tag = 'input window, operand 30, single buffered']
    #allocation26 [shape = 's32[1]{0}', space=sflag, size = 0x4, scoped, tag = 'scoped memory for forward_impl.5']
    #allocation27 [shape = 'u8[131072]{0}', space=vmem, size = 0x20000, scoped, tag = 'input window, operand 31, single buffered']
    #allocation28 [shape = 'u8[1024]{0}', space=vmem, size = 0x400, scoped, tag = 'input window, operand 32, single buffered']
    #allocation29 [shape = 's32[1]{0}', space=sflag, size = 0x4, scoped, tag = 'scoped memory for forward_impl.5']
    #allocation30 [shape = 'u8[131072]{0}', space=vmem, size = 0x20000, scoped, tag = 'input window, operand 33, single buffered']
    #allocation31 [shape = 'u8[1024]{0}', space=vmem, size = 0x400, scoped, tag = 'input window, operand 34, single buffered']
    #allocation32 [shape = 's32[1]{0}', space=sflag, size = 0x4, scoped, tag = 'scoped memory for forward_impl.5']
    #allocation33 [shape = 'u8[16384]{0}', space=vmem, size = 0x4000, scoped, tag = 'input window, operand 35, single buffered']
    #allocation34 [shape = 'u8[1024]{0}', space=vmem, size = 0x400, scoped, tag = 'input window, operand 36, single buffered']
    #allocation35 [shape = 's32[1]{0}', space=sflag, size = 0x4, scoped, tag = 'scoped memory for forward_impl.5']
    #allocation36 [shape = 'u8[131072]{0}', space=vmem, size = 0x20000, scoped, tag = 'input window, operand 37, single buffered']
    #allocation37 [shape = 'u8[1024]{0}', space=vmem, size = 0x400, scoped, tag = 'input window, operand 38, single buffered']
    #allocation38 [shape = 's32[1]{0}', space=sflag, size = 0x4, scoped, tag = 'scoped memory for forward_impl.5']
    #allocation39 [shape = 'u8[131072]{0}', space=vmem, size = 0x20000, scoped, tag = 'input window, operand 39, single buffered']
    #allocation40 [shape = 'u8[1024]{0}', space=vmem, size = 0x400, scoped, tag = 'input window, operand 40, single buffered']
    #allocation41 [shape = 's32[1]{0}', space=sflag, size = 0x4, scoped, tag = 'scoped memory for forward_impl.5']
    #allocation42 [shape = 'u8[262144]{0}', space=vmem, size = 0x40000, scoped, tag = 'input window, operand 41, single buffered']
    %99 = vsyncpa [#allocation3], 0
    %100 = vsyncpa [#allocation5], 0
    %101 = vsyncpa [#allocation8], 0
    %102 = vsyncpa [#allocation11], 0
    %103 = vsyncpa [#allocation14], 0
    %104 = vsyncpa [#allocation17], 0
    %105 = vsyncpa [#allocation20], 0
    %106 = vsyncpa [#allocation23], 0
    %107 = vsyncpa [#allocation26], 0
    %108 = vsyncpa [#allocation29], 0
    %109 = vsyncpa [#allocation32], 0
    %110 = vsyncpa [#allocation35], 0
    %111 = vsyncpa [#allocation38], 0
    %112 = vsyncpa [#allocation41], 0
    // Predicated region
    $region2: #{forward_impl.5} parent=1 // pred_check
      _
    $region3: #{forward_impl.5} parent=1 // pred_check_branch
      %114 = sbr.rel (0) target = $region5
    $region4: #{forward_impl.5} parent=1 // pred_region
      _
    $region5: #{forward_impl.5} parent=1 // pred_fallthru
      _
    // Predicated region
    $region6: #{forward_impl.5} parent=1 // pred_check
      _
    $region7: #{forward_impl.5} parent=1 // pred_check_branch
      %116 = sbr.rel (0) target = $region9
    $region8: #{forward_impl.5} parent=1 // pred_region
      _
    $region9: #{forward_impl.5} parent=1 // pred_fallthru
      _
    // Predicated region
    $region10: #{forward_impl.5} parent=1 // pred_check
      _
    $region11: #{forward_impl.5} parent=1 // pred_check_branch
      %118 = sbr.rel (0) target = $region13
    $region12: #{forward_impl.5} parent=1 // pred_region
      _
    $region13: #{forward_impl.5} parent=1 // pred_fallthru
      _
    // Predicated region
    $region14: #{forward_impl.5} parent=1 // pred_check
      _
    $region15: #{forward_impl.5} parent=1 // pred_check_branch
      %120 = sbr.rel (0) target = $region17
    $region16: #{forward_impl.5} parent=1 // pred_region
      _
    $region17: #{forward_impl.5} parent=1 // pred_fallthru
      _
    // Predicated region
    $region18: #{forward_impl.5} parent=1 // pred_check
      _
    $region19: #{forward_impl.5} parent=1 // pred_check_branch
      %122 = sbr.rel (0) target = $region21
    $region20: #{forward_impl.5} parent=1 // pred_region
      _
    $region21: #{forward_impl.5} parent=1 // pred_fallthru
      _
    // Predicated region
    $region22: #{forward_impl.5} parent=1 // pred_check
      _
    $region23: #{forward_impl.5} parent=1 // pred_check_branch
      %124 = sbr.rel (0) target = $region25
    $region24: #{forward_impl.5} parent=1 // pred_region
      %126 = vsyncadd [#allocation3], 0
      %s127 = sshll.u32 %s11, 4
      %s128 = int_to_ptr.hbm [resolvable:$true] %s127
      %s129 = sshll.u32 [#allocation2], 4
      %s130 = int_to_ptr.vmem [resolvable:$true] %s129
      %135 = dma.hbm_to_vmem [thread:$0]  %s128, 4096, %s130, [#allocation3], 128, 128, 8
    $region25: #{forward_impl.5} parent=1 // pred_fallthru
      _
    // Predicated region
    $region26: #{forward_impl.5} parent=1 // pred_check
      _
    $region27: #{forward_impl.5} parent=1 // pred_check_branch
      %137 = sbr.rel (0) target = $region29
    $region28: #{forward_impl.5} parent=1 // pred_region
      _
    $region29: #{forward_impl.5} parent=1 // pred_fallthru
      _
    // Predicated region
    $region30: #{forward_impl.5} parent=1 // pred_check
      _
    $region31: #{forward_impl.5} parent=1 // pred_check_branch
      %139 = sbr.rel (0) target = $region33
    $region32: #{forward_impl.5} parent=1 // pred_region
      %141 = vsyncadd [#allocation5], 0
      %s142 = sshll.u32 %s15, 4
      %s143 = int_to_ptr.hbm [resolvable:$true] %s142
      %s144 = sshll.u32 [#allocation4], 4
      %s145 = int_to_ptr.vmem [resolvable:$true] %s144
      %150 = dma.hbm_to_vmem [thread:$0]  %s143, 4096, %s145, [#allocation5], 128, 128, 8
    $region33: #{forward_impl.5} parent=1 // pred_fallthru
      _
    // Predicated region
    $region34: #{forward_impl.5} parent=1 // pred_check
      _
    $region35: #{forward_impl.5} parent=1 // pred_check_branch
      %152 = sbr.rel (0) target = $region37
    $region36: #{forward_impl.5} parent=1 // pred_region
      _
    $region37: #{forward_impl.5} parent=1 // pred_fallthru
      _
    // Predicated region
    $region38: #{forward_impl.5} parent=1 // pred_check
      _
    $region39: #{forward_impl.5} parent=1 // pred_check_branch
      %154 = sbr.rel (0) target = $region41
    $region40: #{forward_impl.5} parent=1 // pred_region
      _
    $region41: #{forward_impl.5} parent=1 // pred_fallthru
      _
    // Predicated region
    $region42: #{forward_impl.5} parent=1 // pred_check
      _
    $region43: #{forward_impl.5} parent=1 // pred_check_branch
      %156 = sbr.rel (0) target = $region45
    $region44: #{forward_impl.5} parent=1 // pred_region
      %158 = vsyncadd [#allocation5], 0
      %s160 = sshll.u32 %s21, 4
      %s161 = int_to_ptr.hbm [resolvable:$true] %s160
      %s162 = sshll.u32 [#allocation6], 4
      %s163 = int_to_ptr.vmem [resolvable:$true] %s162
      %165 = dma.hbm_to_vmem [thread:$0]  %s161, 16, %s163, [#allocation5]
    $region45: #{forward_impl.5} parent=1 // pred_fallthru
      _
    // Predicated region
    $region46: #{forward_impl.5} parent=1 // pred_check
      _
    $region47: #{forward_impl.5} parent=1 // pred_check_branch
      %167 = sbr.rel (0) target = $region49
    $region48: #{forward_impl.5} parent=1 // pred_region
      _
    $region49: #{forward_impl.5} parent=1 // pred_fallthru
      _
    // Predicated region
    $region50: #{forward_impl.5} parent=1 // pred_check
      _
    $region51: #{forward_impl.5} parent=1 // pred_check_branch
      %169 = sbr.rel (0) target = $region53
    $region52: #{forward_impl.5} parent=1 // pred_region
      _
    $region53: #{forward_impl.5} parent=1 // pred_fallthru
      _
    // Predicated region
    $region54: #{forward_impl.5} parent=1 // pred_check
      _
    $region55: #{forward_impl.5} parent=1 // pred_check_branch
      %171 = sbr.rel (0) target = $region57
    $region56: #{forward_impl.5} parent=1 // pred_region
      %173 = vsyncadd [#allocation8], 0
      %s174 = sshll.u32 %s27, 4
      %s175 = int_to_ptr.hbm [resolvable:$true] %s174
      %s176 = sshll.u32 [#allocation7], 4
      %s177 = int_to_ptr.vmem [resolvable:$true] %s176
      %182 = dma.hbm_to_vmem [thread:$0]  %s175, 4096, %s177, [#allocation8], 128, 128, 8
    $region57: #{forward_impl.5} parent=1 // pred_fallthru
      _
    // Predicated region
    $region58: #{forward_impl.5} parent=1 // pred_check
      _
    $region59: #{forward_impl.5} parent=1 // pred_check_branch
      %184 = sbr.rel (0) target = $region61
    $region60: #{forward_impl.5} parent=1 // pred_region
      _
    $region61: #{forward_impl.5} parent=1 // pred_fallthru
      _
    // Predicated region
    $region62: #{forward_impl.5} parent=1 // pred_check
      _
    $region63: #{forward_impl.5} parent=1 // pred_check_branch
      %186 = sbr.rel (0) target = $region65
    $region64: #{forward_impl.5} parent=1 // pred_region
      %188 = vsyncadd [#allocation8], 0
      %s189 = sshll.u32 %s31, 4
      %s190 = int_to_ptr.hbm [resolvable:$true] %s189
      %s191 = sshll.u32 [#allocation9], 4
      %s192 = int_to_ptr.vmem [resolvable:$true] %s191
      %197 = dma.hbm_to_vmem [thread:$0]  %s190, 4096, %s192, [#allocation8], 128, 128, 8
    $region65: #{forward_impl.5} parent=1 // pred_fallthru
      _
    // Predicated region
    $region66: #{forward_impl.5} parent=1 // pred_check
      _
    $region67: #{forward_impl.5} parent=1 // pred_check_branch
      %199 = sbr.rel (0) target = $region69
    $region68: #{forward_impl.5} parent=1 // pred_region
      _
    $region69: #{forward_impl.5} parent=1 // pred_fallthru
      _
    // Predicated region
    $region70: #{forward_impl.5} parent=1 // pred_check
      _
    $region71: #{forward_impl.5} parent=1 // pred_check_branch
      %201 = sbr.rel (0) target = $region73
    $region72: #{forward_impl.5} parent=1 // pred_region
      _
    $region73: #{forward_impl.5} parent=1 // pred_fallthru
      _
    // Predicated region
    $region74: #{forward_impl.5} parent=1 // pred_check
      _
    $region75: #{forward_impl.5} parent=1 // pred_check_branch
      %203 = sbr.rel (0) target = $region77
    $region76: #{forward_impl.5} parent=1 // pred_region
      %205 = vsyncadd [#allocation11], 0
      %s207 = sshll.u32 %s37, 4
      %s208 = int_to_ptr.hbm [resolvable:$true] %s207
      %s209 = sshll.u32 [#allocation10], 4
      %s210 = int_to_ptr.vmem [resolvable:$true] %s209
      %212 = dma.hbm_to_vmem [thread:$0]  %s208, 16, %s210, [#allocation11]
    $region77: #{forward_impl.5} parent=1 // pred_fallthru
      _
    // Predicated region
    $region78: #{forward_impl.5} parent=1 // pred_check
      _
    $region79: #{forward_impl.5} parent=1 // pred_check_branch
      %214 = sbr.rel (0) target = $region81
    $region80: #{forward_impl.5} parent=1 // pred_region
      %216 = vsyncadd [#allocation11], 0
      %s217 = sshll.u32 %s39, 4
      %s218 = int_to_ptr.hbm [resolvable:$true] %s217
      %s219 = sshll.u32 [#allocation12], 4
      %s220 = int_to_ptr.vmem [resolvable:$true] %s219
      %225 = dma.hbm_to_vmem [thread:$0]  %s218, 1024, %s220, [#allocation11], 128, 128, 8
    $region81: #{forward_impl.5} parent=1 // pred_fallthru
      _
    // Predicated region
    $region82: #{forward_impl.5} parent=1 // pred_check
      _
    $region83: #{forward_impl.5} parent=1 // pred_check_branch
      %227 = sbr.rel (0) target = $region85
    $region84: #{forward_impl.5} parent=1 // pred_region
      _
    $region85: #{forward_impl.5} parent=1 // pred_fallthru
      _
    // Predicated region
    $region86: #{forward_impl.5} parent=1 // pred_check
      _
    $region87: #{forward_impl.5} parent=1 // pred_check_branch
      %229 = sbr.rel (0) target = $region89
    $region88: #{forward_impl.5} parent=1 // pred_region
      %231 = vsyncadd [#allocation14], 0
      %s232 = sshll.u32 %s43, 4
      %s233 = int_to_ptr.hbm [resolvable:$true] %s232
      %s234 = sshll.u32 [#allocation13], 4
      %s235 = int_to_ptr.vmem [resolvable:$true] %s234
      %240 = dma.hbm_to_vmem [thread:$0]  %s233, 4096, %s235, [#allocation14], 128, 128, 8
    $region89: #{forward_impl.5} parent=1 // pred_fallthru
      _
    // Predicated region
    $region90: #{forward_impl.5} parent=1 // pred_check
      _
    $region91: #{forward_impl.5} parent=1 // pred_check_branch
      %242 = sbr.rel (0) target = $region93
    $region92: #{forward_impl.5} parent=1 // pred_region
      %244 = vsyncadd [#allocation14], 0
      %s246 = sshll.u32 %s45, 4
      %s247 = int_to_ptr.hbm [resolvable:$true] %s246
      %s248 = sshll.u32 [#allocation15], 4
      %s249 = int_to_ptr.vmem [resolvable:$true] %s248
      %251 = dma.hbm_to_vmem [thread:$0]  %s247, 32, %s249, [#allocation14]
    $region93: #{forward_impl.5} parent=1 // pred_fallthru
      _
    // Predicated region
    $region94: #{forward_impl.5} parent=1 // pred_check
      _
    $region95: #{forward_impl.5} parent=1 // pred_check_branch
      %253 = sbr.rel (0) target = $region97
    $region96: #{forward_impl.5} parent=1 // pred_region
      %255 = vsyncadd [#allocation17], 0
      %s256 = sshll.u32 %s47, 4
      %s257 = int_to_ptr.hbm [resolvable:$true] %s256
      %s258 = sshll.u32 [#allocation16], 4
      %s259 = int_to_ptr.vmem [resolvable:$true] %s258
      %264 = dma.hbm_to_vmem [thread:$0]  %s257, 4096, %s259, [#allocation17], 128, 128, 8
    $region97: #{forward_impl.5} parent=1 // pred_fallthru
      _
    // Predicated region
    $region98: #{forward_impl.5} parent=1 // pred_check
      _
    $region99: #{forward_impl.5} parent=1 // pred_check_branch
      %266 = sbr.rel (0) target = $region101
    $region100: #{forward_impl.5} parent=1 // pred_region
      %268 = vsyncadd [#allocation17], 0
      %s270 = sshll.u32 %s49, 4
      %s271 = int_to_ptr.hbm [resolvable:$true] %s270
      %s272 = sshll.u32 [#allocation18], 4
      %s273 = int_to_ptr.vmem [resolvable:$true] %s272
      %275 = dma.hbm_to_vmem [thread:$0]  %s271, 32, %s273, [#allocation17]
    $region101: #{forward_impl.5} parent=1 // pred_fallthru
      _
    // Predicated region
    $region102: #{forward_impl.5} parent=1 // pred_check
      _
    $region103: #{forward_impl.5} parent=1 // pred_check_branch
      %277 = sbr.rel (0) target = $region105
    $region104: #{forward_impl.5} parent=1 // pred_region
      _
    $region105: #{forward_impl.5} parent=1 // pred_fallthru
      _
    // Predicated region
    $region106: #{forward_impl.5} parent=1 // pred_check
      _
    $region107: #{forward_impl.5} parent=1 // pred_check_branch
      %279 = sbr.rel (0) target = $region109
    $region108: #{forward_impl.5} parent=1 // pred_region
      %281 = vsyncadd [#allocation20], 0
      %s283 = sshll.u32 %s53, 4
      %s284 = int_to_ptr.hbm [resolvable:$true] %s283
      %s285 = sshll.u32 [#allocation19], 4
      %s286 = int_to_ptr.vmem [resolvable:$true] %s285
      %288 = dma.hbm_to_vmem [thread:$0]  %s284, 16, %s286, [#allocation20]
    $region109: #{forward_impl.5} parent=1 // pred_fallthru
      _
    // Predicated region
    $region110: #{forward_impl.5} parent=1 // pred_check
      _
    $region111: #{forward_impl.5} parent=1 // pred_check_branch
      %290 = sbr.rel (0) target = $region113
    $region112: #{forward_impl.5} parent=1 // pred_region
      %292 = vsyncadd [#allocation20], 0
      %s293 = sshll.u32 %s55, 4
      %s294 = int_to_ptr.hbm [resolvable:$true] %s293
      %s295 = sshll.u32 [#allocation21], 4
      %s296 = int_to_ptr.vmem [resolvable:$true] %s295
      %301 = dma.hbm_to_vmem [thread:$0]  %s294, 512, %s296, [#allocation20], 128, 128, 8
    $region113: #{forward_impl.5} parent=1 // pred_fallthru
      _
    // Predicated region
    $region114: #{forward_impl.5} parent=1 // pred_check
      _
    $region115: #{forward_impl.5} parent=1 // pred_check_branch
      %303 = sbr.rel (0) target = $region117
    $region116: #{forward_impl.5} parent=1 // pred_region
      %305 = vsyncadd [#allocation23], 0
      %s307 = sshll.u32 %s57, 4
      %s308 = int_to_ptr.hbm [resolvable:$true] %s307
      %s309 = sshll.u32 [#allocation22], 4
      %s310 = int_to_ptr.vmem [resolvable:$true] %s309
      %312 = dma.hbm_to_vmem [thread:$0]  %s308, 32, %s310, [#allocation23]
    $region117: #{forward_impl.5} parent=1 // pred_fallthru
      _
    // Predicated region
    $region118: #{forward_impl.5} parent=1 // pred_check
      _
    $region119: #{forward_impl.5} parent=1 // pred_check_branch
      %314 = sbr.rel (0) target = $region121
    $region120: #{forward_impl.5} parent=1 // pred_region
      %316 = vsyncadd [#allocation23], 0
      %s317 = sshll.u32 %s59, 4
      %s318 = int_to_ptr.hbm [resolvable:$true] %s317
      %s319 = sshll.u32 [#allocation24], 4
      %s320 = int_to_ptr.vmem [resolvable:$true] %s319
      %325 = dma.hbm_to_vmem [thread:$0]  %s318, 4096, %s320, [#allocation23], 128, 128, 8
    $region121: #{forward_impl.5} parent=1 // pred_fallthru
      _
    // Predicated region
    $region122: #{forward_impl.5} parent=1 // pred_check
      _
    $region123: #{forward_impl.5} parent=1 // pred_check_branch
      %327 = sbr.rel (0) target = $region125
    $region124: #{forward_impl.5} parent=1 // pred_region
      %329 = vsyncadd [#allocation26], 0
      %s331 = sshll.u32 %s61, 4
      %s332 = int_to_ptr.hbm [resolvable:$true] %s331
      %s333 = sshll.u32 [#allocation25], 4
      %s334 = int_to_ptr.vmem [resolvable:$true] %s333
      %336 = dma.hbm_to_vmem [thread:$0]  %s332, 32, %s334, [#allocation26]
    $region125: #{forward_impl.5} parent=1 // pred_fallthru
      _
    // Predicated region
    $region126: #{forward_impl.5} parent=1 // pred_check
      _
    $region127: #{forward_impl.5} parent=1 // pred_check_branch
      %338 = sbr.rel (0) target = $region129
    $region128: #{forward_impl.5} parent=1 // pred_region
      %340 = vsyncadd [#allocation26], 0
      %s341 = sshll.u32 %s63, 4
      %s342 = int_to_ptr.hbm [resolvable:$true] %s341
      %s343 = sshll.u32 [#allocation27], 4
      %s344 = int_to_ptr.vmem [resolvable:$true] %s343
      %349 = dma.hbm_to_vmem [thread:$0]  %s342, 4096, %s344, [#allocation26], 128, 128, 8
    $region129: #{forward_impl.5} parent=1 // pred_fallthru
      _
    // Predicated region
    $region130: #{forward_impl.5} parent=1 // pred_check
      _
    $region131: #{forward_impl.5} parent=1 // pred_check_branch
      %351 = sbr.rel (0) target = $region133
    $region132: #{forward_impl.5} parent=1 // pred_region
      %353 = vsyncadd [#allocation29], 0
      %s355 = sshll.u32 %s65, 4
      %s356 = int_to_ptr.hbm [resolvable:$true] %s355
      %s357 = sshll.u32 [#allocation28], 4
      %s358 = int_to_ptr.vmem [resolvable:$true] %s357
      %360 = dma.hbm_to_vmem [thread:$0]  %s356, 32, %s358, [#allocation29]
    $region133: #{forward_impl.5} parent=1 // pred_fallthru
      _
    // Predicated region
    $region134: #{forward_impl.5} parent=1 // pred_check
      _
    $region135: #{forward_impl.5} parent=1 // pred_check_branch
      %362 = sbr.rel (0) target = $region137
    $region136: #{forward_impl.5} parent=1 // pred_region
      %364 = vsyncadd [#allocation29], 0
      %s365 = sshll.u32 %s67, 4
      %s366 = int_to_ptr.hbm [resolvable:$true] %s365
      %s367 = sshll.u32 [#allocation30], 4
      %s368 = int_to_ptr.vmem [resolvable:$true] %s367
      %373 = dma.hbm_to_vmem [thread:$0]  %s366, 4096, %s368, [#allocation29], 128, 128, 8
    $region137: #{forward_impl.5} parent=1 // pred_fallthru
      _
    // Predicated region
    $region138: #{forward_impl.5} parent=1 // pred_check
      _
    $region139: #{forward_impl.5} parent=1 // pred_check_branch
      %375 = sbr.rel (0) target = $region141
    $region140: #{forward_impl.5} parent=1 // pred_region
      %377 = vsyncadd [#allocation32], 0
      %s379 = sshll.u32 %s69, 4
      %s380 = int_to_ptr.hbm [resolvable:$true] %s379
      %s381 = sshll.u32 [#allocation31], 4
      %s382 = int_to_ptr.vmem [resolvable:$true] %s381
      %384 = dma.hbm_to_vmem [thread:$0]  %s380, 32, %s382, [#allocation32]
    $region141: #{forward_impl.5} parent=1 // pred_fallthru
      _
    // Predicated region
    $region142: #{forward_impl.5} parent=1 // pred_check
      _
    $region143: #{forward_impl.5} parent=1 // pred_check_branch
      %386 = sbr.rel (0) target = $region145
    $region144: #{forward_impl.5} parent=1 // pred_region
      %388 = vsyncadd [#allocation32], 0
      %s389 = sshll.u32 %s71, 4
      %s390 = int_to_ptr.hbm [resolvable:$true] %s389
      %s391 = sshll.u32 [#allocation33], 4
      %s392 = int_to_ptr.vmem [resolvable:$true] %s391
      %397 = dma.hbm_to_vmem [thread:$0]  %s390, 512, %s392, [#allocation32], 128, 128, 8
    $region145: #{forward_impl.5} parent=1 // pred_fallthru
      _
    // Predicated region
    $region146: #{forward_impl.5} parent=1 // pred_check
      _
    $region147: #{forward_impl.5} parent=1 // pred_check_branch
      %399 = sbr.rel (0) target = $region149
    $region148: #{forward_impl.5} parent=1 // pred_region
      %401 = vsyncadd [#allocation35], 0
      %s403 = sshll.u32 %s73, 4
      %s404 = int_to_ptr.hbm [resolvable:$true] %s403
      %s405 = sshll.u32 [#allocation34], 4
      %s406 = int_to_ptr.vmem [resolvable:$true] %s405
      %408 = dma.hbm_to_vmem [thread:$0]  %s404, 32, %s406, [#allocation35]
    $region149: #{forward_impl.5} parent=1 // pred_fallthru
      _
    // Predicated region
    $region150: #{forward_impl.5} parent=1 // pred_check
      _
    $region151: #{forward_impl.5} parent=1 // pred_check_branch
      %410 = sbr.rel (0) target = $region153
    $region152: #{forward_impl.5} parent=1 // pred_region
      %412 = vsyncadd [#allocation35], 0
      %s413 = sshll.u32 %s75, 4
      %s414 = int_to_ptr.hbm [resolvable:$true] %s413
      %s415 = sshll.u32 [#allocation36], 4
      %s416 = int_to_ptr.vmem [resolvable:$true] %s415
      %421 = dma.hbm_to_vmem [thread:$0]  %s414, 4096, %s416, [#allocation35], 128, 128, 8
    $region153: #{forward_impl.5} parent=1 // pred_fallthru
      _
    // Predicated region
    $region154: #{forward_impl.5} parent=1 // pred_check
      _
    $region155: #{forward_impl.5} parent=1 // pred_check_branch
      %423 = sbr.rel (0) target = $region157
    $region156: #{forward_impl.5} parent=1 // pred_region
      %425 = vsyncadd [#allocation38], 0
      %s427 = sshll.u32 %s77, 4
      %s428 = int_to_ptr.hbm [resolvable:$true] %s427
      %s429 = sshll.u32 [#allocation37], 4
      %s430 = int_to_ptr.vmem [resolvable:$true] %s429
      %432 = dma.hbm_to_vmem [thread:$0]  %s428, 32, %s430, [#allocation38]
    $region157: #{forward_impl.5} parent=1 // pred_fallthru
      _
    // Predicated region
    $region158: #{forward_impl.5} parent=1 // pred_check
      _
    $region159: #{forward_impl.5} parent=1 // pred_check_branch
      %434 = sbr.rel (0) target = $region161
    $region160: #{forward_impl.5} parent=1 // pred_region
      %436 = vsyncadd [#allocation38], 0
      %s437 = sshll.u32 %s79, 4
      %s438 = int_to_ptr.hbm [resolvable:$true] %s437
      %s439 = sshll.u32 [#allocation39], 4
      %s440 = int_to_ptr.vmem [resolvable:$true] %s439
      %445 = dma.hbm_to_vmem [thread:$0]  %s438, 4096, %s440, [#allocation38], 128, 128, 8
    $region161: #{forward_impl.5} parent=1 // pred_fallthru
      _
    // Predicated region
    $region162: #{forward_impl.5} parent=1 // pred_check
      _
    $region163: #{forward_impl.5} parent=1 // pred_check_branch
      %447 = sbr.rel (0) target = $region165
    $region164: #{forward_impl.5} parent=1 // pred_region
      %449 = vsyncadd [#allocation41], 0
      %s451 = sshll.u32 %s81, 4
      %s452 = int_to_ptr.hbm [resolvable:$true] %s451
      %s453 = sshll.u32 [#allocation40], 4
      %s454 = int_to_ptr.vmem [resolvable:$true] %s453
      %456 = dma.hbm_to_vmem [thread:$0]  %s452, 32, %s454, [#allocation41]
    $region165: #{forward_impl.5} parent=1 // pred_fallthru
      _
    // Predicated region
    $region166: #{forward_impl.5} parent=1 // pred_check
      _
    $region167: #{forward_impl.5} parent=1 // pred_check_branch
      %458 = sbr.rel (0) target = $region169
    $region168: #{forward_impl.5} parent=1 // pred_region
      %460 = vsyncadd [#allocation41], 0
      %s461 = sshll.u32 %s83, 4
      %s462 = int_to_ptr.hbm [resolvable:$true] %s461
      %s463 = sshll.u32 [#allocation42], 4
      %s464 = int_to_ptr.vmem [resolvable:$true] %s463
      %469 = dma.hbm_to_vmem [thread:$0]  %s462, 8192, %s464, [#allocation41], 256, 256, 16
    $region169: #{forward_impl.5} parent=1 // pred_fallthru
      _
    // Predicated region
    $region170: #{forward_impl.5} parent=1 // pred_check
      _
    $region171: #{forward_impl.5} parent=1 // pred_check_branch
      %471 = sbr.rel (0) target = $region173
    $region172: #{forward_impl.5} parent=1 // pred_region
      _
    $region173: #{forward_impl.5} parent=1 // pred_fallthru
      _
    // Predicated region
    $region174: #{forward_impl.5} parent=1 // pred_check
      _
    $region175: #{forward_impl.5} parent=1 // pred_check_branch
      %473 = sbr.rel (0) target = $region177
    $region176: #{forward_impl.5} parent=1 // pred_region
      %475 = dma.done [#allocation3], 4096
    $region177: #{forward_impl.5} parent=1 // pred_fallthru
      _
    // Predicated region
    $region178: #{forward_impl.5} parent=1 // pred_check
      _
    $region179: #{forward_impl.5} parent=1 // pred_check_branch
      %477 = sbr.rel (0) target = $region181
    $region180: #{forward_impl.5} parent=1 // pred_region
      %479 = dma.done [#allocation5], 4096
    $region181: #{forward_impl.5} parent=1 // pred_fallthru
      _
    // Predicated region
    $region182: #{forward_impl.5} parent=1 // pred_check
      _
    $region183: #{forward_impl.5} parent=1 // pred_check_branch
      %481 = sbr.rel (0) target = $region185
    $region184: #{forward_impl.5} parent=1 // pred_region
      %483 = dma.done [#allocation5], 16
    $region185: #{forward_impl.5} parent=1 // pred_fallthru
      _
    // Predicated region
    $region186: #{forward_impl.5} parent=1 // pred_check
      _
    $region187: #{forward_impl.5} parent=1 // pred_check_branch
      %485 = sbr.rel (0) target = $region189
    $region188: #{forward_impl.5} parent=1 // pred_region
      %487 = dma.done [#allocation8], 4096
    $region189: #{forward_impl.5} parent=1 // pred_fallthru
      _
    // Predicated region
    $region190: #{forward_impl.5} parent=1 // pred_check
      _
    $region191: #{forward_impl.5} parent=1 // pred_check_branch
      %489 = sbr.rel (0) target = $region193
    $region192: #{forward_impl.5} parent=1 // pred_region
      %491 = dma.done [#allocation8], 4096
    $region193: #{forward_impl.5} parent=1 // pred_fallthru
      _
    // Predicated region
    $region194: #{forward_impl.5} parent=1 // pred_check
      _
    $region195: #{forward_impl.5} parent=1 // pred_check_branch
      %493 = sbr.rel (0) target = $region197
    $region196: #{forward_impl.5} parent=1 // pred_region
      %495 = dma.done [#allocation11], 16
    $region197: #{forward_impl.5} parent=1 // pred_fallthru
      _
    // Predicated region
    $region198: #{forward_impl.5} parent=1 // pred_check
      _
    $region199: #{forward_impl.5} parent=1 // pred_check_branch
      %497 = sbr.rel (0) target = $region201
    $region200: #{forward_impl.5} parent=1 // pred_region
      %499 = dma.done [#allocation11], 1024
    $region201: #{forward_impl.5} parent=1 // pred_fallthru
      _
    // Predicated region
    $region202: #{forward_impl.5} parent=1 // pred_check
      _
    $region203: #{forward_impl.5} parent=1 // pred_check_branch
      %501 = sbr.rel (0) target = $region205
    $region204: #{forward_impl.5} parent=1 // pred_region
      %503 = dma.done [#allocation14], 4096
    $region205: #{forward_impl.5} parent=1 // pred_fallthru
      _
    // Predicated region
    $region206: #{forward_impl.5} parent=1 // pred_check
      _
    $region207: #{forward_impl.5} parent=1 // pred_check_branch
      %505 = sbr.rel (0) target = $region209
    $region208: #{forward_impl.5} parent=1 // pred_region
      %507 = dma.done [#allocation14], 32
    $region209: #{forward_impl.5} parent=1 // pred_fallthru
      _
    // Predicated region
    $region210: #{forward_impl.5} parent=1 // pred_check
      _
    $region211: #{forward_impl.5} parent=1 // pred_check_branch
      %509 = sbr.rel (0) target = $region213
    $region212: #{forward_impl.5} parent=1 // pred_region
      %511 = dma.done [#allocation17], 4096
    $region213: #{forward_impl.5} parent=1 // pred_fallthru
      _
    // Predicated region
    $region214: #{forward_impl.5} parent=1 // pred_check
      _
    $region215: #{forward_impl.5} parent=1 // pred_check_branch
      %513 = sbr.rel (0) target = $region217
    $region216: #{forward_impl.5} parent=1 // pred_region
      %515 = dma.done [#allocation17], 32
    $region217: #{forward_impl.5} parent=1 // pred_fallthru
      _
    // Predicated region
    $region218: #{forward_impl.5} parent=1 // pred_check
      _
    $region219: #{forward_impl.5} parent=1 // pred_check_branch
      %517 = sbr.rel (0) target = $region221
    $region220: #{forward_impl.5} parent=1 // pred_region
      %519 = dma.done [#allocation20], 16
    $region221: #{forward_impl.5} parent=1 // pred_fallthru
      _
    // Predicated region
    $region222: #{forward_impl.5} parent=1 // pred_check
      _
    $region223: #{forward_impl.5} parent=1 // pred_check_branch
      %521 = sbr.rel (0) target = $region225
    $region224: #{forward_impl.5} parent=1 // pred_region
      %523 = dma.done [#allocation20], 512
    $region225: #{forward_impl.5} parent=1 // pred_fallthru
      _
    // Predicated region
    $region226: #{forward_impl.5} parent=1 // pred_check
      _
    $region227: #{forward_impl.5} parent=1 // pred_check_branch
      %525 = sbr.rel (0) target = $region229
    $region228: #{forward_impl.5} parent=1 // pred_region
      %527 = dma.done [#allocation23], 32
    $region229: #{forward_impl.5} parent=1 // pred_fallthru
      _
    // Predicated region
    $region230: #{forward_impl.5} parent=1 // pred_check
      _
    $region231: #{forward_impl.5} parent=1 // pred_check_branch
      %529 = sbr.rel (0) target = $region233
    $region232: #{forward_impl.5} parent=1 // pred_region
      %531 = dma.done [#allocation23], 4096
    $region233: #{forward_impl.5} parent=1 // pred_fallthru
      _
    // Predicated region
    $region234: #{forward_impl.5} parent=1 // pred_check
      _
    $region235: #{forward_impl.5} parent=1 // pred_check_branch
      %533 = sbr.rel (0) target = $region237
    $region236: #{forward_impl.5} parent=1 // pred_region
      %535 = dma.done [#allocation26], 32
    $region237: #{forward_impl.5} parent=1 // pred_fallthru
      _
    // Predicated region
    $region238: #{forward_impl.5} parent=1 // pred_check
      _
    $region239: #{forward_impl.5} parent=1 // pred_check_branch
      %537 = sbr.rel (0) target = $region241
    $region240: #{forward_impl.5} parent=1 // pred_region
      %539 = dma.done [#allocation26], 4096
    $region241: #{forward_impl.5} parent=1 // pred_fallthru
      _
    // Predicated region
    $region242: #{forward_impl.5} parent=1 // pred_check
      _
    $region243: #{forward_impl.5} parent=1 // pred_check_branch
      %541 = sbr.rel (0) target = $region245
    $region244: #{forward_impl.5} parent=1 // pred_region
      %543 = dma.done [#allocation29], 32
    $region245: #{forward_impl.5} parent=1 // pred_fallthru
      _
    // Predicated region
    $region246: #{forward_impl.5} parent=1 // pred_check
      _
    $region247: #{forward_impl.5} parent=1 // pred_check_branch
      %545 = sbr.rel (0) target = $region249
    $region248: #{forward_impl.5} parent=1 // pred_region
      %547 = dma.done [#allocation29], 4096
    $region249: #{forward_impl.5} parent=1 // pred_fallthru
      _
    // Predicated region
    $region250: #{forward_impl.5} parent=1 // pred_check
      _
    $region251: #{forward_impl.5} parent=1 // pred_check_branch
      %549 = sbr.rel (0) target = $region253
    $region252: #{forward_impl.5} parent=1 // pred_region
      %551 = dma.done [#allocation32], 32
    $region253: #{forward_impl.5} parent=1 // pred_fallthru
      _
    // Predicated region
    $region254: #{forward_impl.5} parent=1 // pred_check
      _
    $region255: #{forward_impl.5} parent=1 // pred_check_branch
      %553 = sbr.rel (0) target = $region257
    $region256: #{forward_impl.5} parent=1 // pred_region
      %555 = dma.done [#allocation32], 512
    $region257: #{forward_impl.5} parent=1 // pred_fallthru
      _
    // Predicated region
    $region258: #{forward_impl.5} parent=1 // pred_check
      _
    $region259: #{forward_impl.5} parent=1 // pred_check_branch
      %557 = sbr.rel (0) target = $region261
    $region260: #{forward_impl.5} parent=1 // pred_region
      %559 = dma.done [#allocation35], 32
    $region261: #{forward_impl.5} parent=1 // pred_fallthru
      _
    // Predicated region
    $region262: #{forward_impl.5} parent=1 // pred_check
      _
    $region263: #{forward_impl.5} parent=1 // pred_check_branch
      %561 = sbr.rel (0) target = $region265
    $region264: #{forward_impl.5} parent=1 // pred_region
      %563 = dma.done [#allocation35], 4096
    $region265: #{forward_impl.5} parent=1 // pred_fallthru
      _
    // Predicated region
    $region266: #{forward_impl.5} parent=1 // pred_check
      _
    $region267: #{forward_impl.5} parent=1 // pred_check_branch
      %565 = sbr.rel (0) target = $region269
    $region268: #{forward_impl.5} parent=1 // pred_region
      %567 = dma.done [#allocation38], 32
    $region269: #{forward_impl.5} parent=1 // pred_fallthru
      _
    // Predicated region
    $region270: #{forward_impl.5} parent=1 // pred_check
      _
    $region271: #{forward_impl.5} parent=1 // pred_check_branch
      %569 = sbr.rel (0) target = $region273
    $region272: #{forward_impl.5} parent=1 // pred_region
      %571 = dma.done [#allocation38], 4096
    $region273: #{forward_impl.5} parent=1 // pred_fallthru
      _
    // Predicated region
    $region274: #{forward_impl.5} parent=1 // pred_check
      _
    $region275: #{forward_impl.5} parent=1 // pred_check_branch
      %573 = sbr.rel (0) target = $region277
    $region276: #{forward_impl.5} parent=1 // pred_region
      %575 = dma.done [#allocation41], 32
    $region277: #{forward_impl.5} parent=1 // pred_fallthru
      _
    // Predicated region
    $region278: #{forward_impl.5} parent=1 // pred_check
      _
    $region279: #{forward_impl.5} parent=1 // pred_check_branch
      %577 = sbr.rel (0) target = $region281
    $region280: #{forward_impl.5} parent=1 // pred_region
      %579 = dma.done [#allocation41], 8192
    $region281: #{forward_impl.5} parent=1 // pred_fallthru
      _
    %v581 = vld [vmem:[%s1] sm:$0xff]
    %v582 = vld [vmem:[%s1 + $0x8] sm:$0xff]
    %v583 = vld [vmem:[%s7] sm:$0xff]
    %v584 = vld [vmem:[%s7 + $0x8] sm:$0xff]
    %v585 = vld [vmem:[%s7 + $0x10] sm:$0xff]
    %v586 = vld [vmem:[%s7 + $0x18] sm:$0xff]
    %v587 = vld [vmem:[%s7 + $0x20] sm:$0xff]
    %v588 = vld [vmem:[%s7 + $0x28] sm:$0xff]
    %v589 = vld [vmem:[%s7 + $0x30] sm:$0xff]
    %v590 = vld [vmem:[%s7 + $0x38] sm:$0xff]
    %v591 = vld [vmem:[%s7 + $0x40] sm:$0xff]
    %v592 = vld [vmem:[%s7 + $0x48] sm:$0xff]
    %v593 = vld [vmem:[%s7 + $0x50] sm:$0xff]
    %v594 = vld [vmem:[%s7 + $0x58] sm:$0xff]
    %v595 = vld [vmem:[%s7 + $0x60] sm:$0xff]
    %v596 = vld [vmem:[%s7 + $0x68] sm:$0xff]
    %v597 = vld [vmem:[%s7 + $0x70] sm:$0xff]
    %v598 = vld [vmem:[%s7 + $0x78] sm:$0xff]
    %v599 = vld [vmem:[%s7 + $0x80] sm:$0xff]
    %v600 = vld [vmem:[%s7 + $0x88] sm:$0xff]
    %v601 = vld [vmem:[%s7 + $0x90] sm:$0xff]
    %v602 = vld [vmem:[%s7 + $0x98] sm:$0xff]
    %v603 = vld [vmem:[%s7 + $0xa0] sm:$0xff]
    %v604 = vld [vmem:[%s7 + $0xa8] sm:$0xff]
    %v605 = vld [vmem:[%s7 + $0xb0] sm:$0xff]
    %v606 = vld [vmem:[%s7 + $0xb8] sm:$0xff]
    %v607 = vld [vmem:[%s7 + $0xc0] sm:$0xff]
    %v608 = vld [vmem:[%s7 + $0xc8] sm:$0xff]
    %v609 = vld [vmem:[%s7 + $0xd0] sm:$0xff]
    %v610 = vld [vmem:[%s7 + $0xd8] sm:$0xff]
    %v611 = vld [vmem:[%s7 + $0xe0] sm:$0xff]
    %v612 = vld [vmem:[%s7 + $0xe8] sm:$0xff]
    %v613 = vld [vmem:[%s7 + $0xf0] sm:$0xff]
    %v614 = vld [vmem:[%s7 + $0xf8] sm:$0xff]
    %v615 = vld [vmem:[%s9] sm:$0x3]
    %v616 = vpack.c.bf16 %v581, %v581
    %v617 = vpack.c.bf16 %v582, %v582
    %v619 = vperm.slane %v615, 0
    %v620 = vperm.slane %v615, 1
    %v655 = vunpack.c.l.b16 %v583
    %v656 = vunpack.c.h.b16 %v583
    %v657 = vunpack.c.l.b16 %v584
    %v658 = vunpack.c.h.b16 %v584
    %v659 = vunpack.c.l.b16 %v585
    %v660 = vunpack.c.h.b16 %v585
    %v661 = vunpack.c.l.b16 %v586
    %v662 = vunpack.c.h.b16 %v586
    %v663 = vunpack.c.l.b16 %v587
    %v664 = vunpack.c.h.b16 %v587
    %v665 = vunpack.c.l.b16 %v588
    %v666 = vunpack.c.h.b16 %v588
    %v667 = vunpack.c.l.b16 %v589
    %v668 = vunpack.c.h.b16 %v589
    %v669 = vunpack.c.l.b16 %v590
    %v670 = vunpack.c.h.b16 %v590
    %v671 = vunpack.c.l.b16 %v591
    %v672 = vunpack.c.h.b16 %v591
    %v673 = vunpack.c.l.b16 %v592
    %v674 = vunpack.c.h.b16 %v592
    %v675 = vunpack.c.l.b16 %v593
    %v676 = vunpack.c.h.b16 %v593
    %v677 = vunpack.c.l.b16 %v594
    %v678 = vunpack.c.h.b16 %v594
    %v679 = vunpack.c.l.b16 %v595
    %v680 = vunpack.c.h.b16 %v595
    %v681 = vunpack.c.l.b16 %v596
    %v682 = vunpack.c.h.b16 %v596
    %v683 = vunpack.c.l.b16 %v597
    %v684 = vunpack.c.h.b16 %v597
    %v685 = vunpack.c.l.b16 %v598
    %v686 = vunpack.c.h.b16 %v598
    %v687 = vunpack.c.l.b16 %v599
    %v688 = vunpack.c.h.b16 %v599
    %v689 = vunpack.c.l.b16 %v600
    %v690 = vunpack.c.h.b16 %v600
    %v691 = vunpack.c.l.b16 %v601
    %v692 = vunpack.c.h.b16 %v601
    %v693 = vunpack.c.l.b16 %v602
    %v694 = vunpack.c.h.b16 %v602
    %v695 = vunpack.c.l.b16 %v603
    %v696 = vunpack.c.h.b16 %v603
    %v697 = vunpack.c.l.b16 %v604
    %v698 = vunpack.c.h.b16 %v604
    %v699 = vunpack.c.l.b16 %v605
    %v700 = vunpack.c.h.b16 %v605
    %v701 = vunpack.c.l.b16 %v606
    %v702 = vunpack.c.h.b16 %v606
    %v703 = vunpack.c.l.b16 %v607
    %v704 = vunpack.c.h.b16 %v607
    %v705 = vunpack.c.l.b16 %v608
    %v706 = vunpack.c.h.b16 %v608
    %v707 = vunpack.c.l.b16 %v609
    %v708 = vunpack.c.h.b16 %v609
    %v709 = vunpack.c.l.b16 %v610
    %v710 = vunpack.c.h.b16 %v610
    %v711 = vunpack.c.l.b16 %v611
    %v712 = vunpack.c.h.b16 %v611
    %v713 = vunpack.c.l.b16 %v612
    %v714 = vunpack.c.h.b16 %v612
    %v715 = vunpack.c.l.b16 %v613
    %v716 = vunpack.c.h.b16 %v613
    %v717 = vunpack.c.l.b16 %v614
    %v718 = vunpack.c.h.b16 %v614
    %v719 = vpack.c.b16 %v657, %v655
    %v720 = vpack.c.b16 %v658, %v656
    %v721 = vpack.c.b16 %v661, %v659
    %v722 = vpack.c.b16 %v662, %v660
    %v723 = vpack.c.b16 %v665, %v663
    %v724 = vpack.c.b16 %v666, %v664
    %v725 = vpack.c.b16 %v669, %v667
    %v726 = vpack.c.b16 %v670, %v668
    %v727 = vpack.c.b16 %v673, %v671
    %v728 = vpack.c.b16 %v674, %v672
    %v729 = vpack.c.b16 %v677, %v675
    %v730 = vpack.c.b16 %v678, %v676
    %v731 = vpack.c.b16 %v681, %v679
    %v732 = vpack.c.b16 %v682, %v680
    %v733 = vpack.c.b16 %v685, %v683
    %v734 = vpack.c.b16 %v686, %v684
    %v735 = vpack.c.b16 %v689, %v687
    %v736 = vpack.c.b16 %v690, %v688
    %v737 = vpack.c.b16 %v693, %v691
    %v738 = vpack.c.b16 %v694, %v692
    %v739 = vpack.c.b16 %v697, %v695
    %v740 = vpack.c.b16 %v698, %v696
    %v741 = vpack.c.b16 %v701, %v699
    %v742 = vpack.c.b16 %v702, %v700
    %v743 = vpack.c.b16 %v705, %v703
    %v744 = vpack.c.b16 %v706, %v704
    %v745 = vpack.c.b16 %v709, %v707
    %v746 = vpack.c.b16 %v710, %v708
    %v747 = vpack.c.b16 %v713, %v711
    %v748 = vpack.c.b16 %v714, %v712
    %v749 = vpack.c.b16 %v717, %v715
    %v750 = vpack.c.b16 %v718, %v716
    %783 = vmatpush.bf16.msra.mxu0 %v733
    %784 = vmatpush.bf16.msra.mxu0 %v731
    %785 = vmatpush.bf16.msra.mxu0 %v729
    %786 = vmatpush.bf16.msra.mxu0 %v727
    %787 = vmatpush.bf16.msra.mxu0 %v725
    %788 = vmatpush.bf16.msra.mxu0 %v723
    %789 = vmatpush.bf16.msra.mxu0 %v721
    %790 = vmatpush.bf16.msra.mxu0 %v719
    %791 = vmatmul.bf16.gmra.mxu0 %v616
    %v792 = vpop.f32.mrf.mxu0
    %v793 = vadd.f32 %v619, %v792
    %v794 = vpop.f32.mrf.mxu0
    %795 = vdwg.mxu0
    %796 = vmatpush.bf16.msra.mxu0 %v749
    %797 = vmatpush.bf16.msra.mxu0 %v747
    %798 = vmatpush.bf16.msra.mxu0 %v745
    %799 = vmatpush.bf16.msra.mxu0 %v743
    %800 = vmatpush.bf16.msra.mxu0 %v741
    %801 = vmatpush.bf16.msra.mxu0 %v739
    %802 = vmatpush.bf16.msra.mxu0 %v737
    %803 = vmatpush.bf16.msra.mxu0 %v735
    %804 = vmatmul.bf16.gmra.mxu0 %v617
    %v805 = vpop.f32.mrf.mxu0
    %v806 = vadd.f32 %v793, %v805
    %v807 = vpop.f32.mrf.mxu0
    %808 = vdwg.mxu0
    %809 = vmatpush.bf16.msra.mxu0 %v734
    %810 = vmatpush.bf16.msra.mxu0 %v732
    %811 = vmatpush.bf16.msra.mxu0 %v730
    %812 = vmatpush.bf16.msra.mxu0 %v728
    %813 = vmatpush.bf16.msra.mxu0 %v726
    %814 = vmatpush.bf16.msra.mxu0 %v724
    %815 = vmatpush.bf16.msra.mxu0 %v722
    %816 = vmatpush.bf16.msra.mxu0 %v720
    %817 = vmatmul.bf16.gmra.mxu0 %v616
    %v818 = vpop.f32.mrf.mxu0
    %v819 = vadd.f32 %v620, %v818
    %v820 = vpop.f32.mrf.mxu0
    %821 = vdwg.mxu0
    %822 = vmatpush.bf16.msra.mxu0 %v750
    %823 = vmatpush.bf16.msra.mxu0 %v748
    %824 = vmatpush.bf16.msra.mxu0 %v746
    %825 = vmatpush.bf16.msra.mxu0 %v744
    %826 = vmatpush.bf16.msra.mxu0 %v742
    %827 = vmatpush.bf16.msra.mxu0 %v740
    %828 = vmatpush.bf16.msra.mxu0 %v738
    %829 = vmatpush.bf16.msra.mxu0 %v736
    %830 = vmatmul.bf16.gmra.mxu0 %v617
    %v831 = vpop.f32.mrf.mxu0
    %v832 = vadd.f32 %v819, %v831
    %v833 = vpop.f32.mrf.mxu0
    %834 = vdwg.mxu0
    %v835 = vmul.f32 %v806, 0.01
    %v836 = vmul.f32 %v832, 0.01
    %v837 = vmax.f32 %v806, %v835
    %v838 = vmax.f32 %v832, %v836
    %v839 = vld [vmem:[#allocation2] sm:$0xff]
    %v840 = vld [vmem:[#allocation2 + $0x8] sm:$0xff]
    %v841 = vld [vmem:[#allocation2 + $0x10] sm:$0xff]
    %v842 = vld [vmem:[#allocation2 + $0x18] sm:$0xff]
    %v843 = vld [vmem:[#allocation2 + $0x20] sm:$0xff]
    %v844 = vld [vmem:[#allocation2 + $0x28] sm:$0xff]
    %v845 = vld [vmem:[#allocation2 + $0x30] sm:$0xff]
    %v846 = vld [vmem:[#allocation2 + $0x38] sm:$0xff]
    %v847 = vld [vmem:[#allocation2 + $0x40] sm:$0xff]
    %v848 = vld [vmem:[#allocation2 + $0x48] sm:$0xff]
    %v849 = vld [vmem:[#allocation2 + $0x50] sm:$0xff]
    %v850 = vld [vmem:[#allocation2 + $0x58] sm:$0xff]
    %v851 = vld [vmem:[#allocation2 + $0x60] sm:$0xff]
    %v852 = vld [vmem:[#allocation2 + $0x68] sm:$0xff]
    %v853 = vld [vmem:[#allocation2 + $0x70] sm:$0xff]
    %v854 = vld [vmem:[#allocation2 + $0x78] sm:$0xff]
    %v855 = vld [vmem:[#allocation2 + $0x80] sm:$0xff]
    %v856 = vld [vmem:[#allocation2 + $0x88] sm:$0xff]
    %v857 = vld [vmem:[#allocation2 + $0x90] sm:$0xff]
    %v858 = vld [vmem:[#allocation2 + $0x98] sm:$0xff]
    %v859 = vld [vmem:[#allocation2 + $0xa0] sm:$0xff]
    %v860 = vld [vmem:[#allocation2 + $0xa8] sm:$0xff]
    %v861 = vld [vmem:[#allocation2 + $0xb0] sm:$0xff]
    %v862 = vld [vmem:[#allocation2 + $0xb8] sm:$0xff]
    %v863 = vld [vmem:[#allocation2 + $0xc0] sm:$0xff]
    %v864 = vld [vmem:[#allocation2 + $0xc8] sm:$0xff]
    %v865 = vld [vmem:[#allocation2 + $0xd0] sm:$0xff]
    %v866 = vld [vmem:[#allocation2 + $0xd8] sm:$0xff]
    %v867 = vld [vmem:[#allocation2 + $0xe0] sm:$0xff]
    %v868 = vld [vmem:[#allocation2 + $0xe8] sm:$0xff]
    %v869 = vld [vmem:[#allocation2 + $0xf0] sm:$0xff]
    %v870 = vld [vmem:[#allocation2 + $0xf8] sm:$0xff]
    %v871 = vld [vmem:[%s13] sm:$0x3]
    %v872 = vpack.c.bf16 %v837, %v837
    %v873 = vpack.c.bf16 %v838, %v838
    %v875 = vperm.slane %v871, 0
    %v876 = vperm.slane %v871, 1
    %v911 = vunpack.c.l.b16 %v839
    %v912 = vunpack.c.h.b16 %v839
    %v913 = vunpack.c.l.b16 %v840
    %v914 = vunpack.c.h.b16 %v840
    %v915 = vunpack.c.l.b16 %v841
    %v916 = vunpack.c.h.b16 %v841
    %v917 = vunpack.c.l.b16 %v842
    %v918 = vunpack.c.h.b16 %v842
    %v919 = vunpack.c.l.b16 %v843
    %v920 = vunpack.c.h.b16 %v843
    %v921 = vunpack.c.l.b16 %v844
    %v922 = vunpack.c.h.b16 %v844
    %v923 = vunpack.c.l.b16 %v845
    %v924 = vunpack.c.h.b16 %v845
    %v925 = vunpack.c.l.b16 %v846
    %v926 = vunpack.c.h.b16 %v846
    %v927 = vunpack.c.l.b16 %v847
    %v928 = vunpack.c.h.b16 %v847
    %v929 = vunpack.c.l.b16 %v848
    %v930 = vunpack.c.h.b16 %v848
    %v931 = vunpack.c.l.b16 %v849
    %v932 = vunpack.c.h.b16 %v849
    %v933 = vunpack.c.l.b16 %v850
    %v934 = vunpack.c.h.b16 %v850
    %v935 = vunpack.c.l.b16 %v851
    %v936 = vunpack.c.h.b16 %v851
    %v937 = vunpack.c.l.b16 %v852
    %v938 = vunpack.c.h.b16 %v852
    %v939 = vunpack.c.l.b16 %v853
    %v940 = vunpack.c.h.b16 %v853
    %v941 = vunpack.c.l.b16 %v854
    %v942 = vunpack.c.h.b16 %v854
    %v943 = vunpack.c.l.b16 %v855
    %v944 = vunpack.c.h.b16 %v855
    %v945 = vunpack.c.l.b16 %v856
    %v946 = vunpack.c.h.b16 %v856
    %v947 = vunpack.c.l.b16 %v857
    %v948 = vunpack.c.h.b16 %v857
    %v949 = vunpack.c.l.b16 %v858
    %v950 = vunpack.c.h.b16 %v858
    %v951 = vunpack.c.l.b16 %v859
    %v952 = vunpack.c.h.b16 %v859
    %v953 = vunpack.c.l.b16 %v860
    %v954 = vunpack.c.h.b16 %v860
    %v955 = vunpack.c.l.b16 %v861
    %v956 = vunpack.c.h.b16 %v861
    %v957 = vunpack.c.l.b16 %v862
    %v958 = vunpack.c.h.b16 %v862
    %v959 = vunpack.c.l.b16 %v863
    %v960 = vunpack.c.h.b16 %v863
    %v961 = vunpack.c.l.b16 %v864
    %v962 = vunpack.c.h.b16 %v864
    %v963 = vunpack.c.l.b16 %v865
    %v964 = vunpack.c.h.b16 %v865
    %v965 = vunpack.c.l.b16 %v866
    %v966 = vunpack.c.h.b16 %v866
    %v967 = vunpack.c.l.b16 %v867
    %v968 = vunpack.c.h.b16 %v867
    %v969 = vunpack.c.l.b16 %v868
    %v970 = vunpack.c.h.b16 %v868
    %v971 = vunpack.c.l.b16 %v869
    %v972 = vunpack.c.h.b16 %v869
    %v973 = vunpack.c.l.b16 %v870
    %v974 = vunpack.c.h.b16 %v870
    %v975 = vpack.c.b16 %v913, %v911
    %v976 = vpack.c.b16 %v914, %v912
    %v977 = vpack.c.b16 %v917, %v915
    %v978 = vpack.c.b16 %v918, %v916
    %v979 = vpack.c.b16 %v921, %v919
    %v980 = vpack.c.b16 %v922, %v920
    %v981 = vpack.c.b16 %v925, %v923
    %v982 = vpack.c.b16 %v926, %v924
    %v983 = vpack.c.b16 %v929, %v927
    %v984 = vpack.c.b16 %v930, %v928
    %v985 = vpack.c.b16 %v933, %v931
    %v986 = vpack.c.b16 %v934, %v932
    %v987 = vpack.c.b16 %v937, %v935
    %v988 = vpack.c.b16 %v938, %v936
    %v989 = vpack.c.b16 %v941, %v939
    %v990 = vpack.c.b16 %v942, %v940
    %v991 = vpack.c.b16 %v945, %v943
    %v992 = vpack.c.b16 %v946, %v944
    %v993 = vpack.c.b16 %v949, %v947
    %v994 = vpack.c.b16 %v950, %v948
    %v995 = vpack.c.b16 %v953, %v951
    %v996 = vpack.c.b16 %v954, %v952
    %v997 = vpack.c.b16 %v957, %v955
    %v998 = vpack.c.b16 %v958, %v956
    %v999 = vpack.c.b16 %v961, %v959
    %v1000 = vpack.c.b16 %v962, %v960
    %v1001 = vpack.c.b16 %v965, %v963
    %v1002 = vpack.c.b16 %v966, %v964
    %v1003 = vpack.c.b16 %v969, %v967
    %v1004 = vpack.c.b16 %v970, %v968
    %v1005 = vpack.c.b16 %v973, %v971
    %v1006 = vpack.c.b16 %v974, %v972
    %1039 = vmatpush.bf16.msra.mxu0 %v989
    %1040 = vmatpush.bf16.msra.mxu0 %v987
    %1041 = vmatpush.bf16.msra.mxu0 %v985
    %1042 = vmatpush.bf16.msra.mxu0 %v983
    %1043 = vmatpush.bf16.msra.mxu0 %v981
    %1044 = vmatpush.bf16.msra.mxu0 %v979
    %1045 = vmatpush.bf16.msra.mxu0 %v977
    %1046 = vmatpush.bf16.msra.mxu0 %v975
    %1047 = vmatmul.bf16.gmra.mxu0 %v872
    %v1048 = vpop.f32.mrf.mxu0
    %v1049 = vadd.f32 %v875, %v1048
    %v1050 = vpop.f32.mrf.mxu0
    %1051 = vdwg.mxu0
    %1052 = vmatpush.bf16.msra.mxu0 %v1005
    %1053 = vmatpush.bf16.msra.mxu0 %v1003
    %1054 = vmatpush.bf16.msra.mxu0 %v1001
    %1055 = vmatpush.bf16.msra.mxu0 %v999
    %1056 = vmatpush.bf16.msra.mxu0 %v997
    %1057 = vmatpush.bf16.msra.mxu0 %v995
    %1058 = vmatpush.bf16.msra.mxu0 %v993
    %1059 = vmatpush.bf16.msra.mxu0 %v991
    %1060 = vmatmul.bf16.gmra.mxu0 %v873
    %v1061 = vpop.f32.mrf.mxu0
    %v1062 = vadd.f32 %v1049, %v1061
    %v1063 = vpop.f32.mrf.mxu0
    %1064 = vdwg.mxu0
    %1065 = vmatpush.bf16.msra.mxu0 %v990
    %1066 = vmatpush.bf16.msra.mxu0 %v988
    %1067 = vmatpush.bf16.msra.mxu0 %v986
    %1068 = vmatpush.bf16.msra.mxu0 %v984
    %1069 = vmatpush.bf16.msra.mxu0 %v982
    %1070 = vmatpush.bf16.msra.mxu0 %v980
    %1071 = vmatpush.bf16.msra.mxu0 %v978
    %1072 = vmatpush.bf16.msra.mxu0 %v976
    %1073 = vmatmul.bf16.gmra.mxu0 %v872
    %v1074 = vpop.f32.mrf.mxu0
    %v1075 = vadd.f32 %v876, %v1074
    %v1076 = vpop.f32.mrf.mxu0
    %1077 = vdwg.mxu0
    %1078 = vmatpush.bf16.msra.mxu0 %v1006
    %1079 = vmatpush.bf16.msra.mxu0 %v1004
    %1080 = vmatpush.bf16.msra.mxu0 %v1002
    %1081 = vmatpush.bf16.msra.mxu0 %v1000
    %1082 = vmatpush.bf16.msra.mxu0 %v998
    %1083 = vmatpush.bf16.msra.mxu0 %v996
    %1084 = vmatpush.bf16.msra.mxu0 %v994
    %1085 = vmatpush.bf16.msra.mxu0 %v992
    %1086 = vmatmul.bf16.gmra.mxu0 %v873
    %v1087 = vpop.f32.mrf.mxu0
    %v1088 = vadd.f32 %v1075, %v1087
    %v1089 = vpop.f32.mrf.mxu0
    %1090 = vdwg.mxu0
    %v1091 = vmul.f32 %v1062, 0.01
    %v1092 = vmul.f32 %v1088, 0.01
    %v1093 = vmax.f32 %v1062, %v1091
    %v1094 = vmax.f32 %v1088, %v1092
    %v1095 = vld [vmem:[#allocation4] sm:$0xff]
    %v1096 = vld [vmem:[#allocation4 + $0x8] sm:$0xff]
    %v1097 = vld [vmem:[#allocation4 + $0x10] sm:$0xff]
    %v1098 = vld [vmem:[#allocation4 + $0x18] sm:$0xff]
    %v1099 = vld [vmem:[#allocation4 + $0x20] sm:$0xff]
    %v1100 = vld [vmem:[#allocation4 + $0x28] sm:$0xff]
    %v1101 = vld [vmem:[#allocation4 + $0x30] sm:$0xff]
    %v1102 = vld [vmem:[#allocation4 + $0x38] sm:$0xff]
    %v1103 = vld [vmem:[#allocation4 + $0x40] sm:$0xff]
    %v1104 = vld [vmem:[#allocation4 + $0x48] sm:$0xff]
    %v1105 = vld [vmem:[#allocation4 + $0x50] sm:$0xff]
    %v1106 = vld [vmem:[#allocation4 + $0x58] sm:$0xff]
    %v1107 = vld [vmem:[#allocation4 + $0x60] sm:$0xff]
    %v1108 = vld [vmem:[#allocation4 + $0x68] sm:$0xff]
    %v1109 = vld [vmem:[#allocation4 + $0x70] sm:$0xff]
    %v1110 = vld [vmem:[#allocation4 + $0x78] sm:$0xff]
    %v1111 = vld [vmem:[#allocation4 + $0x80] sm:$0xff]
    %v1112 = vld [vmem:[#allocation4 + $0x88] sm:$0xff]
    %v1113 = vld [vmem:[#allocation4 + $0x90] sm:$0xff]
    %v1114 = vld [vmem:[#allocation4 + $0x98] sm:$0xff]
    %v1115 = vld [vmem:[#allocation4 + $0xa0] sm:$0xff]
    %v1116 = vld [vmem:[#allocation4 + $0xa8] sm:$0xff]
    %v1117 = vld [vmem:[#allocation4 + $0xb0] sm:$0xff]
    %v1118 = vld [vmem:[#allocation4 + $0xb8] sm:$0xff]
    %v1119 = vld [vmem:[#allocation4 + $0xc0] sm:$0xff]
    %v1120 = vld [vmem:[#allocation4 + $0xc8] sm:$0xff]
    %v1121 = vld [vmem:[#allocation4 + $0xd0] sm:$0xff]
    %v1122 = vld [vmem:[#allocation4 + $0xd8] sm:$0xff]
    %v1123 = vld [vmem:[#allocation4 + $0xe0] sm:$0xff]
    %v1124 = vld [vmem:[#allocation4 + $0xe8] sm:$0xff]
    %v1125 = vld [vmem:[#allocation4 + $0xf0] sm:$0xff]
    %v1126 = vld [vmem:[#allocation4 + $0xf8] sm:$0xff]
    %v1127 = vld [vmem:[%s17] sm:$0x3]
    %v1128 = vpack.c.bf16 %v1093, %v1093
    %v1129 = vpack.c.bf16 %v1094, %v1094
    %v1131 = vperm.slane %v1127, 0
    %v1132 = vperm.slane %v1127, 1
    %v1167 = vunpack.c.l.b16 %v1095
    %v1168 = vunpack.c.h.b16 %v1095
    %v1169 = vunpack.c.l.b16 %v1096
    %v1170 = vunpack.c.h.b16 %v1096
    %v1171 = vunpack.c.l.b16 %v1097
    %v1172 = vunpack.c.h.b16 %v1097
    %v1173 = vunpack.c.l.b16 %v1098
    %v1174 = vunpack.c.h.b16 %v1098
    %v1175 = vunpack.c.l.b16 %v1099
    %v1176 = vunpack.c.h.b16 %v1099
    %v1177 = vunpack.c.l.b16 %v1100
    %v1178 = vunpack.c.h.b16 %v1100
    %v1179 = vunpack.c.l.b16 %v1101
    %v1180 = vunpack.c.h.b16 %v1101
    %v1181 = vunpack.c.l.b16 %v1102
    %v1182 = vunpack.c.h.b16 %v1102
    %v1183 = vunpack.c.l.b16 %v1103
    %v1184 = vunpack.c.h.b16 %v1103
    %v1185 = vunpack.c.l.b16 %v1104
    %v1186 = vunpack.c.h.b16 %v1104
    %v1187 = vunpack.c.l.b16 %v1105
    %v1188 = vunpack.c.h.b16 %v1105
    %v1189 = vunpack.c.l.b16 %v1106
    %v1190 = vunpack.c.h.b16 %v1106
    %v1191 = vunpack.c.l.b16 %v1107
    %v1192 = vunpack.c.h.b16 %v1107
    %v1193 = vunpack.c.l.b16 %v1108
    %v1194 = vunpack.c.h.b16 %v1108
    %v1195 = vunpack.c.l.b16 %v1109
    %v1196 = vunpack.c.h.b16 %v1109
    %v1197 = vunpack.c.l.b16 %v1110
    %v1198 = vunpack.c.h.b16 %v1110
    %v1199 = vunpack.c.l.b16 %v1111
    %v1200 = vunpack.c.h.b16 %v1111
    %v1201 = vunpack.c.l.b16 %v1112
    %v1202 = vunpack.c.h.b16 %v1112
    %v1203 = vunpack.c.l.b16 %v1113
    %v1204 = vunpack.c.h.b16 %v1113
    %v1205 = vunpack.c.l.b16 %v1114
    %v1206 = vunpack.c.h.b16 %v1114
    %v1207 = vunpack.c.l.b16 %v1115
    %v1208 = vunpack.c.h.b16 %v1115
    %v1209 = vunpack.c.l.b16 %v1116
    %v1210 = vunpack.c.h.b16 %v1116
    %v1211 = vunpack.c.l.b16 %v1117
    %v1212 = vunpack.c.h.b16 %v1117
    %v1213 = vunpack.c.l.b16 %v1118
    %v1214 = vunpack.c.h.b16 %v1118
    %v1215 = vunpack.c.l.b16 %v1119
    %v1216 = vunpack.c.h.b16 %v1119
    %v1217 = vunpack.c.l.b16 %v1120
    %v1218 = vunpack.c.h.b16 %v1120
    %v1219 = vunpack.c.l.b16 %v1121
    %v1220 = vunpack.c.h.b16 %v1121
    %v1221 = vunpack.c.l.b16 %v1122
    %v1222 = vunpack.c.h.b16 %v1122
    %v1223 = vunpack.c.l.b16 %v1123
    %v1224 = vunpack.c.h.b16 %v1123
    %v1225 = vunpack.c.l.b16 %v1124
    %v1226 = vunpack.c.h.b16 %v1124
    %v1227 = vunpack.c.l.b16 %v1125
    %v1228 = vunpack.c.h.b16 %v1125
    %v1229 = vunpack.c.l.b16 %v1126
    %v1230 = vunpack.c.h.b16 %v1126
    %v1231 = vpack.c.b16 %v1169, %v1167
    %v1232 = vpack.c.b16 %v1170, %v1168
    %v1233 = vpack.c.b16 %v1173, %v1171
    %v1234 = vpack.c.b16 %v1174, %v1172
    %v1235 = vpack.c.b16 %v1177, %v1175
    %v1236 = vpack.c.b16 %v1178, %v1176
    %v1237 = vpack.c.b16 %v1181, %v1179
    %v1238 = vpack.c.b16 %v1182, %v1180
    %v1239 = vpack.c.b16 %v1185, %v1183
    %v1240 = vpack.c.b16 %v1186, %v1184
    %v1241 = vpack.c.b16 %v1189, %v1187
    %v1242 = vpack.c.b16 %v1190, %v1188
    %v1243 = vpack.c.b16 %v1193, %v1191
    %v1244 = vpack.c.b16 %v1194, %v1192
    %v1245 = vpack.c.b16 %v1197, %v1195
    %v1246 = vpack.c.b16 %v1198, %v1196
    %v1247 = vpack.c.b16 %v1201, %v1199
    %v1248 = vpack.c.b16 %v1202, %v1200
    %v1249 = vpack.c.b16 %v1205, %v1203
    %v1250 = vpack.c.b16 %v1206, %v1204
    %v1251 = vpack.c.b16 %v1209, %v1207
    %v1252 = vpack.c.b16 %v1210, %v1208
    %v1253 = vpack.c.b16 %v1213, %v1211
    %v1254 = vpack.c.b16 %v1214, %v1212
    %v1255 = vpack.c.b16 %v1217, %v1215
    %v1256 = vpack.c.b16 %v1218, %v1216
    %v1257 = vpack.c.b16 %v1221, %v1219
    %v1258 = vpack.c.b16 %v1222, %v1220
    %v1259 = vpack.c.b16 %v1225, %v1223
    %v1260 = vpack.c.b16 %v1226, %v1224
    %v1261 = vpack.c.b16 %v1229, %v1227
    %v1262 = vpack.c.b16 %v1230, %v1228
    %1295 = vmatpush.bf16.msra.mxu0 %v1245
    %1296 = vmatpush.bf16.msra.mxu0 %v1243
    %1297 = vmatpush.bf16.msra.mxu0 %v1241
    %1298 = vmatpush.bf16.msra.mxu0 %v1239
    %1299 = vmatpush.bf16.msra.mxu0 %v1237
    %1300 = vmatpush.bf16.msra.mxu0 %v1235
    %1301 = vmatpush.bf16.msra.mxu0 %v1233
    %1302 = vmatpush.bf16.msra.mxu0 %v1231
    %1303 = vmatmul.bf16.gmra.mxu0 %v1128
    %v1304 = vpop.f32.mrf.mxu0
    %v1305 = vadd.f32 %v1131, %v1304
    %v1306 = vpop.f32.mrf.mxu0
    %1307 = vdwg.mxu0
    %1308 = vmatpush.bf16.msra.mxu0 %v1261
    %1309 = vmatpush.bf16.msra.mxu0 %v1259
    %1310 = vmatpush.bf16.msra.mxu0 %v1257
    %1311 = vmatpush.bf16.msra.mxu0 %v1255
    %1312 = vmatpush.bf16.msra.mxu0 %v1253
    %1313 = vmatpush.bf16.msra.mxu0 %v1251
    %1314 = vmatpush.bf16.msra.mxu0 %v1249
    %1315 = vmatpush.bf16.msra.mxu0 %v1247
    %1316 = vmatmul.bf16.gmra.mxu0 %v1129
    %v1317 = vpop.f32.mrf.mxu0
    %v1318 = vadd.f32 %v1305, %v1317
    %v1319 = vpop.f32.mrf.mxu0
    %1320 = vdwg.mxu0
    %1321 = vmatpush.bf16.msra.mxu0 %v1246
    %1322 = vmatpush.bf16.msra.mxu0 %v1244
    %1323 = vmatpush.bf16.msra.mxu0 %v1242
    %1324 = vmatpush.bf16.msra.mxu0 %v1240
    %1325 = vmatpush.bf16.msra.mxu0 %v1238
    %1326 = vmatpush.bf16.msra.mxu0 %v1236
    %1327 = vmatpush.bf16.msra.mxu0 %v1234
    %1328 = vmatpush.bf16.msra.mxu0 %v1232
    %1329 = vmatmul.bf16.gmra.mxu0 %v1128
    %v1330 = vpop.f32.mrf.mxu0
    %v1331 = vadd.f32 %v1132, %v1330
    %v1332 = vpop.f32.mrf.mxu0
    %1333 = vdwg.mxu0
    %1334 = vmatpush.bf16.msra.mxu0 %v1262
    %1335 = vmatpush.bf16.msra.mxu0 %v1260
    %1336 = vmatpush.bf16.msra.mxu0 %v1258
    %1337 = vmatpush.bf16.msra.mxu0 %v1256
    %1338 = vmatpush.bf16.msra.mxu0 %v1254
    %1339 = vmatpush.bf16.msra.mxu0 %v1252
    %1340 = vmatpush.bf16.msra.mxu0 %v1250
    %1341 = vmatpush.bf16.msra.mxu0 %v1248
    %1342 = vmatmul.bf16.gmra.mxu0 %v1129
    %v1343 = vpop.f32.mrf.mxu0
    %v1344 = vadd.f32 %v1331, %v1343
    %v1345 = vpop.f32.mrf.mxu0
    %1346 = vdwg.mxu0
    %v1347 = vmul.f32 %v1318, 0.01
    %v1348 = vmul.f32 %v1344, 0.01
    %v1349 = vmax.f32 %v1318, %v1347
    %v1350 = vmax.f32 %v1344, %v1348
    %v1351 = vld [vmem:[%s19] sm:$0xf]
    %v1352 = vld [vmem:[%s19 + $0x4] sm:$0xf]
    %v1353 = vld [vmem:[%s19 + $0x8] sm:$0xf]
    %v1354 = vld [vmem:[%s19 + $0xc] sm:$0xf]
    %v1355 = vld [vmem:[%s19 + $0x10] sm:$0xf]
    %v1356 = vld [vmem:[%s19 + $0x14] sm:$0xf]
    %v1357 = vld [vmem:[%s19 + $0x18] sm:$0xf]
    %v1358 = vld [vmem:[%s19 + $0x1c] sm:$0xf]
    %v1359 = vld [vmem:[%s19 + $0x20] sm:$0xf]
    %v1360 = vld [vmem:[%s19 + $0x24] sm:$0xf]
    %v1361 = vld [vmem:[%s19 + $0x28] sm:$0xf]
    %v1362 = vld [vmem:[%s19 + $0x2c] sm:$0xf]
    %v1363 = vld [vmem:[%s19 + $0x30] sm:$0xf]
    %v1364 = vld [vmem:[%s19 + $0x34] sm:$0xf]
    %v1365 = vld [vmem:[%s19 + $0x38] sm:$0xf]
    %v1366 = vld [vmem:[%s19 + $0x3c] sm:$0xf]
    %v1367 = vld [vmem:[%s19 + $0x40] sm:$0xf]
    %v1368 = vld [vmem:[%s19 + $0x44] sm:$0xf]
    %v1369 = vld [vmem:[%s19 + $0x48] sm:$0xf]
    %v1370 = vld [vmem:[%s19 + $0x4c] sm:$0xf]
    %v1371 = vld [vmem:[%s19 + $0x50] sm:$0xf]
    %v1372 = vld [vmem:[%s19 + $0x54] sm:$0xf]
    %v1373 = vld [vmem:[%s19 + $0x58] sm:$0xf]
    %v1374 = vld [vmem:[%s19 + $0x5c] sm:$0xf]
    %v1375 = vld [vmem:[%s19 + $0x60] sm:$0xf]
    %v1376 = vld [vmem:[%s19 + $0x64] sm:$0xf]
    %v1377 = vld [vmem:[%s19 + $0x68] sm:$0xf]
    %v1378 = vld [vmem:[%s19 + $0x6c] sm:$0xf]
    %v1379 = vld [vmem:[%s19 + $0x70] sm:$0xf]
    %v1380 = vld [vmem:[%s19 + $0x74] sm:$0xf]
    %v1381 = vld [vmem:[%s19 + $0x78] sm:$0xf]
    %v1382 = vld [vmem:[%s19 + $0x7c] sm:$0xf]
    %v1383 = vld [vmem:[#allocation6] sm:$0x1]
    %v1384 = vpack.c.bf16 %v1349, %v1349
    %v1385 = vpack.c.bf16 %v1350, %v1350
    %v1387 = vperm.slane %v1383, 0
    %v1421 = vunpack.c.l.b16 %v1351
    %v1422 = vunpack.c.l.b16 %v1352
    %v1423 = vunpack.c.l.b16 %v1353
    %v1424 = vunpack.c.l.b16 %v1354
    %v1425 = vunpack.c.l.b16 %v1355
    %v1426 = vunpack.c.l.b16 %v1356
    %v1427 = vunpack.c.l.b16 %v1357
    %v1428 = vunpack.c.l.b16 %v1358
    %v1429 = vunpack.c.l.b16 %v1359
    %v1430 = vunpack.c.l.b16 %v1360
    %v1431 = vunpack.c.l.b16 %v1361
    %v1432 = vunpack.c.l.b16 %v1362
    %v1433 = vunpack.c.l.b16 %v1363
    %v1434 = vunpack.c.l.b16 %v1364
    %v1435 = vunpack.c.l.b16 %v1365
    %v1436 = vunpack.c.l.b16 %v1366
    %v1437 = vunpack.c.l.b16 %v1367
    %v1438 = vunpack.c.l.b16 %v1368
    %v1439 = vunpack.c.l.b16 %v1369
    %v1440 = vunpack.c.l.b16 %v1370
    %v1441 = vunpack.c.l.b16 %v1371
    %v1442 = vunpack.c.l.b16 %v1372
    %v1443 = vunpack.c.l.b16 %v1373
    %v1444 = vunpack.c.l.b16 %v1374
    %v1445 = vunpack.c.l.b16 %v1375
    %v1446 = vunpack.c.l.b16 %v1376
    %v1447 = vunpack.c.l.b16 %v1377
    %v1448 = vunpack.c.l.b16 %v1378
    %v1449 = vunpack.c.l.b16 %v1379
    %v1450 = vunpack.c.l.b16 %v1380
    %v1451 = vunpack.c.l.b16 %v1381
    %v1452 = vunpack.c.l.b16 %v1382
    %v1453 = vpack.c.b16 %v1422, %v1421
    %v1454 = vpack.c.b16 %v1424, %v1423
    %v1455 = vpack.c.b16 %v1426, %v1425
    %v1456 = vpack.c.b16 %v1428, %v1427
    %v1457 = vpack.c.b16 %v1430, %v1429
    %v1458 = vpack.c.b16 %v1432, %v1431
    %v1459 = vpack.c.b16 %v1434, %v1433
    %v1460 = vpack.c.b16 %v1436, %v1435
    %v1461 = vpack.c.b16 %v1438, %v1437
    %v1462 = vpack.c.b16 %v1440, %v1439
    %v1463 = vpack.c.b16 %v1442, %v1441
    %v1464 = vpack.c.b16 %v1444, %v1443
    %v1465 = vpack.c.b16 %v1446, %v1445
    %v1466 = vpack.c.b16 %v1448, %v1447
    %v1467 = vpack.c.b16 %v1450, %v1449
    %v1468 = vpack.c.b16 %v1452, %v1451
    %1485 = vmatpush.bf16.msra.mxu0 %v1460
    %1486 = vmatpush.bf16.msra.mxu0 %v1459
    %1487 = vmatpush.bf16.msra.mxu0 %v1458
    %1488 = vmatpush.bf16.msra.mxu0 %v1457
    %1489 = vmatpush.bf16.msra.mxu0 %v1456
    %1490 = vmatpush.bf16.msra.mxu0 %v1455
    %1491 = vmatpush.bf16.msra.mxu0 %v1454
    %1492 = vmatpush.bf16.msra.mxu0 %v1453
    %1493 = vmatmul.bf16.gmra.mxu0 %v1384
    %v1494 = vpop.f32.mrf.mxu0
    %v1495 = vadd.f32 %v1387, %v1494
    %v1496 = vpop.f32.mrf.mxu0
    %1497 = vdwg.mxu0
    %1498 = vmatpush.bf16.msra.mxu0 %v1468
    %1499 = vmatpush.bf16.msra.mxu0 %v1467
    %1500 = vmatpush.bf16.msra.mxu0 %v1466
    %1501 = vmatpush.bf16.msra.mxu0 %v1465
    %1502 = vmatpush.bf16.msra.mxu0 %v1464
    %1503 = vmatpush.bf16.msra.mxu0 %v1463
    %1504 = vmatpush.bf16.msra.mxu0 %v1462
    %1505 = vmatpush.bf16.msra.mxu0 %v1461
    %1506 = vmatmul.bf16.gmra.mxu0 %v1385
    %v1507 = vpop.f32.mrf.mxu0
    %v1508 = vadd.f32 %v1495, %v1507
    %v1509 = vpop.f32.mrf.mxu0
    %1510 = vdwg.mxu0
    %1511 = vst [vmem:[%s87] sm:$0xff] %v1508
    %v1512 = vld [vmem:[%s3] sm:$0xff]
    %v1513 = vmul.f32 %v1508, 0.5
    %v1514 = vmul.f32 %v1513, 1.442695
    %v1515 = vpow.pop %v1514
    %1517 = vrot.lane.b32.xlu0 %v1515, 64
    %v1518 = vpop.permute.xlu0 %1517
    %v1520 = vmul.f32 %v1512, %v1518
    %v1521 = vadd.f32 %v1508, %v1520
    %v1522 = vld [vmem:[%s5] sm:$0xff]
    %1523 = vrot.lane.b32.xlu0 %v1515, 32
    %v1524 = vpop.permute.xlu0 %1523
    %v1526 = vmul.f32 %v1522, %v1524
    %1528 = vrot.lane.b32.xlu0 %v1526, 32
    %v1529 = vpop.permute.xlu0 %1528
    %v1531 = vadd.f32 %v1508, %v1529
    %vm1532 = vcmask 261120
    %v1533 = vsel %vm1532, %v1521, %v1531
    %v1534 = vld [vmem:[%s23] sm:$0xff]
    %v1535 = vld [vmem:[%s23 + $0x8] sm:$0xff]
    %v1536 = vld [vmem:[%s23 + $0x10] sm:$0xff]
    %v1537 = vld [vmem:[%s23 + $0x18] sm:$0xff]
    %v1538 = vld [vmem:[%s23 + $0x20] sm:$0xff]
    %v1539 = vld [vmem:[%s23 + $0x28] sm:$0xff]
    %v1540 = vld [vmem:[%s23 + $0x30] sm:$0xff]
    %v1541 = vld [vmem:[%s23 + $0x38] sm:$0xff]
    %v1542 = vld [vmem:[%s25] sm:$0x3]
    %v1543 = vpack.c.bf16 %v1533, %v1533
    %v1545 = vperm.slane %v1542, 0
    %v1546 = vperm.slane %v1542, 1
    %v1557 = vunpack.c.l.b16 %v1534
    %v1558 = vunpack.c.h.b16 %v1534
    %v1559 = vunpack.c.l.b16 %v1535
    %v1560 = vunpack.c.h.b16 %v1535
    %v1561 = vunpack.c.l.b16 %v1536
    %v1562 = vunpack.c.h.b16 %v1536
    %v1563 = vunpack.c.l.b16 %v1537
    %v1564 = vunpack.c.h.b16 %v1537
    %v1565 = vunpack.c.l.b16 %v1538
    %v1566 = vunpack.c.h.b16 %v1538
    %v1567 = vunpack.c.l.b16 %v1539
    %v1568 = vunpack.c.h.b16 %v1539
    %v1569 = vunpack.c.l.b16 %v1540
    %v1570 = vunpack.c.h.b16 %v1540
    %v1571 = vunpack.c.l.b16 %v1541
    %v1572 = vunpack.c.h.b16 %v1541
    %v1573 = vpack.c.b16 %v1559, %v1557
    %v1574 = vpack.c.b16 %v1560, %v1558
    %v1575 = vpack.c.b16 %v1563, %v1561
    %v1576 = vpack.c.b16 %v1564, %v1562
    %v1577 = vpack.c.b16 %v1567, %v1565
    %v1578 = vpack.c.b16 %v1568, %v1566
    %v1579 = vpack.c.b16 %v1571, %v1569
    %v1580 = vpack.c.b16 %v1572, %v1570
    %vm1589 = vcmask 523264
    %v1591 = vsel %vm1589, %v1543, 0
    %1593 = vmatpush.bf16.msra.mxu0 0
    %1594 = vmatpush.bf16.msra.mxu0 0
    %1595 = vmatpush.bf16.msra.mxu0 0
    %1596 = vmatpush.bf16.msra.mxu0 0
    %1597 = vmatpush.bf16.msra.mxu0 %v1579
    %1598 = vmatpush.bf16.msra.mxu0 %v1577
    %1599 = vmatpush.bf16.msra.mxu0 %v1575
    %1600 = vmatpush.bf16.msra.mxu0 %v1573
    %1601 = vmatmul.bf16.gmra.mxu0 %v1591
    %v1602 = vpop.f32.mrf.mxu0
    %v1603 = vadd.f32 %v1545, %v1602
    %v1604 = vpop.f32.mrf.mxu0
    %1605 = vdwg.mxu0
    %1606 = vmatpush.bf16.msra.mxu0 0
    %1607 = vmatpush.bf16.msra.mxu0 0
    %1608 = vmatpush.bf16.msra.mxu0 0
    %1609 = vmatpush.bf16.msra.mxu0 0
    %1610 = vmatpush.bf16.msra.mxu0 %v1580
    %1611 = vmatpush.bf16.msra.mxu0 %v1578
    %1612 = vmatpush.bf16.msra.mxu0 %v1576
    %1613 = vmatpush.bf16.msra.mxu0 %v1574
    %1614 = vmatmul.bf16.gmra.mxu0 %v1591
    %v1615 = vpop.f32.mrf.mxu0
    %v1616 = vadd.f32 %v1546, %v1615
    %v1617 = vpop.f32.mrf.mxu0
    %1618 = vdwg.mxu0
    %v1619 = vmul.f32 %v1603, 0.01
    %v1620 = vmul.f32 %v1616, 0.01
    %v1621 = vmax.f32 %v1603, %v1619
    %v1622 = vmax.f32 %v1616, %v1620
    %v1623 = vld [vmem:[#allocation7] sm:$0xff]
    %v1624 = vld [vmem:[#allocation7 + $0x8] sm:$0xff]
    %v1625 = vld [vmem:[#allocation7 + $0x10] sm:$0xff]
    %v1626 = vld [vmem:[#allocation7 + $0x18] sm:$0xff]
    %v1627 = vld [vmem:[#allocation7 + $0x20] sm:$0xff]
    %v1628 = vld [vmem:[#allocation7 + $0x28] sm:$0xff]
    %v1629 = vld [vmem:[#allocation7 + $0x30] sm:$0xff]
    %v1630 = vld [vmem:[#allocation7 + $0x38] sm:$0xff]
    %v1631 = vld [vmem:[#allocation7 + $0x40] sm:$0xff]
    %v1632 = vld [vmem:[#allocation7 + $0x48] sm:$0xff]
    %v1633 = vld [vmem:[#allocation7 + $0x50] sm:$0xff]
    %v1634 = vld [vmem:[#allocation7 + $0x58] sm:$0xff]
    %v1635 = vld [vmem:[#allocation7 + $0x60] sm:$0xff]
    %v1636 = vld [vmem:[#allocation7 + $0x68] sm:$0xff]
    %v1637 = vld [vmem:[#allocation7 + $0x70] sm:$0xff]
    %v1638 = vld [vmem:[#allocation7 + $0x78] sm:$0xff]
    %v1639 = vld [vmem:[#allocation7 + $0x80] sm:$0xff]
    %v1640 = vld [vmem:[#allocation7 + $0x88] sm:$0xff]
    %v1641 = vld [vmem:[#allocation7 + $0x90] sm:$0xff]
    %v1642 = vld [vmem:[#allocation7 + $0x98] sm:$0xff]
    %v1643 = vld [vmem:[#allocation7 + $0xa0] sm:$0xff]
    %v1644 = vld [vmem:[#allocation7 + $0xa8] sm:$0xff]
    %v1645 = vld [vmem:[#allocation7 + $0xb0] sm:$0xff]
    %v1646 = vld [vmem:[#allocation7 + $0xb8] sm:$0xff]
    %v1647 = vld [vmem:[#allocation7 + $0xc0] sm:$0xff]
    %v1648 = vld [vmem:[#allocation7 + $0xc8] sm:$0xff]
    %v1649 = vld [vmem:[#allocation7 + $0xd0] sm:$0xff]
    %v1650 = vld [vmem:[#allocation7 + $0xd8] sm:$0xff]
    %v1651 = vld [vmem:[#allocation7 + $0xe0] sm:$0xff]
    %v1652 = vld [vmem:[#allocation7 + $0xe8] sm:$0xff]
    %v1653 = vld [vmem:[#allocation7 + $0xf0] sm:$0xff]
    %v1654 = vld [vmem:[#allocation7 + $0xf8] sm:$0xff]
    %v1655 = vld [vmem:[%s29] sm:$0x3]
    %v1656 = vpack.c.bf16 %v1621, %v1621
    %v1657 = vpack.c.bf16 %v1622, %v1622
    %v1659 = vperm.slane %v1655, 0
    %v1660 = vperm.slane %v1655, 1
    %v1695 = vunpack.c.l.b16 %v1623
    %v1696 = vunpack.c.h.b16 %v1623
    %v1697 = vunpack.c.l.b16 %v1624
    %v1698 = vunpack.c.h.b16 %v1624
    %v1699 = vunpack.c.l.b16 %v1625
    %v1700 = vunpack.c.h.b16 %v1625
    %v1701 = vunpack.c.l.b16 %v1626
    %v1702 = vunpack.c.h.b16 %v1626
    %v1703 = vunpack.c.l.b16 %v1627
    %v1704 = vunpack.c.h.b16 %v1627
    %v1705 = vunpack.c.l.b16 %v1628
    %v1706 = vunpack.c.h.b16 %v1628
    %v1707 = vunpack.c.l.b16 %v1629
    %v1708 = vunpack.c.h.b16 %v1629
    %v1709 = vunpack.c.l.b16 %v1630
    %v1710 = vunpack.c.h.b16 %v1630
    %v1711 = vunpack.c.l.b16 %v1631
    %v1712 = vunpack.c.h.b16 %v1631
    %v1713 = vunpack.c.l.b16 %v1632
    %v1714 = vunpack.c.h.b16 %v1632
    %v1715 = vunpack.c.l.b16 %v1633
    %v1716 = vunpack.c.h.b16 %v1633
    %v1717 = vunpack.c.l.b16 %v1634
    %v1718 = vunpack.c.h.b16 %v1634
    %v1719 = vunpack.c.l.b16 %v1635
    %v1720 = vunpack.c.h.b16 %v1635
    %v1721 = vunpack.c.l.b16 %v1636
    %v1722 = vunpack.c.h.b16 %v1636
    %v1723 = vunpack.c.l.b16 %v1637
    %v1724 = vunpack.c.h.b16 %v1637
    %v1725 = vunpack.c.l.b16 %v1638
    %v1726 = vunpack.c.h.b16 %v1638
    %v1727 = vunpack.c.l.b16 %v1639
    %v1728 = vunpack.c.h.b16 %v1639
    %v1729 = vunpack.c.l.b16 %v1640
    %v1730 = vunpack.c.h.b16 %v1640
    %v1731 = vunpack.c.l.b16 %v1641
    %v1732 = vunpack.c.h.b16 %v1641
    %v1733 = vunpack.c.l.b16 %v1642
    %v1734 = vunpack.c.h.b16 %v1642
    %v1735 = vunpack.c.l.b16 %v1643
    %v1736 = vunpack.c.h.b16 %v1643
    %v1737 = vunpack.c.l.b16 %v1644
    %v1738 = vunpack.c.h.b16 %v1644
    %v1739 = vunpack.c.l.b16 %v1645
    %v1740 = vunpack.c.h.b16 %v1645
    %v1741 = vunpack.c.l.b16 %v1646
    %v1742 = vunpack.c.h.b16 %v1646
    %v1743 = vunpack.c.l.b16 %v1647
    %v1744 = vunpack.c.h.b16 %v1647
    %v1745 = vunpack.c.l.b16 %v1648
    %v1746 = vunpack.c.h.b16 %v1648
    %v1747 = vunpack.c.l.b16 %v1649
    %v1748 = vunpack.c.h.b16 %v1649
    %v1749 = vunpack.c.l.b16 %v1650
    %v1750 = vunpack.c.h.b16 %v1650
    %v1751 = vunpack.c.l.b16 %v1651
    %v1752 = vunpack.c.h.b16 %v1651
    %v1753 = vunpack.c.l.b16 %v1652
    %v1754 = vunpack.c.h.b16 %v1652
    %v1755 = vunpack.c.l.b16 %v1653
    %v1756 = vunpack.c.h.b16 %v1653
    %v1757 = vunpack.c.l.b16 %v1654
    %v1758 = vunpack.c.h.b16 %v1654
    %v1759 = vpack.c.b16 %v1697, %v1695
    %v1760 = vpack.c.b16 %v1698, %v1696
    %v1761 = vpack.c.b16 %v1701, %v1699
    %v1762 = vpack.c.b16 %v1702, %v1700
    %v1763 = vpack.c.b16 %v1705, %v1703
    %v1764 = vpack.c.b16 %v1706, %v1704
    %v1765 = vpack.c.b16 %v1709, %v1707
    %v1766 = vpack.c.b16 %v1710, %v1708
    %v1767 = vpack.c.b16 %v1713, %v1711
    %v1768 = vpack.c.b16 %v1714, %v1712
    %v1769 = vpack.c.b16 %v1717, %v1715
    %v1770 = vpack.c.b16 %v1718, %v1716
    %v1771 = vpack.c.b16 %v1721, %v1719
    %v1772 = vpack.c.b16 %v1722, %v1720
    %v1773 = vpack.c.b16 %v1725, %v1723
    %v1774 = vpack.c.b16 %v1726, %v1724
    %v1775 = vpack.c.b16 %v1729, %v1727
    %v1776 = vpack.c.b16 %v1730, %v1728
    %v1777 = vpack.c.b16 %v1733, %v1731
    %v1778 = vpack.c.b16 %v1734, %v1732
    %v1779 = vpack.c.b16 %v1737, %v1735
    %v1780 = vpack.c.b16 %v1738, %v1736
    %v1781 = vpack.c.b16 %v1741, %v1739
    %v1782 = vpack.c.b16 %v1742, %v1740
    %v1783 = vpack.c.b16 %v1745, %v1743
    %v1784 = vpack.c.b16 %v1746, %v1744
    %v1785 = vpack.c.b16 %v1749, %v1747
    %v1786 = vpack.c.b16 %v1750, %v1748
    %v1787 = vpack.c.b16 %v1753, %v1751
    %v1788 = vpack.c.b16 %v1754, %v1752
    %v1789 = vpack.c.b16 %v1757, %v1755
    %v1790 = vpack.c.b16 %v1758, %v1756
    %1823 = vmatpush.bf16.msra.mxu0 %v1773
    %1824 = vmatpush.bf16.msra.mxu0 %v1771
    %1825 = vmatpush.bf16.msra.mxu0 %v1769
    %1826 = vmatpush.bf16.msra.mxu0 %v1767
    %1827 = vmatpush.bf16.msra.mxu0 %v1765
    %1828 = vmatpush.bf16.msra.mxu0 %v1763
    %1829 = vmatpush.bf16.msra.mxu0 %v1761
    %1830 = vmatpush.bf16.msra.mxu0 %v1759
    %1831 = vmatmul.bf16.gmra.mxu0 %v1656
    %v1832 = vpop.f32.mrf.mxu0
    %v1833 = vadd.f32 %v1659, %v1832
    %v1834 = vpop.f32.mrf.mxu0
    %1835 = vdwg.mxu0
    %1836 = vmatpush.bf16.msra.mxu0 %v1789
    %1837 = vmatpush.bf16.msra.mxu0 %v1787
    %1838 = vmatpush.bf16.msra.mxu0 %v1785
    %1839 = vmatpush.bf16.msra.mxu0 %v1783
    %1840 = vmatpush.bf16.msra.mxu0 %v1781
    %1841 = vmatpush.bf16.msra.mxu0 %v1779
    %1842 = vmatpush.bf16.msra.mxu0 %v1777
    %1843 = vmatpush.bf16.msra.mxu0 %v1775
    %1844 = vmatmul.bf16.gmra.mxu0 %v1657
    %v1845 = vpop.f32.mrf.mxu0
    %v1846 = vadd.f32 %v1833, %v1845
    %v1847 = vpop.f32.mrf.mxu0
    %1848 = vdwg.mxu0
    %1849 = vmatpush.bf16.msra.mxu0 %v1774
    %1850 = vmatpush.bf16.msra.mxu0 %v1772
    %1851 = vmatpush.bf16.msra.mxu0 %v1770
    %1852 = vmatpush.bf16.msra.mxu0 %v1768
    %1853 = vmatpush.bf16.msra.mxu0 %v1766
    %1854 = vmatpush.bf16.msra.mxu0 %v1764
    %1855 = vmatpush.bf16.msra.mxu0 %v1762
    %1856 = vmatpush.bf16.msra.mxu0 %v1760
    %1857 = vmatmul.bf16.gmra.mxu0 %v1656
    %v1858 = vpop.f32.mrf.mxu0
    %v1859 = vadd.f32 %v1660, %v1858
    %v1860 = vpop.f32.mrf.mxu0
    %1861 = vdwg.mxu0
    %1862 = vmatpush.bf16.msra.mxu0 %v1790
    %1863 = vmatpush.bf16.msra.mxu0 %v1788
    %1864 = vmatpush.bf16.msra.mxu0 %v1786
    %1865 = vmatpush.bf16.msra.mxu0 %v1784
    %1866 = vmatpush.bf16.msra.mxu0 %v1782
    %1867 = vmatpush.bf16.msra.mxu0 %v1780
    %1868 = vmatpush.bf16.msra.mxu0 %v1778
    %1869 = vmatpush.bf16.msra.mxu0 %v1776
    %1870 = vmatmul.bf16.gmra.mxu0 %v1657
    %v1871 = vpop.f32.mrf.mxu0
    %v1872 = vadd.f32 %v1859, %v1871
    %v1873 = vpop.f32.mrf.mxu0
    %1874 = vdwg.mxu0
    %v1875 = vmul.f32 %v1846, 0.01
    %v1876 = vmul.f32 %v1872, 0.01
    %v1877 = vmax.f32 %v1846, %v1875
    %v1878 = vmax.f32 %v1872, %v1876
    %v1879 = vld [vmem:[#allocation9] sm:$0xff]
    %v1880 = vld [vmem:[#allocation9 + $0x8] sm:$0xff]
    %v1881 = vld [vmem:[#allocation9 + $0x10] sm:$0xff]
    %v1882 = vld [vmem:[#allocation9 + $0x18] sm:$0xff]
    %v1883 = vld [vmem:[#allocation9 + $0x20] sm:$0xff]
    %v1884 = vld [vmem:[#allocation9 + $0x28] sm:$0xff]
    %v1885 = vld [vmem:[#allocation9 + $0x30] sm:$0xff]
    %v1886 = vld [vmem:[#allocation9 + $0x38] sm:$0xff]
    %v1887 = vld [vmem:[#allocation9 + $0x40] sm:$0xff]
    %v1888 = vld [vmem:[#allocation9 + $0x48] sm:$0xff]
    %v1889 = vld [vmem:[#allocation9 + $0x50] sm:$0xff]
    %v1890 = vld [vmem:[#allocation9 + $0x58] sm:$0xff]
    %v1891 = vld [vmem:[#allocation9 + $0x60] sm:$0xff]
    %v1892 = vld [vmem:[#allocation9 + $0x68] sm:$0xff]
    %v1893 = vld [vmem:[#allocation9 + $0x70] sm:$0xff]
    %v1894 = vld [vmem:[#allocation9 + $0x78] sm:$0xff]
    %v1895 = vld [vmem:[#allocation9 + $0x80] sm:$0xff]
    %v1896 = vld [vmem:[#allocation9 + $0x88] sm:$0xff]
    %v1897 = vld [vmem:[#allocation9 + $0x90] sm:$0xff]
    %v1898 = vld [vmem:[#allocation9 + $0x98] sm:$0xff]
    %v1899 = vld [vmem:[#allocation9 + $0xa0] sm:$0xff]
    %v1900 = vld [vmem:[#allocation9 + $0xa8] sm:$0xff]
    %v1901 = vld [vmem:[#allocation9 + $0xb0] sm:$0xff]
    %v1902 = vld [vmem:[#allocation9 + $0xb8] sm:$0xff]
    %v1903 = vld [vmem:[#allocation9 + $0xc0] sm:$0xff]
    %v1904 = vld [vmem:[#allocation9 + $0xc8] sm:$0xff]
    %v1905 = vld [vmem:[#allocation9 + $0xd0] sm:$0xff]
    %v1906 = vld [vmem:[#allocation9 + $0xd8] sm:$0xff]
    %v1907 = vld [vmem:[#allocation9 + $0xe0] sm:$0xff]
    %v1908 = vld [vmem:[#allocation9 + $0xe8] sm:$0xff]
    %v1909 = vld [vmem:[#allocation9 + $0xf0] sm:$0xff]
    %v1910 = vld [vmem:[#allocation9 + $0xf8] sm:$0xff]
    %v1911 = vld [vmem:[%s33] sm:$0x3]
    %v1912 = vpack.c.bf16 %v1877, %v1877
    %v1913 = vpack.c.bf16 %v1878, %v1878
    %v1915 = vperm.slane %v1911, 0
    %v1916 = vperm.slane %v1911, 1
    %v1951 = vunpack.c.l.b16 %v1879
    %v1952 = vunpack.c.h.b16 %v1879
    %v1953 = vunpack.c.l.b16 %v1880
    %v1954 = vunpack.c.h.b16 %v1880
    %v1955 = vunpack.c.l.b16 %v1881
    %v1956 = vunpack.c.h.b16 %v1881
    %v1957 = vunpack.c.l.b16 %v1882
    %v1958 = vunpack.c.h.b16 %v1882
    %v1959 = vunpack.c.l.b16 %v1883
    %v1960 = vunpack.c.h.b16 %v1883
    %v1961 = vunpack.c.l.b16 %v1884
    %v1962 = vunpack.c.h.b16 %v1884
    %v1963 = vunpack.c.l.b16 %v1885
    %v1964 = vunpack.c.h.b16 %v1885
    %v1965 = vunpack.c.l.b16 %v1886
    %v1966 = vunpack.c.h.b16 %v1886
    %v1967 = vunpack.c.l.b16 %v1887
    %v1968 = vunpack.c.h.b16 %v1887
    %v1969 = vunpack.c.l.b16 %v1888
    %v1970 = vunpack.c.h.b16 %v1888
    %v1971 = vunpack.c.l.b16 %v1889
    %v1972 = vunpack.c.h.b16 %v1889
    %v1973 = vunpack.c.l.b16 %v1890
    %v1974 = vunpack.c.h.b16 %v1890
    %v1975 = vunpack.c.l.b16 %v1891
    %v1976 = vunpack.c.h.b16 %v1891
    %v1977 = vunpack.c.l.b16 %v1892
    %v1978 = vunpack.c.h.b16 %v1892
    %v1979 = vunpack.c.l.b16 %v1893
    %v1980 = vunpack.c.h.b16 %v1893
    %v1981 = vunpack.c.l.b16 %v1894
    %v1982 = vunpack.c.h.b16 %v1894
    %v1983 = vunpack.c.l.b16 %v1895
    %v1984 = vunpack.c.h.b16 %v1895
    %v1985 = vunpack.c.l.b16 %v1896
    %v1986 = vunpack.c.h.b16 %v1896
    %v1987 = vunpack.c.l.b16 %v1897
    %v1988 = vunpack.c.h.b16 %v1897
    %v1989 = vunpack.c.l.b16 %v1898
    %v1990 = vunpack.c.h.b16 %v1898
    %v1991 = vunpack.c.l.b16 %v1899
    %v1992 = vunpack.c.h.b16 %v1899
    %v1993 = vunpack.c.l.b16 %v1900
    %v1994 = vunpack.c.h.b16 %v1900
    %v1995 = vunpack.c.l.b16 %v1901
    %v1996 = vunpack.c.h.b16 %v1901
    %v1997 = vunpack.c.l.b16 %v1902
    %v1998 = vunpack.c.h.b16 %v1902
    %v1999 = vunpack.c.l.b16 %v1903
    %v2000 = vunpack.c.h.b16 %v1903
    %v2001 = vunpack.c.l.b16 %v1904
    %v2002 = vunpack.c.h.b16 %v1904
    %v2003 = vunpack.c.l.b16 %v1905
    %v2004 = vunpack.c.h.b16 %v1905
    %v2005 = vunpack.c.l.b16 %v1906
    %v2006 = vunpack.c.h.b16 %v1906
    %v2007 = vunpack.c.l.b16 %v1907
    %v2008 = vunpack.c.h.b16 %v1907
    %v2009 = vunpack.c.l.b16 %v1908
    %v2010 = vunpack.c.h.b16 %v1908
    %v2011 = vunpack.c.l.b16 %v1909
    %v2012 = vunpack.c.h.b16 %v1909
    %v2013 = vunpack.c.l.b16 %v1910
    %v2014 = vunpack.c.h.b16 %v1910
    %v2015 = vpack.c.b16 %v1953, %v1951
    %v2016 = vpack.c.b16 %v1954, %v1952
    %v2017 = vpack.c.b16 %v1957, %v1955
    %v2018 = vpack.c.b16 %v1958, %v1956
    %v2019 = vpack.c.b16 %v1961, %v1959
    %v2020 = vpack.c.b16 %v1962, %v1960
    %v2021 = vpack.c.b16 %v1965, %v1963
    %v2022 = vpack.c.b16 %v1966, %v1964
    %v2023 = vpack.c.b16 %v1969, %v1967
    %v2024 = vpack.c.b16 %v1970, %v1968
    %v2025 = vpack.c.b16 %v1973, %v1971
    %v2026 = vpack.c.b16 %v1974, %v1972
    %v2027 = vpack.c.b16 %v1977, %v1975
    %v2028 = vpack.c.b16 %v1978, %v1976
    %v2029 = vpack.c.b16 %v1981, %v1979
    %v2030 = vpack.c.b16 %v1982, %v1980
    %v2031 = vpack.c.b16 %v1985, %v1983
    %v2032 = vpack.c.b16 %v1986, %v1984
    %v2033 = vpack.c.b16 %v1989, %v1987
    %v2034 = vpack.c.b16 %v1990, %v1988
    %v2035 = vpack.c.b16 %v1993, %v1991
    %v2036 = vpack.c.b16 %v1994, %v1992
    %v2037 = vpack.c.b16 %v1997, %v1995
    %v2038 = vpack.c.b16 %v1998, %v1996
    %v2039 = vpack.c.b16 %v2001, %v1999
    %v2040 = vpack.c.b16 %v2002, %v2000
    %v2041 = vpack.c.b16 %v2005, %v2003
    %v2042 = vpack.c.b16 %v2006, %v2004
    %v2043 = vpack.c.b16 %v2009, %v2007
    %v2044 = vpack.c.b16 %v2010, %v2008
    %v2045 = vpack.c.b16 %v2013, %v2011
    %v2046 = vpack.c.b16 %v2014, %v2012
    %2079 = vmatpush.bf16.msra.mxu0 %v2029
    %2080 = vmatpush.bf16.msra.mxu0 %v2027
    %2081 = vmatpush.bf16.msra.mxu0 %v2025
    %2082 = vmatpush.bf16.msra.mxu0 %v2023
    %2083 = vmatpush.bf16.msra.mxu0 %v2021
    %2084 = vmatpush.bf16.msra.mxu0 %v2019
    %2085 = vmatpush.bf16.msra.mxu0 %v2017
    %2086 = vmatpush.bf16.msra.mxu0 %v2015
    %2087 = vmatmul.bf16.gmra.mxu0 %v1912
    %v2088 = vpop.f32.mrf.mxu0
    %v2089 = vadd.f32 %v1915, %v2088
    %v2090 = vpop.f32.mrf.mxu0
    %2091 = vdwg.mxu0
    %2092 = vmatpush.bf16.msra.mxu0 %v2045
    %2093 = vmatpush.bf16.msra.mxu0 %v2043
    %2094 = vmatpush.bf16.msra.mxu0 %v2041
    %2095 = vmatpush.bf16.msra.mxu0 %v2039
    %2096 = vmatpush.bf16.msra.mxu0 %v2037
    %2097 = vmatpush.bf16.msra.mxu0 %v2035
    %2098 = vmatpush.bf16.msra.mxu0 %v2033
    %2099 = vmatpush.bf16.msra.mxu0 %v2031
    %2100 = vmatmul.bf16.gmra.mxu0 %v1913
    %v2101 = vpop.f32.mrf.mxu0
    %v2102 = vadd.f32 %v2089, %v2101
    %v2103 = vpop.f32.mrf.mxu0
    %2104 = vdwg.mxu0
    %2105 = vmatpush.bf16.msra.mxu0 %v2030
    %2106 = vmatpush.bf16.msra.mxu0 %v2028
    %2107 = vmatpush.bf16.msra.mxu0 %v2026
    %2108 = vmatpush.bf16.msra.mxu0 %v2024
    %2109 = vmatpush.bf16.msra.mxu0 %v2022
    %2110 = vmatpush.bf16.msra.mxu0 %v2020
    %2111 = vmatpush.bf16.msra.mxu0 %v2018
    %2112 = vmatpush.bf16.msra.mxu0 %v2016
    %2113 = vmatmul.bf16.gmra.mxu0 %v1912
    %v2114 = vpop.f32.mrf.mxu0
    %v2115 = vadd.f32 %v1916, %v2114
    %v2116 = vpop.f32.mrf.mxu0
    %2117 = vdwg.mxu0
    %2118 = vmatpush.bf16.msra.mxu0 %v2046
    %2119 = vmatpush.bf16.msra.mxu0 %v2044
    %2120 = vmatpush.bf16.msra.mxu0 %v2042
    %2121 = vmatpush.bf16.msra.mxu0 %v2040
    %2122 = vmatpush.bf16.msra.mxu0 %v2038
    %2123 = vmatpush.bf16.msra.mxu0 %v2036
    %2124 = vmatpush.bf16.msra.mxu0 %v2034
    %2125 = vmatpush.bf16.msra.mxu0 %v2032
    %2126 = vmatmul.bf16.gmra.mxu0 %v1913
    %v2127 = vpop.f32.mrf.mxu0
    %v2128 = vadd.f32 %v2115, %v2127
    %v2129 = vpop.f32.mrf.mxu0
    %2130 = vdwg.mxu0
    %v2131 = vmul.f32 %v2102, 0.01
    %v2132 = vmul.f32 %v2128, 0.01
    %v2133 = vmax.f32 %v2102, %v2131
    %v2134 = vmax.f32 %v2128, %v2132
    %v2135 = vld [vmem:[%s35] sm:$0xf]
    %v2136 = vld [vmem:[%s35 + $0x4] sm:$0xf]
    %v2137 = vld [vmem:[%s35 + $0x8] sm:$0xf]
    %v2138 = vld [vmem:[%s35 + $0xc] sm:$0xf]
    %v2139 = vld [vmem:[%s35 + $0x10] sm:$0xf]
    %v2140 = vld [vmem:[%s35 + $0x14] sm:$0xf]
    %v2141 = vld [vmem:[%s35 + $0x18] sm:$0xf]
    %v2142 = vld [vmem:[%s35 + $0x1c] sm:$0xf]
    %v2143 = vld [vmem:[%s35 + $0x20] sm:$0xf]
    %v2144 = vld [vmem:[%s35 + $0x24] sm:$0xf]
    %v2145 = vld [vmem:[%s35 + $0x28] sm:$0xf]
    %v2146 = vld [vmem:[%s35 + $0x2c] sm:$0xf]
    %v2147 = vld [vmem:[%s35 + $0x30] sm:$0xf]
    %v2148 = vld [vmem:[%s35 + $0x34] sm:$0xf]
    %v2149 = vld [vmem:[%s35 + $0x38] sm:$0xf]
    %v2150 = vld [vmem:[%s35 + $0x3c] sm:$0xf]
    %v2151 = vld [vmem:[%s35 + $0x40] sm:$0xf]
    %v2152 = vld [vmem:[%s35 + $0x44] sm:$0xf]
    %v2153 = vld [vmem:[%s35 + $0x48] sm:$0xf]
    %v2154 = vld [vmem:[%s35 + $0x4c] sm:$0xf]
    %v2155 = vld [vmem:[%s35 + $0x50] sm:$0xf]
    %v2156 = vld [vmem:[%s35 + $0x54] sm:$0xf]
    %v2157 = vld [vmem:[%s35 + $0x58] sm:$0xf]
    %v2158 = vld [vmem:[%s35 + $0x5c] sm:$0xf]
    %v2159 = vld [vmem:[%s35 + $0x60] sm:$0xf]
    %v2160 = vld [vmem:[%s35 + $0x64] sm:$0xf]
    %v2161 = vld [vmem:[%s35 + $0x68] sm:$0xf]
    %v2162 = vld [vmem:[%s35 + $0x6c] sm:$0xf]
    %v2163 = vld [vmem:[%s35 + $0x70] sm:$0xf]
    %v2164 = vld [vmem:[%s35 + $0x74] sm:$0xf]
    %v2165 = vld [vmem:[%s35 + $0x78] sm:$0xf]
    %v2166 = vld [vmem:[%s35 + $0x7c] sm:$0xf]
    %v2167 = vld [vmem:[#allocation10] sm:$0x1]
    %v2168 = vpack.c.bf16 %v2133, %v2133
    %v2169 = vpack.c.bf16 %v2134, %v2134
    %v2171 = vperm.slane %v2167, 0
    %v2205 = vunpack.c.l.b16 %v2135
    %v2206 = vunpack.c.l.b16 %v2136
    %v2207 = vunpack.c.l.b16 %v2137
    %v2208 = vunpack.c.l.b16 %v2138
    %v2209 = vunpack.c.l.b16 %v2139
    %v2210 = vunpack.c.l.b16 %v2140
    %v2211 = vunpack.c.l.b16 %v2141
    %v2212 = vunpack.c.l.b16 %v2142
    %v2213 = vunpack.c.l.b16 %v2143
    %v2214 = vunpack.c.l.b16 %v2144
    %v2215 = vunpack.c.l.b16 %v2145
    %v2216 = vunpack.c.l.b16 %v2146
    %v2217 = vunpack.c.l.b16 %v2147
    %v2218 = vunpack.c.l.b16 %v2148
    %v2219 = vunpack.c.l.b16 %v2149
    %v2220 = vunpack.c.l.b16 %v2150
    %v2221 = vunpack.c.l.b16 %v2151
    %v2222 = vunpack.c.l.b16 %v2152
    %v2223 = vunpack.c.l.b16 %v2153
    %v2224 = vunpack.c.l.b16 %v2154
    %v2225 = vunpack.c.l.b16 %v2155
    %v2226 = vunpack.c.l.b16 %v2156
    %v2227 = vunpack.c.l.b16 %v2157
    %v2228 = vunpack.c.l.b16 %v2158
    %v2229 = vunpack.c.l.b16 %v2159
    %v2230 = vunpack.c.l.b16 %v2160
    %v2231 = vunpack.c.l.b16 %v2161
    %v2232 = vunpack.c.l.b16 %v2162
    %v2233 = vunpack.c.l.b16 %v2163
    %v2234 = vunpack.c.l.b16 %v2164
    %v2235 = vunpack.c.l.b16 %v2165
    %v2236 = vunpack.c.l.b16 %v2166
    %v2237 = vpack.c.b16 %v2206, %v2205
    %v2238 = vpack.c.b16 %v2208, %v2207
    %v2239 = vpack.c.b16 %v2210, %v2209
    %v2240 = vpack.c.b16 %v2212, %v2211
    %v2241 = vpack.c.b16 %v2214, %v2213
    %v2242 = vpack.c.b16 %v2216, %v2215
    %v2243 = vpack.c.b16 %v2218, %v2217
    %v2244 = vpack.c.b16 %v2220, %v2219
    %v2245 = vpack.c.b16 %v2222, %v2221
    %v2246 = vpack.c.b16 %v2224, %v2223
    %v2247 = vpack.c.b16 %v2226, %v2225
    %v2248 = vpack.c.b16 %v2228, %v2227
    %v2249 = vpack.c.b16 %v2230, %v2229
    %v2250 = vpack.c.b16 %v2232, %v2231
    %v2251 = vpack.c.b16 %v2234, %v2233
    %v2252 = vpack.c.b16 %v2236, %v2235
    %2269 = vmatpush.bf16.msra.mxu0 %v2244
    %2270 = vmatpush.bf16.msra.mxu0 %v2243
    %2271 = vmatpush.bf16.msra.mxu0 %v2242
    %2272 = vmatpush.bf16.msra.mxu0 %v2241
    %2273 = vmatpush.bf16.msra.mxu0 %v2240
    %2274 = vmatpush.bf16.msra.mxu0 %v2239
    %2275 = vmatpush.bf16.msra.mxu0 %v2238
    %2276 = vmatpush.bf16.msra.mxu0 %v2237
    %2277 = vmatmul.bf16.gmra.mxu0 %v2168
    %v2278 = vpop.f32.mrf.mxu0
    %v2279 = vadd.f32 %v2171, %v2278
    %v2280 = vpop.f32.mrf.mxu0
    %2281 = vdwg.mxu0
    %2282 = vmatpush.bf16.msra.mxu0 %v2252
    %2283 = vmatpush.bf16.msra.mxu0 %v2251
    %2284 = vmatpush.bf16.msra.mxu0 %v2250
    %2285 = vmatpush.bf16.msra.mxu0 %v2249
    %2286 = vmatpush.bf16.msra.mxu0 %v2248
    %2287 = vmatpush.bf16.msra.mxu0 %v2247
    %2288 = vmatpush.bf16.msra.mxu0 %v2246
    %2289 = vmatpush.bf16.msra.mxu0 %v2245
    %2290 = vmatmul.bf16.gmra.mxu0 %v2169
    %v2291 = vpop.f32.mrf.mxu0
    %v2292 = vadd.f32 %v2279, %v2291
    %v2293 = vpop.f32.mrf.mxu0
    %2294 = vdwg.mxu0
    %v2295 = vld [vmem:[#allocation12] sm:$0xff]
    %v2296 = vld [vmem:[#allocation12 + $0x8] sm:$0xff]
    %v2297 = vld [vmem:[#allocation12 + $0x10] sm:$0xff]
    %v2298 = vld [vmem:[#allocation12 + $0x18] sm:$0xff]
    %v2299 = vld [vmem:[#allocation12 + $0x20] sm:$0xff]
    %v2300 = vld [vmem:[#allocation12 + $0x28] sm:$0xff]
    %v2301 = vld [vmem:[#allocation12 + $0x30] sm:$0xff]
    %v2302 = vld [vmem:[#allocation12 + $0x38] sm:$0xff]
    %v2303 = vld [vmem:[%s41] sm:$0x3]
    %v2305 = vperm.slane %v2303, 0
    %v2306 = vperm.slane %v2303, 1
    %v2317 = vunpack.c.l.b16 %v2295
    %v2318 = vunpack.c.h.b16 %v2295
    %v2319 = vunpack.c.l.b16 %v2296
    %v2320 = vunpack.c.h.b16 %v2296
    %v2321 = vunpack.c.l.b16 %v2297
    %v2322 = vunpack.c.h.b16 %v2297
    %v2323 = vunpack.c.l.b16 %v2298
    %v2324 = vunpack.c.h.b16 %v2298
    %v2325 = vunpack.c.l.b16 %v2299
    %v2326 = vunpack.c.h.b16 %v2299
    %v2327 = vunpack.c.l.b16 %v2300
    %v2328 = vunpack.c.h.b16 %v2300
    %v2329 = vunpack.c.l.b16 %v2301
    %v2330 = vunpack.c.h.b16 %v2301
    %v2331 = vunpack.c.l.b16 %v2302
    %v2332 = vunpack.c.h.b16 %v2302
    %v2333 = vpack.c.b16 %v2319, %v2317
    %v2334 = vpack.c.b16 %v2320, %v2318
    %v2335 = vpack.c.b16 %v2323, %v2321
    %v2336 = vpack.c.b16 %v2324, %v2322
    %v2337 = vpack.c.b16 %v2327, %v2325
    %v2338 = vpack.c.b16 %v2328, %v2326
    %v2339 = vpack.c.b16 %v2331, %v2329
    %v2340 = vpack.c.b16 %v2332, %v2330
    %2349 = vmatpush.bf16.msra.mxu0 0
    %2350 = vmatpush.bf16.msra.mxu0 0
    %2351 = vmatpush.bf16.msra.mxu0 0
    %2352 = vmatpush.bf16.msra.mxu0 0
    %2353 = vmatpush.bf16.msra.mxu0 %v2339
    %2354 = vmatpush.bf16.msra.mxu0 %v2337
    %2355 = vmatpush.bf16.msra.mxu0 %v2335
    %2356 = vmatpush.bf16.msra.mxu0 %v2333
    %2357 = vmatmul.bf16.gmra.mxu0 %v1591
    %v2358 = vpop.f32.mrf.mxu0
    %v2359 = vadd.f32 %v2305, %v2358
    %v2360 = vpop.f32.mrf.mxu0
    %2361 = vdwg.mxu0
    %2362 = vmatpush.bf16.msra.mxu0 0
    %2363 = vmatpush.bf16.msra.mxu0 0
    %2364 = vmatpush.bf16.msra.mxu0 0
    %2365 = vmatpush.bf16.msra.mxu0 0
    %2366 = vmatpush.bf16.msra.mxu0 %v2340
    %2367 = vmatpush.bf16.msra.mxu0 %v2338
    %2368 = vmatpush.bf16.msra.mxu0 %v2336
    %2369 = vmatpush.bf16.msra.mxu0 %v2334
    %2370 = vmatmul.bf16.gmra.mxu0 %v1591
    %v2371 = vpop.f32.mrf.mxu0
    %v2372 = vadd.f32 %v2306, %v2371
    %v2373 = vpop.f32.mrf.mxu0
    %2374 = vdwg.mxu0
    %v2375 = vmul.f32 %v2359, 0.01
    %v2376 = vmul.f32 %v2372, 0.01
    %v2377 = vmax.f32 %v2359, %v2375
    %v2378 = vmax.f32 %v2372, %v2376
    %v2379 = vld [vmem:[#allocation13] sm:$0xff]
    %v2380 = vld [vmem:[#allocation13 + $0x8] sm:$0xff]
    %v2381 = vld [vmem:[#allocation13 + $0x10] sm:$0xff]
    %v2382 = vld [vmem:[#allocation13 + $0x18] sm:$0xff]
    %v2383 = vld [vmem:[#allocation13 + $0x20] sm:$0xff]
    %v2384 = vld [vmem:[#allocation13 + $0x28] sm:$0xff]
    %v2385 = vld [vmem:[#allocation13 + $0x30] sm:$0xff]
    %v2386 = vld [vmem:[#allocation13 + $0x38] sm:$0xff]
    %v2387 = vld [vmem:[#allocation13 + $0x40] sm:$0xff]
    %v2388 = vld [vmem:[#allocation13 + $0x48] sm:$0xff]
    %v2389 = vld [vmem:[#allocation13 + $0x50] sm:$0xff]
    %v2390 = vld [vmem:[#allocation13 + $0x58] sm:$0xff]
    %v2391 = vld [vmem:[#allocation13 + $0x60] sm:$0xff]
    %v2392 = vld [vmem:[#allocation13 + $0x68] sm:$0xff]
    %v2393 = vld [vmem:[#allocation13 + $0x70] sm:$0xff]
    %v2394 = vld [vmem:[#allocation13 + $0x78] sm:$0xff]
    %v2395 = vld [vmem:[#allocation13 + $0x80] sm:$0xff]
    %v2396 = vld [vmem:[#allocation13 + $0x88] sm:$0xff]
    %v2397 = vld [vmem:[#allocation13 + $0x90] sm:$0xff]
    %v2398 = vld [vmem:[#allocation13 + $0x98] sm:$0xff]
    %v2399 = vld [vmem:[#allocation13 + $0xa0] sm:$0xff]
    %v2400 = vld [vmem:[#allocation13 + $0xa8] sm:$0xff]
    %v2401 = vld [vmem:[#allocation13 + $0xb0] sm:$0xff]
    %v2402 = vld [vmem:[#allocation13 + $0xb8] sm:$0xff]
    %v2403 = vld [vmem:[#allocation13 + $0xc0] sm:$0xff]
    %v2404 = vld [vmem:[#allocation13 + $0xc8] sm:$0xff]
    %v2405 = vld [vmem:[#allocation13 + $0xd0] sm:$0xff]
    %v2406 = vld [vmem:[#allocation13 + $0xd8] sm:$0xff]
    %v2407 = vld [vmem:[#allocation13 + $0xe0] sm:$0xff]
    %v2408 = vld [vmem:[#allocation13 + $0xe8] sm:$0xff]
    %v2409 = vld [vmem:[#allocation13 + $0xf0] sm:$0xff]
    %v2410 = vld [vmem:[#allocation13 + $0xf8] sm:$0xff]
    %v2411 = vld [vmem:[#allocation15] sm:$0x3]
    %v2412 = vpack.c.bf16 %v2377, %v2377
    %v2413 = vpack.c.bf16 %v2378, %v2378
    %v2415 = vperm.slane %v2411, 0
    %v2416 = vperm.slane %v2411, 1
    %v2451 = vunpack.c.l.b16 %v2379
    %v2452 = vunpack.c.h.b16 %v2379
    %v2453 = vunpack.c.l.b16 %v2380
    %v2454 = vunpack.c.h.b16 %v2380
    %v2455 = vunpack.c.l.b16 %v2381
    %v2456 = vunpack.c.h.b16 %v2381
    %v2457 = vunpack.c.l.b16 %v2382
    %v2458 = vunpack.c.h.b16 %v2382
    %v2459 = vunpack.c.l.b16 %v2383
    %v2460 = vunpack.c.h.b16 %v2383
    %v2461 = vunpack.c.l.b16 %v2384
    %v2462 = vunpack.c.h.b16 %v2384
    %v2463 = vunpack.c.l.b16 %v2385
    %v2464 = vunpack.c.h.b16 %v2385
    %v2465 = vunpack.c.l.b16 %v2386
    %v2466 = vunpack.c.h.b16 %v2386
    %v2467 = vunpack.c.l.b16 %v2387
    %v2468 = vunpack.c.h.b16 %v2387
    %v2469 = vunpack.c.l.b16 %v2388
    %v2470 = vunpack.c.h.b16 %v2388
    %v2471 = vunpack.c.l.b16 %v2389
    %v2472 = vunpack.c.h.b16 %v2389
    %v2473 = vunpack.c.l.b16 %v2390
    %v2474 = vunpack.c.h.b16 %v2390
    %v2475 = vunpack.c.l.b16 %v2391
    %v2476 = vunpack.c.h.b16 %v2391
    %v2477 = vunpack.c.l.b16 %v2392
    %v2478 = vunpack.c.h.b16 %v2392
    %v2479 = vunpack.c.l.b16 %v2393
    %v2480 = vunpack.c.h.b16 %v2393
    %v2481 = vunpack.c.l.b16 %v2394
    %v2482 = vunpack.c.h.b16 %v2394
    %v2483 = vunpack.c.l.b16 %v2395
    %v2484 = vunpack.c.h.b16 %v2395
    %v2485 = vunpack.c.l.b16 %v2396
    %v2486 = vunpack.c.h.b16 %v2396
    %v2487 = vunpack.c.l.b16 %v2397
    %v2488 = vunpack.c.h.b16 %v2397
    %v2489 = vunpack.c.l.b16 %v2398
    %v2490 = vunpack.c.h.b16 %v2398
    %v2491 = vunpack.c.l.b16 %v2399
    %v2492 = vunpack.c.h.b16 %v2399
    %v2493 = vunpack.c.l.b16 %v2400
    %v2494 = vunpack.c.h.b16 %v2400
    %v2495 = vunpack.c.l.b16 %v2401
    %v2496 = vunpack.c.h.b16 %v2401
    %v2497 = vunpack.c.l.b16 %v2402
    %v2498 = vunpack.c.h.b16 %v2402
    %v2499 = vunpack.c.l.b16 %v2403
    %v2500 = vunpack.c.h.b16 %v2403
    %v2501 = vunpack.c.l.b16 %v2404
    %v2502 = vunpack.c.h.b16 %v2404
    %v2503 = vunpack.c.l.b16 %v2405
    %v2504 = vunpack.c.h.b16 %v2405
    %v2505 = vunpack.c.l.b16 %v2406
    %v2506 = vunpack.c.h.b16 %v2406
    %v2507 = vunpack.c.l.b16 %v2407
    %v2508 = vunpack.c.h.b16 %v2407
    %v2509 = vunpack.c.l.b16 %v2408
    %v2510 = vunpack.c.h.b16 %v2408
    %v2511 = vunpack.c.l.b16 %v2409
    %v2512 = vunpack.c.h.b16 %v2409
    %v2513 = vunpack.c.l.b16 %v2410
    %v2514 = vunpack.c.h.b16 %v2410
    %v2515 = vpack.c.b16 %v2453, %v2451
    %v2516 = vpack.c.b16 %v2454, %v2452
    %v2517 = vpack.c.b16 %v2457, %v2455
    %v2518 = vpack.c.b16 %v2458, %v2456
    %v2519 = vpack.c.b16 %v2461, %v2459
    %v2520 = vpack.c.b16 %v2462, %v2460
    %v2521 = vpack.c.b16 %v2465, %v2463
    %v2522 = vpack.c.b16 %v2466, %v2464
    %v2523 = vpack.c.b16 %v2469, %v2467
    %v2524 = vpack.c.b16 %v2470, %v2468
    %v2525 = vpack.c.b16 %v2473, %v2471
    %v2526 = vpack.c.b16 %v2474, %v2472
    %v2527 = vpack.c.b16 %v2477, %v2475
    %v2528 = vpack.c.b16 %v2478, %v2476
    %v2529 = vpack.c.b16 %v2481, %v2479
    %v2530 = vpack.c.b16 %v2482, %v2480
    %v2531 = vpack.c.b16 %v2485, %v2483
    %v2532 = vpack.c.b16 %v2486, %v2484
    %v2533 = vpack.c.b16 %v2489, %v2487
    %v2534 = vpack.c.b16 %v2490, %v2488
    %v2535 = vpack.c.b16 %v2493, %v2491
    %v2536 = vpack.c.b16 %v2494, %v2492
    %v2537 = vpack.c.b16 %v2497, %v2495
    %v2538 = vpack.c.b16 %v2498, %v2496
    %v2539 = vpack.c.b16 %v2501, %v2499
    %v2540 = vpack.c.b16 %v2502, %v2500
    %v2541 = vpack.c.b16 %v2505, %v2503
    %v2542 = vpack.c.b16 %v2506, %v2504
    %v2543 = vpack.c.b16 %v2509, %v2507
    %v2544 = vpack.c.b16 %v2510, %v2508
    %v2545 = vpack.c.b16 %v2513, %v2511
    %v2546 = vpack.c.b16 %v2514, %v2512
    %2579 = vmatpush.bf16.msra.mxu0 %v2529
    %2580 = vmatpush.bf16.msra.mxu0 %v2527
    %2581 = vmatpush.bf16.msra.mxu0 %v2525
    %2582 = vmatpush.bf16.msra.mxu0 %v2523
    %2583 = vmatpush.bf16.msra.mxu0 %v2521
    %2584 = vmatpush.bf16.msra.mxu0 %v2519
    %2585 = vmatpush.bf16.msra.mxu0 %v2517
    %2586 = vmatpush.bf16.msra.mxu0 %v2515
    %2587 = vmatmul.bf16.gmra.mxu0 %v2412
    %v2588 = vpop.f32.mrf.mxu0
    %v2589 = vadd.f32 %v2415, %v2588
    %v2590 = vpop.f32.mrf.mxu0
    %2591 = vdwg.mxu0
    %2592 = vmatpush.bf16.msra.mxu0 %v2545
    %2593 = vmatpush.bf16.msra.mxu0 %v2543
    %2594 = vmatpush.bf16.msra.mxu0 %v2541
    %2595 = vmatpush.bf16.msra.mxu0 %v2539
    %2596 = vmatpush.bf16.msra.mxu0 %v2537
    %2597 = vmatpush.bf16.msra.mxu0 %v2535
    %2598 = vmatpush.bf16.msra.mxu0 %v2533
    %2599 = vmatpush.bf16.msra.mxu0 %v2531
    %2600 = vmatmul.bf16.gmra.mxu0 %v2413
    %v2601 = vpop.f32.mrf.mxu0
    %v2602 = vadd.f32 %v2589, %v2601
    %v2603 = vpop.f32.mrf.mxu0
    %2604 = vdwg.mxu0
    %2605 = vmatpush.bf16.msra.mxu0 %v2530
    %2606 = vmatpush.bf16.msra.mxu0 %v2528
    %2607 = vmatpush.bf16.msra.mxu0 %v2526
    %2608 = vmatpush.bf16.msra.mxu0 %v2524
    %2609 = vmatpush.bf16.msra.mxu0 %v2522
    %2610 = vmatpush.bf16.msra.mxu0 %v2520
    %2611 = vmatpush.bf16.msra.mxu0 %v2518
    %2612 = vmatpush.bf16.msra.mxu0 %v2516
    %2613 = vmatmul.bf16.gmra.mxu0 %v2412
    %v2614 = vpop.f32.mrf.mxu0
    %v2615 = vadd.f32 %v2416, %v2614
    %v2616 = vpop.f32.mrf.mxu0
    %2617 = vdwg.mxu0
    %2618 = vmatpush.bf16.msra.mxu0 %v2546
    %2619 = vmatpush.bf16.msra.mxu0 %v2544
    %2620 = vmatpush.bf16.msra.mxu0 %v2542
    %2621 = vmatpush.bf16.msra.mxu0 %v2540
    %2622 = vmatpush.bf16.msra.mxu0 %v2538
    %2623 = vmatpush.bf16.msra.mxu0 %v2536
    %2624 = vmatpush.bf16.msra.mxu0 %v2534
    %2625 = vmatpush.bf16.msra.mxu0 %v2532
    %2626 = vmatmul.bf16.gmra.mxu0 %v2413
    %v2627 = vpop.f32.mrf.mxu0
    %v2628 = vadd.f32 %v2615, %v2627
    %v2629 = vpop.f32.mrf.mxu0
    %2630 = vdwg.mxu0
    %v2631 = vmul.f32 %v2602, 0.01
    %v2632 = vmul.f32 %v2628, 0.01
    %v2633 = vmax.f32 %v2602, %v2631
    %v2634 = vmax.f32 %v2628, %v2632
    %v2635 = vld [vmem:[#allocation16] sm:$0xff]
    %v2636 = vld [vmem:[#allocation16 + $0x8] sm:$0xff]
    %v2637 = vld [vmem:[#allocation16 + $0x10] sm:$0xff]
    %v2638 = vld [vmem:[#allocation16 + $0x18] sm:$0xff]
    %v2639 = vld [vmem:[#allocation16 + $0x20] sm:$0xff]
    %v2640 = vld [vmem:[#allocation16 + $0x28] sm:$0xff]
    %v2641 = vld [vmem:[#allocation16 + $0x30] sm:$0xff]
    %v2642 = vld [vmem:[#allocation16 + $0x38] sm:$0xff]
    %v2643 = vld [vmem:[#allocation16 + $0x40] sm:$0xff]
    %v2644 = vld [vmem:[#allocation16 + $0x48] sm:$0xff]
    %v2645 = vld [vmem:[#allocation16 + $0x50] sm:$0xff]
    %v2646 = vld [vmem:[#allocation16 + $0x58] sm:$0xff]
    %v2647 = vld [vmem:[#allocation16 + $0x60] sm:$0xff]
    %v2648 = vld [vmem:[#allocation16 + $0x68] sm:$0xff]
    %v2649 = vld [vmem:[#allocation16 + $0x70] sm:$0xff]
    %v2650 = vld [vmem:[#allocation16 + $0x78] sm:$0xff]
    %v2651 = vld [vmem:[#allocation16 + $0x80] sm:$0xff]
    %v2652 = vld [vmem:[#allocation16 + $0x88] sm:$0xff]
    %v2653 = vld [vmem:[#allocation16 + $0x90] sm:$0xff]
    %v2654 = vld [vmem:[#allocation16 + $0x98] sm:$0xff]
    %v2655 = vld [vmem:[#allocation16 + $0xa0] sm:$0xff]
    %v2656 = vld [vmem:[#allocation16 + $0xa8] sm:$0xff]
    %v2657 = vld [vmem:[#allocation16 + $0xb0] sm:$0xff]
    %v2658 = vld [vmem:[#allocation16 + $0xb8] sm:$0xff]
    %v2659 = vld [vmem:[#allocation16 + $0xc0] sm:$0xff]
    %v2660 = vld [vmem:[#allocation16 + $0xc8] sm:$0xff]
    %v2661 = vld [vmem:[#allocation16 + $0xd0] sm:$0xff]
    %v2662 = vld [vmem:[#allocation16 + $0xd8] sm:$0xff]
    %v2663 = vld [vmem:[#allocation16 + $0xe0] sm:$0xff]
    %v2664 = vld [vmem:[#allocation16 + $0xe8] sm:$0xff]
    %v2665 = vld [vmem:[#allocation16 + $0xf0] sm:$0xff]
    %v2666 = vld [vmem:[#allocation16 + $0xf8] sm:$0xff]
    %v2667 = vld [vmem:[#allocation18] sm:$0x3]
    %v2668 = vpack.c.bf16 %v2633, %v2633
    %v2669 = vpack.c.bf16 %v2634, %v2634
    %v2671 = vperm.slane %v2667, 0
    %v2672 = vperm.slane %v2667, 1
    %v2707 = vunpack.c.l.b16 %v2635
    %v2708 = vunpack.c.h.b16 %v2635
    %v2709 = vunpack.c.l.b16 %v2636
    %v2710 = vunpack.c.h.b16 %v2636
    %v2711 = vunpack.c.l.b16 %v2637
    %v2712 = vunpack.c.h.b16 %v2637
    %v2713 = vunpack.c.l.b16 %v2638
    %v2714 = vunpack.c.h.b16 %v2638
    %v2715 = vunpack.c.l.b16 %v2639
    %v2716 = vunpack.c.h.b16 %v2639
    %v2717 = vunpack.c.l.b16 %v2640
    %v2718 = vunpack.c.h.b16 %v2640
    %v2719 = vunpack.c.l.b16 %v2641
    %v2720 = vunpack.c.h.b16 %v2641
    %v2721 = vunpack.c.l.b16 %v2642
    %v2722 = vunpack.c.h.b16 %v2642
    %v2723 = vunpack.c.l.b16 %v2643
    %v2724 = vunpack.c.h.b16 %v2643
    %v2725 = vunpack.c.l.b16 %v2644
    %v2726 = vunpack.c.h.b16 %v2644
    %v2727 = vunpack.c.l.b16 %v2645
    %v2728 = vunpack.c.h.b16 %v2645
    %v2729 = vunpack.c.l.b16 %v2646
    %v2730 = vunpack.c.h.b16 %v2646
    %v2731 = vunpack.c.l.b16 %v2647
    %v2732 = vunpack.c.h.b16 %v2647
    %v2733 = vunpack.c.l.b16 %v2648
    %v2734 = vunpack.c.h.b16 %v2648
    %v2735 = vunpack.c.l.b16 %v2649
    %v2736 = vunpack.c.h.b16 %v2649
    %v2737 = vunpack.c.l.b16 %v2650
    %v2738 = vunpack.c.h.b16 %v2650
    %v2739 = vunpack.c.l.b16 %v2651
    %v2740 = vunpack.c.h.b16 %v2651
    %v2741 = vunpack.c.l.b16 %v2652
    %v2742 = vunpack.c.h.b16 %v2652
    %v2743 = vunpack.c.l.b16 %v2653
    %v2744 = vunpack.c.h.b16 %v2653
    %v2745 = vunpack.c.l.b16 %v2654
    %v2746 = vunpack.c.h.b16 %v2654
    %v2747 = vunpack.c.l.b16 %v2655
    %v2748 = vunpack.c.h.b16 %v2655
    %v2749 = vunpack.c.l.b16 %v2656
    %v2750 = vunpack.c.h.b16 %v2656
    %v2751 = vunpack.c.l.b16 %v2657
    %v2752 = vunpack.c.h.b16 %v2657
    %v2753 = vunpack.c.l.b16 %v2658
    %v2754 = vunpack.c.h.b16 %v2658
    %v2755 = vunpack.c.l.b16 %v2659
    %v2756 = vunpack.c.h.b16 %v2659
    %v2757 = vunpack.c.l.b16 %v2660
    %v2758 = vunpack.c.h.b16 %v2660
    %v2759 = vunpack.c.l.b16 %v2661
    %v2760 = vunpack.c.h.b16 %v2661
    %v2761 = vunpack.c.l.b16 %v2662
    %v2762 = vunpack.c.h.b16 %v2662
    %v2763 = vunpack.c.l.b16 %v2663
    %v2764 = vunpack.c.h.b16 %v2663
    %v2765 = vunpack.c.l.b16 %v2664
    %v2766 = vunpack.c.h.b16 %v2664
    %v2767 = vunpack.c.l.b16 %v2665
    %v2768 = vunpack.c.h.b16 %v2665
    %v2769 = vunpack.c.l.b16 %v2666
    %v2770 = vunpack.c.h.b16 %v2666
    %v2771 = vpack.c.b16 %v2709, %v2707
    %v2772 = vpack.c.b16 %v2710, %v2708
    %v2773 = vpack.c.b16 %v2713, %v2711
    %v2774 = vpack.c.b16 %v2714, %v2712
    %v2775 = vpack.c.b16 %v2717, %v2715
    %v2776 = vpack.c.b16 %v2718, %v2716
    %v2777 = vpack.c.b16 %v2721, %v2719
    %v2778 = vpack.c.b16 %v2722, %v2720
    %v2779 = vpack.c.b16 %v2725, %v2723
    %v2780 = vpack.c.b16 %v2726, %v2724
    %v2781 = vpack.c.b16 %v2729, %v2727
    %v2782 = vpack.c.b16 %v2730, %v2728
    %v2783 = vpack.c.b16 %v2733, %v2731
    %v2784 = vpack.c.b16 %v2734, %v2732
    %v2785 = vpack.c.b16 %v2737, %v2735
    %v2786 = vpack.c.b16 %v2738, %v2736
    %v2787 = vpack.c.b16 %v2741, %v2739
    %v2788 = vpack.c.b16 %v2742, %v2740
    %v2789 = vpack.c.b16 %v2745, %v2743
    %v2790 = vpack.c.b16 %v2746, %v2744
    %v2791 = vpack.c.b16 %v2749, %v2747
    %v2792 = vpack.c.b16 %v2750, %v2748
    %v2793 = vpack.c.b16 %v2753, %v2751
    %v2794 = vpack.c.b16 %v2754, %v2752
    %v2795 = vpack.c.b16 %v2757, %v2755
    %v2796 = vpack.c.b16 %v2758, %v2756
    %v2797 = vpack.c.b16 %v2761, %v2759
    %v2798 = vpack.c.b16 %v2762, %v2760
    %v2799 = vpack.c.b16 %v2765, %v2763
    %v2800 = vpack.c.b16 %v2766, %v2764
    %v2801 = vpack.c.b16 %v2769, %v2767
    %v2802 = vpack.c.b16 %v2770, %v2768
    %2835 = vmatpush.bf16.msra.mxu0 %v2785
    %2836 = vmatpush.bf16.msra.mxu0 %v2783
    %2837 = vmatpush.bf16.msra.mxu0 %v2781
    %2838 = vmatpush.bf16.msra.mxu0 %v2779
    %2839 = vmatpush.bf16.msra.mxu0 %v2777
    %2840 = vmatpush.bf16.msra.mxu0 %v2775
    %2841 = vmatpush.bf16.msra.mxu0 %v2773
    %2842 = vmatpush.bf16.msra.mxu0 %v2771
    %2843 = vmatmul.bf16.gmra.mxu0 %v2668
    %v2844 = vpop.f32.mrf.mxu0
    %v2845 = vadd.f32 %v2671, %v2844
    %v2846 = vpop.f32.mrf.mxu0
    %2847 = vdwg.mxu0
    %2848 = vmatpush.bf16.msra.mxu0 %v2801
    %2849 = vmatpush.bf16.msra.mxu0 %v2799
    %2850 = vmatpush.bf16.msra.mxu0 %v2797
    %2851 = vmatpush.bf16.msra.mxu0 %v2795
    %2852 = vmatpush.bf16.msra.mxu0 %v2793
    %2853 = vmatpush.bf16.msra.mxu0 %v2791
    %2854 = vmatpush.bf16.msra.mxu0 %v2789
    %2855 = vmatpush.bf16.msra.mxu0 %v2787
    %2856 = vmatmul.bf16.gmra.mxu0 %v2669
    %v2857 = vpop.f32.mrf.mxu0
    %v2858 = vadd.f32 %v2845, %v2857
    %v2859 = vpop.f32.mrf.mxu0
    %2860 = vdwg.mxu0
    %2861 = vmatpush.bf16.msra.mxu0 %v2786
    %2862 = vmatpush.bf16.msra.mxu0 %v2784
    %2863 = vmatpush.bf16.msra.mxu0 %v2782
    %2864 = vmatpush.bf16.msra.mxu0 %v2780
    %2865 = vmatpush.bf16.msra.mxu0 %v2778
    %2866 = vmatpush.bf16.msra.mxu0 %v2776
    %2867 = vmatpush.bf16.msra.mxu0 %v2774
    %2868 = vmatpush.bf16.msra.mxu0 %v2772
    %2869 = vmatmul.bf16.gmra.mxu0 %v2668
    %v2870 = vpop.f32.mrf.mxu0
    %v2871 = vadd.f32 %v2672, %v2870
    %v2872 = vpop.f32.mrf.mxu0
    %2873 = vdwg.mxu0
    %2874 = vmatpush.bf16.msra.mxu0 %v2802
    %2875 = vmatpush.bf16.msra.mxu0 %v2800
    %2876 = vmatpush.bf16.msra.mxu0 %v2798
    %2877 = vmatpush.bf16.msra.mxu0 %v2796
    %2878 = vmatpush.bf16.msra.mxu0 %v2794
    %2879 = vmatpush.bf16.msra.mxu0 %v2792
    %2880 = vmatpush.bf16.msra.mxu0 %v2790
    %2881 = vmatpush.bf16.msra.mxu0 %v2788
    %2882 = vmatmul.bf16.gmra.mxu0 %v2669
    %v2883 = vpop.f32.mrf.mxu0
    %v2884 = vadd.f32 %v2871, %v2883
    %v2885 = vpop.f32.mrf.mxu0
    %2886 = vdwg.mxu0
    %v2887 = vmul.f32 %v2858, 0.01
    %v2888 = vmul.f32 %v2884, 0.01
    %v2889 = vmax.f32 %v2858, %v2887
    %v2890 = vmax.f32 %v2884, %v2888
    %v2891 = vld [vmem:[%s51] sm:$0xf]
    %v2892 = vld [vmem:[%s51 + $0x4] sm:$0xf]
    %v2893 = vld [vmem:[%s51 + $0x8] sm:$0xf]
    %v2894 = vld [vmem:[%s51 + $0xc] sm:$0xf]
    %v2895 = vld [vmem:[%s51 + $0x10] sm:$0xf]
    %v2896 = vld [vmem:[%s51 + $0x14] sm:$0xf]
    %v2897 = vld [vmem:[%s51 + $0x18] sm:$0xf]
    %v2898 = vld [vmem:[%s51 + $0x1c] sm:$0xf]
    %v2899 = vld [vmem:[%s51 + $0x20] sm:$0xf]
    %v2900 = vld [vmem:[%s51 + $0x24] sm:$0xf]
    %v2901 = vld [vmem:[%s51 + $0x28] sm:$0xf]
    %v2902 = vld [vmem:[%s51 + $0x2c] sm:$0xf]
    %v2903 = vld [vmem:[%s51 + $0x30] sm:$0xf]
    %v2904 = vld [vmem:[%s51 + $0x34] sm:$0xf]
    %v2905 = vld [vmem:[%s51 + $0x38] sm:$0xf]
    %v2906 = vld [vmem:[%s51 + $0x3c] sm:$0xf]
    %v2907 = vld [vmem:[%s51 + $0x40] sm:$0xf]
    %v2908 = vld [vmem:[%s51 + $0x44] sm:$0xf]
    %v2909 = vld [vmem:[%s51 + $0x48] sm:$0xf]
    %v2910 = vld [vmem:[%s51 + $0x4c] sm:$0xf]
    %v2911 = vld [vmem:[%s51 + $0x50] sm:$0xf]
    %v2912 = vld [vmem:[%s51 + $0x54] sm:$0xf]
    %v2913 = vld [vmem:[%s51 + $0x58] sm:$0xf]
    %v2914 = vld [vmem:[%s51 + $0x5c] sm:$0xf]
    %v2915 = vld [vmem:[%s51 + $0x60] sm:$0xf]
    %v2916 = vld [vmem:[%s51 + $0x64] sm:$0xf]
    %v2917 = vld [vmem:[%s51 + $0x68] sm:$0xf]
    %v2918 = vld [vmem:[%s51 + $0x6c] sm:$0xf]
    %v2919 = vld [vmem:[%s51 + $0x70] sm:$0xf]
    %v2920 = vld [vmem:[%s51 + $0x74] sm:$0xf]
    %v2921 = vld [vmem:[%s51 + $0x78] sm:$0xf]
    %v2922 = vld [vmem:[%s51 + $0x7c] sm:$0xf]
    %v2923 = vld [vmem:[#allocation19] sm:$0x1]
    %v2924 = vpack.c.bf16 %v2889, %v2889
    %v2925 = vpack.c.bf16 %v2890, %v2890
    %v2927 = vperm.slane %v2923, 0
    %v2961 = vunpack.c.l.b16 %v2891
    %v2962 = vunpack.c.l.b16 %v2892
    %v2963 = vunpack.c.l.b16 %v2893
    %v2964 = vunpack.c.l.b16 %v2894
    %v2965 = vunpack.c.l.b16 %v2895
    %v2966 = vunpack.c.l.b16 %v2896
    %v2967 = vunpack.c.l.b16 %v2897
    %v2968 = vunpack.c.l.b16 %v2898
    %v2969 = vunpack.c.l.b16 %v2899
    %v2970 = vunpack.c.l.b16 %v2900
    %v2971 = vunpack.c.l.b16 %v2901
    %v2972 = vunpack.c.l.b16 %v2902
    %v2973 = vunpack.c.l.b16 %v2903
    %v2974 = vunpack.c.l.b16 %v2904
    %v2975 = vunpack.c.l.b16 %v2905
    %v2976 = vunpack.c.l.b16 %v2906
    %v2977 = vunpack.c.l.b16 %v2907
    %v2978 = vunpack.c.l.b16 %v2908
    %v2979 = vunpack.c.l.b16 %v2909
    %v2980 = vunpack.c.l.b16 %v2910
    %v2981 = vunpack.c.l.b16 %v2911
    %v2982 = vunpack.c.l.b16 %v2912
    %v2983 = vunpack.c.l.b16 %v2913
    %v2984 = vunpack.c.l.b16 %v2914
    %v2985 = vunpack.c.l.b16 %v2915
    %v2986 = vunpack.c.l.b16 %v2916
    %v2987 = vunpack.c.l.b16 %v2917
    %v2988 = vunpack.c.l.b16 %v2918
    %v2989 = vunpack.c.l.b16 %v2919
    %v2990 = vunpack.c.l.b16 %v2920
    %v2991 = vunpack.c.l.b16 %v2921
    %v2992 = vunpack.c.l.b16 %v2922
    %v2993 = vpack.c.b16 %v2962, %v2961
    %v2994 = vpack.c.b16 %v2964, %v2963
    %v2995 = vpack.c.b16 %v2966, %v2965
    %v2996 = vpack.c.b16 %v2968, %v2967
    %v2997 = vpack.c.b16 %v2970, %v2969
    %v2998 = vpack.c.b16 %v2972, %v2971
    %v2999 = vpack.c.b16 %v2974, %v2973
    %v3000 = vpack.c.b16 %v2976, %v2975
    %v3001 = vpack.c.b16 %v2978, %v2977
    %v3002 = vpack.c.b16 %v2980, %v2979
    %v3003 = vpack.c.b16 %v2982, %v2981
    %v3004 = vpack.c.b16 %v2984, %v2983
    %v3005 = vpack.c.b16 %v2986, %v2985
    %v3006 = vpack.c.b16 %v2988, %v2987
    %v3007 = vpack.c.b16 %v2990, %v2989
    %v3008 = vpack.c.b16 %v2992, %v2991
    %3025 = vmatpush.bf16.msra.mxu0 %v3000
    %3026 = vmatpush.bf16.msra.mxu0 %v2999
    %3027 = vmatpush.bf16.msra.mxu0 %v2998
    %3028 = vmatpush.bf16.msra.mxu0 %v2997
    %3029 = vmatpush.bf16.msra.mxu0 %v2996
    %3030 = vmatpush.bf16.msra.mxu0 %v2995
    %3031 = vmatpush.bf16.msra.mxu0 %v2994
    %3032 = vmatpush.bf16.msra.mxu0 %v2993
    %3033 = vmatmul.bf16.gmra.mxu0 %v2924
    %v3034 = vpop.f32.mrf.mxu0
    %v3035 = vadd.f32 %v2927, %v3034
    %v3036 = vpop.f32.mrf.mxu0
    %3037 = vdwg.mxu0
    %3038 = vmatpush.bf16.msra.mxu0 %v3008
    %3039 = vmatpush.bf16.msra.mxu0 %v3007
    %3040 = vmatpush.bf16.msra.mxu0 %v3006
    %3041 = vmatpush.bf16.msra.mxu0 %v3005
    %3042 = vmatpush.bf16.msra.mxu0 %v3004
    %3043 = vmatpush.bf16.msra.mxu0 %v3003
    %3044 = vmatpush.bf16.msra.mxu0 %v3002
    %3045 = vmatpush.bf16.msra.mxu0 %v3001
    %3046 = vmatmul.bf16.gmra.mxu0 %v2925
    %v3047 = vpop.f32.mrf.mxu0
    %v3048 = vadd.f32 %v3035, %v3047
    %v3049 = vpop.f32.mrf.mxu0
    %3050 = vdwg.mxu0
    %vm3051 = vcmask 64512
    %v3052 = vsel %vm3051, %v2292, -inf
    %3053 = vmax.xlane.f32.xlu0 %v3052
    %v3054 = vpop.xlane.xlu0 %3053
    %v3055 = vsub.f32 %v2292, %v3054
    %v3056 = vmul.f32 %v3055, 1.442695
    %v3057 = vpow.pop %v3056
    %v3058 = vsel %vm3051, %v3057, 0.0
    %3059 = vadd.xlane.f32.xlu0 %v3058
    %v3060 = vpop.xlane.xlu0 %3059
    %v3061 = vrcp.pop %v3060
    %v3062 = vmul.f32 %v3060, %v3061
    %v3063 = vsub.f32 1.0, %v3062
    %v3064 = vmul.f32 %v3061, %v3063
    %v3065 = vadd.f32 %v3061, %v3064
    %vm3066 = vweird.f32 %v3060
    %vm3067 = vweird.f32 %v3061
    %vm3068 = vmor %vm3066, %vm3067
    %v3069 = vsel %vm3068, %v3061, %v3065
    %v3070 = vand.u32 2147483647, %v3060
    %vm3071 = vcmp.eq.f32.partialorder %v3070, 8.507059e+37
    %v3072 = vand.u32 %v3060, 2147483648
    %v3073 = vor.u32 1.1754944e-38, %v3072
    %v3074 = vsel %vm3071, %v3073, %v3069
    %v3075 = vmul.f32 %v3057, %v3074
    %v3076 = vmul.f32 %v3075, 0.999999
    %v3077 = vadd.f32 %v3076, 1.25e-07
    %v3078 = vld [vmem:[#allocation21] sm:$0xff]
    %v3079 = vld [vmem:[#allocation21 + $0x8] sm:$0xff]
    %v3080 = vld [vmem:[#allocation21 + $0x10] sm:$0xff]
    %v3081 = vld [vmem:[#allocation21 + $0x18] sm:$0xff]
    %v3082 = vld [vmem:[#allocation22] sm:$0x3]
    %v3083 = vpack.c.bf16 %v1531, %v1531
    %v3085 = vperm.slane %v3082, 0
    %v3086 = vperm.slane %v3082, 1
    %3090 = vrot.lane.b32.xlu0 %v3083, 96
    %v3091 = vpop.permute.xlu0 %3090
    %v3096 = vunpack.c.l.b16 %v3078
    %v3097 = vunpack.c.h.b16 %v3078
    %v3098 = vunpack.c.l.b16 %v3079
    %v3099 = vunpack.c.h.b16 %v3079
    %v3100 = vunpack.c.l.b16 %v3080
    %v3101 = vunpack.c.h.b16 %v3080
    %v3102 = vunpack.c.l.b16 %v3081
    %v3103 = vunpack.c.h.b16 %v3081
    %v3104 = vpack.c.b16 %v3098, %v3096
    %v3105 = vpack.c.b16 %v3099, %v3097
    %v3106 = vpack.c.b16 %v3102, %v3100
    %v3107 = vpack.c.b16 %v3103, %v3101
    %v3113 = vsel %vm1532, %v3091, 0
    %3115 = vmatpush.bf16.msra.mxu0 0
    %3116 = vmatpush.bf16.msra.mxu0 0
    %3117 = vmatpush.bf16.msra.mxu0 0
    %3118 = vmatpush.bf16.msra.mxu0 0
    %3119 = vmatpush.bf16.msra.mxu0 0
    %3120 = vmatpush.bf16.msra.mxu0 0
    %3121 = vmatpush.bf16.msra.mxu0 %v3106
    %3122 = vmatpush.bf16.msra.mxu0 %v3104
    %3123 = vmatmul.bf16.gmra.mxu0 %v3113
    %v3124 = vpop.f32.mrf.mxu0
    %v3125 = vadd.f32 %v3085, %v3124
    %v3126 = vpop.f32.mrf.mxu0
    %3127 = vdwg.mxu0
    %3128 = vmatpush.bf16.msra.mxu0 0
    %3129 = vmatpush.bf16.msra.mxu0 0
    %3130 = vmatpush.bf16.msra.mxu0 0
    %3131 = vmatpush.bf16.msra.mxu0 0
    %3132 = vmatpush.bf16.msra.mxu0 0
    %3133 = vmatpush.bf16.msra.mxu0 0
    %3134 = vmatpush.bf16.msra.mxu0 %v3107
    %3135 = vmatpush.bf16.msra.mxu0 %v3105
    %3136 = vmatmul.bf16.gmra.mxu0 %v3113
    %v3137 = vpop.f32.mrf.mxu0
    %v3138 = vadd.f32 %v3086, %v3137
    %v3139 = vpop.f32.mrf.mxu0
    %3140 = vdwg.mxu0
    %v3141 = vmul.f32 %v3125, 0.01
    %v3142 = vmul.f32 %v3138, 0.01
    %v3143 = vmax.f32 %v3125, %v3141
    %v3144 = vmax.f32 %v3138, %v3142
    %v3145 = vld [vmem:[#allocation24] sm:$0xff]
    %v3146 = vld [vmem:[#allocation24 + $0x8] sm:$0xff]
    %v3147 = vld [vmem:[#allocation24 + $0x10] sm:$0xff]
    %v3148 = vld [vmem:[#allocation24 + $0x18] sm:$0xff]
    %v3149 = vld [vmem:[#allocation24 + $0x20] sm:$0xff]
    %v3150 = vld [vmem:[#allocation24 + $0x28] sm:$0xff]
    %v3151 = vld [vmem:[#allocation24 + $0x30] sm:$0xff]
    %v3152 = vld [vmem:[#allocation24 + $0x38] sm:$0xff]
    %v3153 = vld [vmem:[#allocation24 + $0x40] sm:$0xff]
    %v3154 = vld [vmem:[#allocation24 + $0x48] sm:$0xff]
    %v3155 = vld [vmem:[#allocation24 + $0x50] sm:$0xff]
    %v3156 = vld [vmem:[#allocation24 + $0x58] sm:$0xff]
    %v3157 = vld [vmem:[#allocation24 + $0x60] sm:$0xff]
    %v3158 = vld [vmem:[#allocation24 + $0x68] sm:$0xff]
    %v3159 = vld [vmem:[#allocation24 + $0x70] sm:$0xff]
    %v3160 = vld [vmem:[#allocation24 + $0x78] sm:$0xff]
    %v3161 = vld [vmem:[#allocation24 + $0x80] sm:$0xff]
    %v3162 = vld [vmem:[#allocation24 + $0x88] sm:$0xff]
    %v3163 = vld [vmem:[#allocation24 + $0x90] sm:$0xff]
    %v3164 = vld [vmem:[#allocation24 + $0x98] sm:$0xff]
    %v3165 = vld [vmem:[#allocation24 + $0xa0] sm:$0xff]
    %v3166 = vld [vmem:[#allocation24 + $0xa8] sm:$0xff]
    %v3167 = vld [vmem:[#allocation24 + $0xb0] sm:$0xff]
    %v3168 = vld [vmem:[#allocation24 + $0xb8] sm:$0xff]
    %v3169 = vld [vmem:[#allocation24 + $0xc0] sm:$0xff]
    %v3170 = vld [vmem:[#allocation24 + $0xc8] sm:$0xff]
    %v3171 = vld [vmem:[#allocation24 + $0xd0] sm:$0xff]
    %v3172 = vld [vmem:[#allocation24 + $0xd8] sm:$0xff]
    %v3173 = vld [vmem:[#allocation24 + $0xe0] sm:$0xff]
    %v3174 = vld [vmem:[#allocation24 + $0xe8] sm:$0xff]
    %v3175 = vld [vmem:[#allocation24 + $0xf0] sm:$0xff]
    %v3176 = vld [vmem:[#allocation24 + $0xf8] sm:$0xff]
    %v3177 = vld [vmem:[#allocation25] sm:$0x3]
    %v3178 = vpack.c.bf16 %v3143, %v3143
    %v3179 = vpack.c.bf16 %v3144, %v3144
    %v3181 = vperm.slane %v3177, 0
    %v3182 = vperm.slane %v3177, 1
    %v3217 = vunpack.c.l.b16 %v3145
    %v3218 = vunpack.c.h.b16 %v3145
    %v3219 = vunpack.c.l.b16 %v3146
    %v3220 = vunpack.c.h.b16 %v3146
    %v3221 = vunpack.c.l.b16 %v3147
    %v3222 = vunpack.c.h.b16 %v3147
    %v3223 = vunpack.c.l.b16 %v3148
    %v3224 = vunpack.c.h.b16 %v3148
    %v3225 = vunpack.c.l.b16 %v3149
    %v3226 = vunpack.c.h.b16 %v3149
    %v3227 = vunpack.c.l.b16 %v3150
    %v3228 = vunpack.c.h.b16 %v3150
    %v3229 = vunpack.c.l.b16 %v3151
    %v3230 = vunpack.c.h.b16 %v3151
    %v3231 = vunpack.c.l.b16 %v3152
    %v3232 = vunpack.c.h.b16 %v3152
    %v3233 = vunpack.c.l.b16 %v3153
    %v3234 = vunpack.c.h.b16 %v3153
    %v3235 = vunpack.c.l.b16 %v3154
    %v3236 = vunpack.c.h.b16 %v3154
    %v3237 = vunpack.c.l.b16 %v3155
    %v3238 = vunpack.c.h.b16 %v3155
    %v3239 = vunpack.c.l.b16 %v3156
    %v3240 = vunpack.c.h.b16 %v3156
    %v3241 = vunpack.c.l.b16 %v3157
    %v3242 = vunpack.c.h.b16 %v3157
    %v3243 = vunpack.c.l.b16 %v3158
    %v3244 = vunpack.c.h.b16 %v3158
    %v3245 = vunpack.c.l.b16 %v3159
    %v3246 = vunpack.c.h.b16 %v3159
    %v3247 = vunpack.c.l.b16 %v3160
    %v3248 = vunpack.c.h.b16 %v3160
    %v3249 = vunpack.c.l.b16 %v3161
    %v3250 = vunpack.c.h.b16 %v3161
    %v3251 = vunpack.c.l.b16 %v3162
    %v3252 = vunpack.c.h.b16 %v3162
    %v3253 = vunpack.c.l.b16 %v3163
    %v3254 = vunpack.c.h.b16 %v3163
    %v3255 = vunpack.c.l.b16 %v3164
    %v3256 = vunpack.c.h.b16 %v3164
    %v3257 = vunpack.c.l.b16 %v3165
    %v3258 = vunpack.c.h.b16 %v3165
    %v3259 = vunpack.c.l.b16 %v3166
    %v3260 = vunpack.c.h.b16 %v3166
    %v3261 = vunpack.c.l.b16 %v3167
    %v3262 = vunpack.c.h.b16 %v3167
    %v3263 = vunpack.c.l.b16 %v3168
    %v3264 = vunpack.c.h.b16 %v3168
    %v3265 = vunpack.c.l.b16 %v3169
    %v3266 = vunpack.c.h.b16 %v3169
    %v3267 = vunpack.c.l.b16 %v3170
    %v3268 = vunpack.c.h.b16 %v3170
    %v3269 = vunpack.c.l.b16 %v3171
    %v3270 = vunpack.c.h.b16 %v3171
    %v3271 = vunpack.c.l.b16 %v3172
    %v3272 = vunpack.c.h.b16 %v3172
    %v3273 = vunpack.c.l.b16 %v3173
    %v3274 = vunpack.c.h.b16 %v3173
    %v3275 = vunpack.c.l.b16 %v3174
    %v3276 = vunpack.c.h.b16 %v3174
    %v3277 = vunpack.c.l.b16 %v3175
    %v3278 = vunpack.c.h.b16 %v3175
    %v3279 = vunpack.c.l.b16 %v3176
    %v3280 = vunpack.c.h.b16 %v3176
    %v3281 = vpack.c.b16 %v3219, %v3217
    %v3282 = vpack.c.b16 %v3220, %v3218
    %v3283 = vpack.c.b16 %v3223, %v3221
    %v3284 = vpack.c.b16 %v3224, %v3222
    %v3285 = vpack.c.b16 %v3227, %v3225
    %v3286 = vpack.c.b16 %v3228, %v3226
    %v3287 = vpack.c.b16 %v3231, %v3229
    %v3288 = vpack.c.b16 %v3232, %v3230
    %v3289 = vpack.c.b16 %v3235, %v3233
    %v3290 = vpack.c.b16 %v3236, %v3234
    %v3291 = vpack.c.b16 %v3239, %v3237
    %v3292 = vpack.c.b16 %v3240, %v3238
    %v3293 = vpack.c.b16 %v3243, %v3241
    %v3294 = vpack.c.b16 %v3244, %v3242
    %v3295 = vpack.c.b16 %v3247, %v3245
    %v3296 = vpack.c.b16 %v3248, %v3246
    %v3297 = vpack.c.b16 %v3251, %v3249
    %v3298 = vpack.c.b16 %v3252, %v3250
    %v3299 = vpack.c.b16 %v3255, %v3253
    %v3300 = vpack.c.b16 %v3256, %v3254
    %v3301 = vpack.c.b16 %v3259, %v3257
    %v3302 = vpack.c.b16 %v3260, %v3258
    %v3303 = vpack.c.b16 %v3263, %v3261
    %v3304 = vpack.c.b16 %v3264, %v3262
    %v3305 = vpack.c.b16 %v3267, %v3265
    %v3306 = vpack.c.b16 %v3268, %v3266
    %v3307 = vpack.c.b16 %v3271, %v3269
    %v3308 = vpack.c.b16 %v3272, %v3270
    %v3309 = vpack.c.b16 %v3275, %v3273
    %v3310 = vpack.c.b16 %v3276, %v3274
    %v3311 = vpack.c.b16 %v3279, %v3277
    %v3312 = vpack.c.b16 %v3280, %v3278
    %3345 = vmatpush.bf16.msra.mxu0 %v3295
    %3346 = vmatpush.bf16.msra.mxu0 %v3293
    %3347 = vmatpush.bf16.msra.mxu0 %v3291
    %3348 = vmatpush.bf16.msra.mxu0 %v3289
    %3349 = vmatpush.bf16.msra.mxu0 %v3287
    %3350 = vmatpush.bf16.msra.mxu0 %v3285
    %3351 = vmatpush.bf16.msra.mxu0 %v3283
    %3352 = vmatpush.bf16.msra.mxu0 %v3281
    %3353 = vmatmul.bf16.gmra.mxu0 %v3178
    %v3354 = vpop.f32.mrf.mxu0
    %v3355 = vadd.f32 %v3181, %v3354
    %v3356 = vpop.f32.mrf.mxu0
    %3357 = vdwg.mxu0
    %3358 = vmatpush.bf16.msra.mxu0 %v3311
    %3359 = vmatpush.bf16.msra.mxu0 %v3309
    %3360 = vmatpush.bf16.msra.mxu0 %v3307
    %3361 = vmatpush.bf16.msra.mxu0 %v3305
    %3362 = vmatpush.bf16.msra.mxu0 %v3303
    %3363 = vmatpush.bf16.msra.mxu0 %v3301
    %3364 = vmatpush.bf16.msra.mxu0 %v3299
    %3365 = vmatpush.bf16.msra.mxu0 %v3297
    %3366 = vmatmul.bf16.gmra.mxu0 %v3179
    %v3367 = vpop.f32.mrf.mxu0
    %v3368 = vadd.f32 %v3355, %v3367
    %v3369 = vpop.f32.mrf.mxu0
    %3370 = vdwg.mxu0
    %3371 = vmatpush.bf16.msra.mxu0 %v3296
    %3372 = vmatpush.bf16.msra.mxu0 %v3294
    %3373 = vmatpush.bf16.msra.mxu0 %v3292
    %3374 = vmatpush.bf16.msra.mxu0 %v3290
    %3375 = vmatpush.bf16.msra.mxu0 %v3288
    %3376 = vmatpush.bf16.msra.mxu0 %v3286
    %3377 = vmatpush.bf16.msra.mxu0 %v3284
    %3378 = vmatpush.bf16.msra.mxu0 %v3282
    %3379 = vmatmul.bf16.gmra.mxu0 %v3178
    %v3380 = vpop.f32.mrf.mxu0
    %v3381 = vadd.f32 %v3182, %v3380
    %v3382 = vpop.f32.mrf.mxu0
    %3383 = vdwg.mxu0
    %3384 = vmatpush.bf16.msra.mxu0 %v3312
    %3385 = vmatpush.bf16.msra.mxu0 %v3310
    %3386 = vmatpush.bf16.msra.mxu0 %v3308
    %3387 = vmatpush.bf16.msra.mxu0 %v3306
    %3388 = vmatpush.bf16.msra.mxu0 %v3304
    %3389 = vmatpush.bf16.msra.mxu0 %v3302
    %3390 = vmatpush.bf16.msra.mxu0 %v3300
    %3391 = vmatpush.bf16.msra.mxu0 %v3298
    %3392 = vmatmul.bf16.gmra.mxu0 %v3179
    %v3393 = vpop.f32.mrf.mxu0
    %v3394 = vadd.f32 %v3381, %v3393
    %v3395 = vpop.f32.mrf.mxu0
    %3396 = vdwg.mxu0
    %v3397 = vmul.f32 %v3368, 0.01
    %v3398 = vmul.f32 %v3394, 0.01
    %v3399 = vmax.f32 %v3368, %v3397
    %v3400 = vmax.f32 %v3394, %v3398
    %v3401 = vld [vmem:[#allocation27] sm:$0xff]
    %v3402 = vld [vmem:[#allocation27 + $0x8] sm:$0xff]
    %v3403 = vld [vmem:[#allocation27 + $0x10] sm:$0xff]
    %v3404 = vld [vmem:[#allocation27 + $0x18] sm:$0xff]
    %v3405 = vld [vmem:[#allocation27 + $0x20] sm:$0xff]
    %v3406 = vld [vmem:[#allocation27 + $0x28] sm:$0xff]
    %v3407 = vld [vmem:[#allocation27 + $0x30] sm:$0xff]
    %v3408 = vld [vmem:[#allocation27 + $0x38] sm:$0xff]
    %v3409 = vld [vmem:[#allocation27 + $0x40] sm:$0xff]
    %v3410 = vld [vmem:[#allocation27 + $0x48] sm:$0xff]
    %v3411 = vld [vmem:[#allocation27 + $0x50] sm:$0xff]
    %v3412 = vld [vmem:[#allocation27 + $0x58] sm:$0xff]
    %v3413 = vld [vmem:[#allocation27 + $0x60] sm:$0xff]
    %v3414 = vld [vmem:[#allocation27 + $0x68] sm:$0xff]
    %v3415 = vld [vmem:[#allocation27 + $0x70] sm:$0xff]
    %v3416 = vld [vmem:[#allocation27 + $0x78] sm:$0xff]
    %v3417 = vld [vmem:[#allocation27 + $0x80] sm:$0xff]
    %v3418 = vld [vmem:[#allocation27 + $0x88] sm:$0xff]
    %v3419 = vld [vmem:[#allocation27 + $0x90] sm:$0xff]
    %v3420 = vld [vmem:[#allocation27 + $0x98] sm:$0xff]
    %v3421 = vld [vmem:[#allocation27 + $0xa0] sm:$0xff]
    %v3422 = vld [vmem:[#allocation27 + $0xa8] sm:$0xff]
    %v3423 = vld [vmem:[#allocation27 + $0xb0] sm:$0xff]
    %v3424 = vld [vmem:[#allocation27 + $0xb8] sm:$0xff]
    %v3425 = vld [vmem:[#allocation27 + $0xc0] sm:$0xff]
    %v3426 = vld [vmem:[#allocation27 + $0xc8] sm:$0xff]
    %v3427 = vld [vmem:[#allocation27 + $0xd0] sm:$0xff]
    %v3428 = vld [vmem:[#allocation27 + $0xd8] sm:$0xff]
    %v3429 = vld [vmem:[#allocation27 + $0xe0] sm:$0xff]
    %v3430 = vld [vmem:[#allocation27 + $0xe8] sm:$0xff]
    %v3431 = vld [vmem:[#allocation27 + $0xf0] sm:$0xff]
    %v3432 = vld [vmem:[#allocation27 + $0xf8] sm:$0xff]
    %v3433 = vld [vmem:[#allocation28] sm:$0x3]
    %v3434 = vpack.c.bf16 %v3399, %v3399
    %v3435 = vpack.c.bf16 %v3400, %v3400
    %v3437 = vperm.slane %v3433, 0
    %v3438 = vperm.slane %v3433, 1
    %v3473 = vunpack.c.l.b16 %v3401
    %v3474 = vunpack.c.h.b16 %v3401
    %v3475 = vunpack.c.l.b16 %v3402
    %v3476 = vunpack.c.h.b16 %v3402
    %v3477 = vunpack.c.l.b16 %v3403
    %v3478 = vunpack.c.h.b16 %v3403
    %v3479 = vunpack.c.l.b16 %v3404
    %v3480 = vunpack.c.h.b16 %v3404
    %v3481 = vunpack.c.l.b16 %v3405
    %v3482 = vunpack.c.h.b16 %v3405
    %v3483 = vunpack.c.l.b16 %v3406
    %v3484 = vunpack.c.h.b16 %v3406
    %v3485 = vunpack.c.l.b16 %v3407
    %v3486 = vunpack.c.h.b16 %v3407
    %v3487 = vunpack.c.l.b16 %v3408
    %v3488 = vunpack.c.h.b16 %v3408
    %v3489 = vunpack.c.l.b16 %v3409
    %v3490 = vunpack.c.h.b16 %v3409
    %v3491 = vunpack.c.l.b16 %v3410
    %v3492 = vunpack.c.h.b16 %v3410
    %v3493 = vunpack.c.l.b16 %v3411
    %v3494 = vunpack.c.h.b16 %v3411
    %v3495 = vunpack.c.l.b16 %v3412
    %v3496 = vunpack.c.h.b16 %v3412
    %v3497 = vunpack.c.l.b16 %v3413
    %v3498 = vunpack.c.h.b16 %v3413
    %v3499 = vunpack.c.l.b16 %v3414
    %v3500 = vunpack.c.h.b16 %v3414
    %v3501 = vunpack.c.l.b16 %v3415
    %v3502 = vunpack.c.h.b16 %v3415
    %v3503 = vunpack.c.l.b16 %v3416
    %v3504 = vunpack.c.h.b16 %v3416
    %v3505 = vunpack.c.l.b16 %v3417
    %v3506 = vunpack.c.h.b16 %v3417
    %v3507 = vunpack.c.l.b16 %v3418
    %v3508 = vunpack.c.h.b16 %v3418
    %v3509 = vunpack.c.l.b16 %v3419
    %v3510 = vunpack.c.h.b16 %v3419
    %v3511 = vunpack.c.l.b16 %v3420
    %v3512 = vunpack.c.h.b16 %v3420
    %v3513 = vunpack.c.l.b16 %v3421
    %v3514 = vunpack.c.h.b16 %v3421
    %v3515 = vunpack.c.l.b16 %v3422
    %v3516 = vunpack.c.h.b16 %v3422
    %v3517 = vunpack.c.l.b16 %v3423
    %v3518 = vunpack.c.h.b16 %v3423
    %v3519 = vunpack.c.l.b16 %v3424
    %v3520 = vunpack.c.h.b16 %v3424
    %v3521 = vunpack.c.l.b16 %v3425
    %v3522 = vunpack.c.h.b16 %v3425
    %v3523 = vunpack.c.l.b16 %v3426
    %v3524 = vunpack.c.h.b16 %v3426
    %v3525 = vunpack.c.l.b16 %v3427
    %v3526 = vunpack.c.h.b16 %v3427
    %v3527 = vunpack.c.l.b16 %v3428
    %v3528 = vunpack.c.h.b16 %v3428
    %v3529 = vunpack.c.l.b16 %v3429
    %v3530 = vunpack.c.h.b16 %v3429
    %v3531 = vunpack.c.l.b16 %v3430
    %v3532 = vunpack.c.h.b16 %v3430
    %v3533 = vunpack.c.l.b16 %v3431
    %v3534 = vunpack.c.h.b16 %v3431
    %v3535 = vunpack.c.l.b16 %v3432
    %v3536 = vunpack.c.h.b16 %v3432
    %v3537 = vpack.c.b16 %v3475, %v3473
    %v3538 = vpack.c.b16 %v3476, %v3474
    %v3539 = vpack.c.b16 %v3479, %v3477
    %v3540 = vpack.c.b16 %v3480, %v3478
    %v3541 = vpack.c.b16 %v3483, %v3481
    %v3542 = vpack.c.b16 %v3484, %v3482
    %v3543 = vpack.c.b16 %v3487, %v3485
    %v3544 = vpack.c.b16 %v3488, %v3486
    %v3545 = vpack.c.b16 %v3491, %v3489
    %v3546 = vpack.c.b16 %v3492, %v3490
    %v3547 = vpack.c.b16 %v3495, %v3493
    %v3548 = vpack.c.b16 %v3496, %v3494
    %v3549 = vpack.c.b16 %v3499, %v3497
    %v3550 = vpack.c.b16 %v3500, %v3498
    %v3551 = vpack.c.b16 %v3503, %v3501
    %v3552 = vpack.c.b16 %v3504, %v3502
    %v3553 = vpack.c.b16 %v3507, %v3505
    %v3554 = vpack.c.b16 %v3508, %v3506
    %v3555 = vpack.c.b16 %v3511, %v3509
    %v3556 = vpack.c.b16 %v3512, %v3510
    %v3557 = vpack.c.b16 %v3515, %v3513
    %v3558 = vpack.c.b16 %v3516, %v3514
    %v3559 = vpack.c.b16 %v3519, %v3517
    %v3560 = vpack.c.b16 %v3520, %v3518
    %v3561 = vpack.c.b16 %v3523, %v3521
    %v3562 = vpack.c.b16 %v3524, %v3522
    %v3563 = vpack.c.b16 %v3527, %v3525
    %v3564 = vpack.c.b16 %v3528, %v3526
    %v3565 = vpack.c.b16 %v3531, %v3529
    %v3566 = vpack.c.b16 %v3532, %v3530
    %v3567 = vpack.c.b16 %v3535, %v3533
    %v3568 = vpack.c.b16 %v3536, %v3534
    %3601 = vmatpush.bf16.msra.mxu0 %v3551
    %3602 = vmatpush.bf16.msra.mxu0 %v3549
    %3603 = vmatpush.bf16.msra.mxu0 %v3547
    %3604 = vmatpush.bf16.msra.mxu0 %v3545
    %3605 = vmatpush.bf16.msra.mxu0 %v3543
    %3606 = vmatpush.bf16.msra.mxu0 %v3541
    %3607 = vmatpush.bf16.msra.mxu0 %v3539
    %3608 = vmatpush.bf16.msra.mxu0 %v3537
    %3609 = vmatmul.bf16.gmra.mxu0 %v3434
    %v3610 = vpop.f32.mrf.mxu0
    %v3611 = vadd.f32 %v3437, %v3610
    %v3612 = vpop.f32.mrf.mxu0
    %3613 = vdwg.mxu0
    %3614 = vmatpush.bf16.msra.mxu0 %v3567
    %3615 = vmatpush.bf16.msra.mxu0 %v3565
    %3616 = vmatpush.bf16.msra.mxu0 %v3563
    %3617 = vmatpush.bf16.msra.mxu0 %v3561
    %3618 = vmatpush.bf16.msra.mxu0 %v3559
    %3619 = vmatpush.bf16.msra.mxu0 %v3557
    %3620 = vmatpush.bf16.msra.mxu0 %v3555
    %3621 = vmatpush.bf16.msra.mxu0 %v3553
    %3622 = vmatmul.bf16.gmra.mxu0 %v3435
    %v3623 = vpop.f32.mrf.mxu0
    %v3624 = vadd.f32 %v3611, %v3623
    %v3625 = vpop.f32.mrf.mxu0
    %3626 = vdwg.mxu0
    %3627 = vmatpush.bf16.msra.mxu0 %v3552
    %3628 = vmatpush.bf16.msra.mxu0 %v3550
    %3629 = vmatpush.bf16.msra.mxu0 %v3548
    %3630 = vmatpush.bf16.msra.mxu0 %v3546
    %3631 = vmatpush.bf16.msra.mxu0 %v3544
    %3632 = vmatpush.bf16.msra.mxu0 %v3542
    %3633 = vmatpush.bf16.msra.mxu0 %v3540
    %3634 = vmatpush.bf16.msra.mxu0 %v3538
    %3635 = vmatmul.bf16.gmra.mxu0 %v3434
    %v3636 = vpop.f32.mrf.mxu0
    %v3637 = vadd.f32 %v3438, %v3636
    %v3638 = vpop.f32.mrf.mxu0
    %3639 = vdwg.mxu0
    %3640 = vmatpush.bf16.msra.mxu0 %v3568
    %3641 = vmatpush.bf16.msra.mxu0 %v3566
    %3642 = vmatpush.bf16.msra.mxu0 %v3564
    %3643 = vmatpush.bf16.msra.mxu0 %v3562
    %3644 = vmatpush.bf16.msra.mxu0 %v3560
    %3645 = vmatpush.bf16.msra.mxu0 %v3558
    %3646 = vmatpush.bf16.msra.mxu0 %v3556
    %3647 = vmatpush.bf16.msra.mxu0 %v3554
    %3648 = vmatmul.bf16.gmra.mxu0 %v3435
    %v3649 = vpop.f32.mrf.mxu0
    %v3650 = vadd.f32 %v3637, %v3649
    %v3651 = vpop.f32.mrf.mxu0
    %3652 = vdwg.mxu0
    %v3653 = vmul.f32 %v3624, 0.01
    %v3654 = vmul.f32 %v3650, 0.01
    %v3655 = vmax.f32 %v3624, %v3653
    %v3656 = vmax.f32 %v3650, %v3654
    %v3657 = vld [vmem:[#allocation30] sm:$0xff]
    %v3658 = vld [vmem:[#allocation30 + $0x8] sm:$0xff]
    %v3659 = vld [vmem:[#allocation30 + $0x10] sm:$0xff]
    %v3660 = vld [vmem:[#allocation30 + $0x18] sm:$0xff]
    %v3661 = vld [vmem:[#allocation30 + $0x20] sm:$0xff]
    %v3662 = vld [vmem:[#allocation30 + $0x28] sm:$0xff]
    %v3663 = vld [vmem:[#allocation30 + $0x30] sm:$0xff]
    %v3664 = vld [vmem:[#allocation30 + $0x38] sm:$0xff]
    %v3665 = vld [vmem:[#allocation30 + $0x40] sm:$0xff]
    %v3666 = vld [vmem:[#allocation30 + $0x48] sm:$0xff]
    %v3667 = vld [vmem:[#allocation30 + $0x50] sm:$0xff]
    %v3668 = vld [vmem:[#allocation30 + $0x58] sm:$0xff]
    %v3669 = vld [vmem:[#allocation30 + $0x60] sm:$0xff]
    %v3670 = vld [vmem:[#allocation30 + $0x68] sm:$0xff]
    %v3671 = vld [vmem:[#allocation30 + $0x70] sm:$0xff]
    %v3672 = vld [vmem:[#allocation30 + $0x78] sm:$0xff]
    %v3673 = vld [vmem:[#allocation30 + $0x80] sm:$0xff]
    %v3674 = vld [vmem:[#allocation30 + $0x88] sm:$0xff]
    %v3675 = vld [vmem:[#allocation30 + $0x90] sm:$0xff]
    %v3676 = vld [vmem:[#allocation30 + $0x98] sm:$0xff]
    %v3677 = vld [vmem:[#allocation30 + $0xa0] sm:$0xff]
    %v3678 = vld [vmem:[#allocation30 + $0xa8] sm:$0xff]
    %v3679 = vld [vmem:[#allocation30 + $0xb0] sm:$0xff]
    %v3680 = vld [vmem:[#allocation30 + $0xb8] sm:$0xff]
    %v3681 = vld [vmem:[#allocation30 + $0xc0] sm:$0xff]
    %v3682 = vld [vmem:[#allocation30 + $0xc8] sm:$0xff]
    %v3683 = vld [vmem:[#allocation30 + $0xd0] sm:$0xff]
    %v3684 = vld [vmem:[#allocation30 + $0xd8] sm:$0xff]
    %v3685 = vld [vmem:[#allocation30 + $0xe0] sm:$0xff]
    %v3686 = vld [vmem:[#allocation30 + $0xe8] sm:$0xff]
    %v3687 = vld [vmem:[#allocation30 + $0xf0] sm:$0xff]
    %v3688 = vld [vmem:[#allocation30 + $0xf8] sm:$0xff]
    %v3689 = vld [vmem:[#allocation31] sm:$0x3]
    %v3690 = vpack.c.bf16 %v3655, %v3655
    %v3691 = vpack.c.bf16 %v3656, %v3656
    %v3693 = vperm.slane %v3689, 0
    %v3694 = vperm.slane %v3689, 1
    %v3729 = vunpack.c.l.b16 %v3657
    %v3730 = vunpack.c.h.b16 %v3657
    %v3731 = vunpack.c.l.b16 %v3658
    %v3732 = vunpack.c.h.b16 %v3658
    %v3733 = vunpack.c.l.b16 %v3659
    %v3734 = vunpack.c.h.b16 %v3659
    %v3735 = vunpack.c.l.b16 %v3660
    %v3736 = vunpack.c.h.b16 %v3660
    %v3737 = vunpack.c.l.b16 %v3661
    %v3738 = vunpack.c.h.b16 %v3661
    %v3739 = vunpack.c.l.b16 %v3662
    %v3740 = vunpack.c.h.b16 %v3662
    %v3741 = vunpack.c.l.b16 %v3663
    %v3742 = vunpack.c.h.b16 %v3663
    %v3743 = vunpack.c.l.b16 %v3664
    %v3744 = vunpack.c.h.b16 %v3664
    %v3745 = vunpack.c.l.b16 %v3665
    %v3746 = vunpack.c.h.b16 %v3665
    %v3747 = vunpack.c.l.b16 %v3666
    %v3748 = vunpack.c.h.b16 %v3666
    %v3749 = vunpack.c.l.b16 %v3667
    %v3750 = vunpack.c.h.b16 %v3667
    %v3751 = vunpack.c.l.b16 %v3668
    %v3752 = vunpack.c.h.b16 %v3668
    %v3753 = vunpack.c.l.b16 %v3669
    %v3754 = vunpack.c.h.b16 %v3669
    %v3755 = vunpack.c.l.b16 %v3670
    %v3756 = vunpack.c.h.b16 %v3670
    %v3757 = vunpack.c.l.b16 %v3671
    %v3758 = vunpack.c.h.b16 %v3671
    %v3759 = vunpack.c.l.b16 %v3672
    %v3760 = vunpack.c.h.b16 %v3672
    %v3761 = vunpack.c.l.b16 %v3673
    %v3762 = vunpack.c.h.b16 %v3673
    %v3763 = vunpack.c.l.b16 %v3674
    %v3764 = vunpack.c.h.b16 %v3674
    %v3765 = vunpack.c.l.b16 %v3675
    %v3766 = vunpack.c.h.b16 %v3675
    %v3767 = vunpack.c.l.b16 %v3676
    %v3768 = vunpack.c.h.b16 %v3676
    %v3769 = vunpack.c.l.b16 %v3677
    %v3770 = vunpack.c.h.b16 %v3677
    %v3771 = vunpack.c.l.b16 %v3678
    %v3772 = vunpack.c.h.b16 %v3678
    %v3773 = vunpack.c.l.b16 %v3679
    %v3774 = vunpack.c.h.b16 %v3679
    %v3775 = vunpack.c.l.b16 %v3680
    %v3776 = vunpack.c.h.b16 %v3680
    %v3777 = vunpack.c.l.b16 %v3681
    %v3778 = vunpack.c.h.b16 %v3681
    %v3779 = vunpack.c.l.b16 %v3682
    %v3780 = vunpack.c.h.b16 %v3682
    %v3781 = vunpack.c.l.b16 %v3683
    %v3782 = vunpack.c.h.b16 %v3683
    %v3783 = vunpack.c.l.b16 %v3684
    %v3784 = vunpack.c.h.b16 %v3684
    %v3785 = vunpack.c.l.b16 %v3685
    %v3786 = vunpack.c.h.b16 %v3685
    %v3787 = vunpack.c.l.b16 %v3686
    %v3788 = vunpack.c.h.b16 %v3686
    %v3789 = vunpack.c.l.b16 %v3687
    %v3790 = vunpack.c.h.b16 %v3687
    %v3791 = vunpack.c.l.b16 %v3688
    %v3792 = vunpack.c.h.b16 %v3688
    %v3793 = vpack.c.b16 %v3731, %v3729
    %v3794 = vpack.c.b16 %v3732, %v3730
    %v3795 = vpack.c.b16 %v3735, %v3733
    %v3796 = vpack.c.b16 %v3736, %v3734
    %v3797 = vpack.c.b16 %v3739, %v3737
    %v3798 = vpack.c.b16 %v3740, %v3738
    %v3799 = vpack.c.b16 %v3743, %v3741
    %v3800 = vpack.c.b16 %v3744, %v3742
    %v3801 = vpack.c.b16 %v3747, %v3745
    %v3802 = vpack.c.b16 %v3748, %v3746
    %v3803 = vpack.c.b16 %v3751, %v3749
    %v3804 = vpack.c.b16 %v3752, %v3750
    %v3805 = vpack.c.b16 %v3755, %v3753
    %v3806 = vpack.c.b16 %v3756, %v3754
    %v3807 = vpack.c.b16 %v3759, %v3757
    %v3808 = vpack.c.b16 %v3760, %v3758
    %v3809 = vpack.c.b16 %v3763, %v3761
    %v3810 = vpack.c.b16 %v3764, %v3762
    %v3811 = vpack.c.b16 %v3767, %v3765
    %v3812 = vpack.c.b16 %v3768, %v3766
    %v3813 = vpack.c.b16 %v3771, %v3769
    %v3814 = vpack.c.b16 %v3772, %v3770
    %v3815 = vpack.c.b16 %v3775, %v3773
    %v3816 = vpack.c.b16 %v3776, %v3774
    %v3817 = vpack.c.b16 %v3779, %v3777
    %v3818 = vpack.c.b16 %v3780, %v3778
    %v3819 = vpack.c.b16 %v3783, %v3781
    %v3820 = vpack.c.b16 %v3784, %v3782
    %v3821 = vpack.c.b16 %v3787, %v3785
    %v3822 = vpack.c.b16 %v3788, %v3786
    %v3823 = vpack.c.b16 %v3791, %v3789
    %v3824 = vpack.c.b16 %v3792, %v3790
    %3857 = vmatpush.bf16.msra.mxu0 %v3807
    %3858 = vmatpush.bf16.msra.mxu0 %v3805
    %3859 = vmatpush.bf16.msra.mxu0 %v3803
    %3860 = vmatpush.bf16.msra.mxu0 %v3801
    %3861 = vmatpush.bf16.msra.mxu0 %v3799
    %3862 = vmatpush.bf16.msra.mxu0 %v3797
    %3863 = vmatpush.bf16.msra.mxu0 %v3795
    %3864 = vmatpush.bf16.msra.mxu0 %v3793
    %3865 = vmatmul.bf16.gmra.mxu0 %v3690
    %v3866 = vpop.f32.mrf.mxu0
    %v3867 = vadd.f32 %v3693, %v3866
    %v3868 = vpop.f32.mrf.mxu0
    %3869 = vdwg.mxu0
    %3870 = vmatpush.bf16.msra.mxu0 %v3823
    %3871 = vmatpush.bf16.msra.mxu0 %v3821
    %3872 = vmatpush.bf16.msra.mxu0 %v3819
    %3873 = vmatpush.bf16.msra.mxu0 %v3817
    %3874 = vmatpush.bf16.msra.mxu0 %v3815
    %3875 = vmatpush.bf16.msra.mxu0 %v3813
    %3876 = vmatpush.bf16.msra.mxu0 %v3811
    %3877 = vmatpush.bf16.msra.mxu0 %v3809
    %3878 = vmatmul.bf16.gmra.mxu0 %v3691
    %v3879 = vpop.f32.mrf.mxu0
    %v3880 = vadd.f32 %v3867, %v3879
    %v3881 = vpop.f32.mrf.mxu0
    %3882 = vdwg.mxu0
    %3883 = vmatpush.bf16.msra.mxu0 %v3808
    %3884 = vmatpush.bf16.msra.mxu0 %v3806
    %3885 = vmatpush.bf16.msra.mxu0 %v3804
    %3886 = vmatpush.bf16.msra.mxu0 %v3802
    %3887 = vmatpush.bf16.msra.mxu0 %v3800
    %3888 = vmatpush.bf16.msra.mxu0 %v3798
    %3889 = vmatpush.bf16.msra.mxu0 %v3796
    %3890 = vmatpush.bf16.msra.mxu0 %v3794
    %3891 = vmatmul.bf16.gmra.mxu0 %v3690
    %v3892 = vpop.f32.mrf.mxu0
    %v3893 = vadd.f32 %v3694, %v3892
    %v3894 = vpop.f32.mrf.mxu0
    %3895 = vdwg.mxu0
    %3896 = vmatpush.bf16.msra.mxu0 %v3824
    %3897 = vmatpush.bf16.msra.mxu0 %v3822
    %3898 = vmatpush.bf16.msra.mxu0 %v3820
    %3899 = vmatpush.bf16.msra.mxu0 %v3818
    %3900 = vmatpush.bf16.msra.mxu0 %v3816
    %3901 = vmatpush.bf16.msra.mxu0 %v3814
    %3902 = vmatpush.bf16.msra.mxu0 %v3812
    %3903 = vmatpush.bf16.msra.mxu0 %v3810
    %3904 = vmatmul.bf16.gmra.mxu0 %v3691
    %v3905 = vpop.f32.mrf.mxu0
    %v3906 = vadd.f32 %v3893, %v3905
    %v3907 = vpop.f32.mrf.mxu0
    %3908 = vdwg.mxu0
    %v3909 = vld [vmem:[#allocation33] sm:$0xff]
    %v3910 = vld [vmem:[#allocation33 + $0x8] sm:$0xff]
    %v3911 = vld [vmem:[#allocation33 + $0x10] sm:$0xff]
    %v3912 = vld [vmem:[#allocation33 + $0x18] sm:$0xff]
    %v3913 = vld [vmem:[#allocation34] sm:$0x3]
    %v3914 = vpack.c.bf16 %v1521, %v1521
    %v3916 = vperm.slane %v3913, 0
    %v3917 = vperm.slane %v3913, 1
    %v3924 = vunpack.c.l.b16 %v3909
    %v3925 = vunpack.c.h.b16 %v3909
    %v3926 = vunpack.c.l.b16 %v3910
    %v3927 = vunpack.c.h.b16 %v3910
    %v3928 = vunpack.c.l.b16 %v3911
    %v3929 = vunpack.c.h.b16 %v3911
    %v3930 = vunpack.c.l.b16 %v3912
    %v3931 = vunpack.c.h.b16 %v3912
    %v3932 = vpack.c.b16 %v3926, %v3924
    %v3933 = vpack.c.b16 %v3927, %v3925
    %v3934 = vpack.c.b16 %v3930, %v3928
    %v3935 = vpack.c.b16 %v3931, %v3929
    %v3941 = vsel %vm1532, %v3914, 0
    %3943 = vmatpush.bf16.msra.mxu0 0
    %3944 = vmatpush.bf16.msra.mxu0 0
    %3945 = vmatpush.bf16.msra.mxu0 0
    %3946 = vmatpush.bf16.msra.mxu0 0
    %3947 = vmatpush.bf16.msra.mxu0 0
    %3948 = vmatpush.bf16.msra.mxu0 0
    %3949 = vmatpush.bf16.msra.mxu0 %v3934
    %3950 = vmatpush.bf16.msra.mxu0 %v3932
    %3951 = vmatmul.bf16.gmra.mxu0 %v3941
    %v3952 = vpop.f32.mrf.mxu0
    %v3953 = vadd.f32 %v3916, %v3952
    %v3954 = vpop.f32.mrf.mxu0
    %3955 = vdwg.mxu0
    %3956 = vmatpush.bf16.msra.mxu0 0
    %3957 = vmatpush.bf16.msra.mxu0 0
    %3958 = vmatpush.bf16.msra.mxu0 0
    %3959 = vmatpush.bf16.msra.mxu0 0
    %3960 = vmatpush.bf16.msra.mxu0 0
    %3961 = vmatpush.bf16.msra.mxu0 0
    %3962 = vmatpush.bf16.msra.mxu0 %v3935
    %3963 = vmatpush.bf16.msra.mxu0 %v3933
    %3964 = vmatmul.bf16.gmra.mxu0 %v3941
    %v3965 = vpop.f32.mrf.mxu0
    %v3966 = vadd.f32 %v3917, %v3965
    %v3967 = vpop.f32.mrf.mxu0
    %3968 = vdwg.mxu0
    %v3969 = vmul.f32 %v3953, 0.01
    %v3970 = vmul.f32 %v3966, 0.01
    %v3971 = vmax.f32 %v3953, %v3969
    %v3972 = vmax.f32 %v3966, %v3970
    %v3973 = vld [vmem:[#allocation36] sm:$0xff]
    %v3974 = vld [vmem:[#allocation36 + $0x8] sm:$0xff]
    %v3975 = vld [vmem:[#allocation36 + $0x10] sm:$0xff]
    %v3976 = vld [vmem:[#allocation36 + $0x18] sm:$0xff]
    %v3977 = vld [vmem:[#allocation36 + $0x20] sm:$0xff]
    %v3978 = vld [vmem:[#allocation36 + $0x28] sm:$0xff]
    %v3979 = vld [vmem:[#allocation36 + $0x30] sm:$0xff]
    %v3980 = vld [vmem:[#allocation36 + $0x38] sm:$0xff]
    %v3981 = vld [vmem:[#allocation36 + $0x40] sm:$0xff]
    %v3982 = vld [vmem:[#allocation36 + $0x48] sm:$0xff]
    %v3983 = vld [vmem:[#allocation36 + $0x50] sm:$0xff]
    %v3984 = vld [vmem:[#allocation36 + $0x58] sm:$0xff]
    %v3985 = vld [vmem:[#allocation36 + $0x60] sm:$0xff]
    %v3986 = vld [vmem:[#allocation36 + $0x68] sm:$0xff]
    %v3987 = vld [vmem:[#allocation36 + $0x70] sm:$0xff]
    %v3988 = vld [vmem:[#allocation36 + $0x78] sm:$0xff]
    %v3989 = vld [vmem:[#allocation36 + $0x80] sm:$0xff]
    %v3990 = vld [vmem:[#allocation36 + $0x88] sm:$0xff]
    %v3991 = vld [vmem:[#allocation36 + $0x90] sm:$0xff]
    %v3992 = vld [vmem:[#allocation36 + $0x98] sm:$0xff]
    %v3993 = vld [vmem:[#allocation36 + $0xa0] sm:$0xff]
    %v3994 = vld [vmem:[#allocation36 + $0xa8] sm:$0xff]
    %v3995 = vld [vmem:[#allocation36 + $0xb0] sm:$0xff]
    %v3996 = vld [vmem:[#allocation36 + $0xb8] sm:$0xff]
    %v3997 = vld [vmem:[#allocation36 + $0xc0] sm:$0xff]
    %v3998 = vld [vmem:[#allocation36 + $0xc8] sm:$0xff]
    %v3999 = vld [vmem:[#allocation36 + $0xd0] sm:$0xff]
    %v4000 = vld [vmem:[#allocation36 + $0xd8] sm:$0xff]
    %v4001 = vld [vmem:[#allocation36 + $0xe0] sm:$0xff]
    %v4002 = vld [vmem:[#allocation36 + $0xe8] sm:$0xff]
    %v4003 = vld [vmem:[#allocation36 + $0xf0] sm:$0xff]
    %v4004 = vld [vmem:[#allocation36 + $0xf8] sm:$0xff]
    %v4005 = vld [vmem:[#allocation37] sm:$0x3]
    %v4006 = vpack.c.bf16 %v3971, %v3971
    %v4007 = vpack.c.bf16 %v3972, %v3972
    %v4009 = vperm.slane %v4005, 0
    %v4010 = vperm.slane %v4005, 1
    %v4045 = vunpack.c.l.b16 %v3973
    %v4046 = vunpack.c.h.b16 %v3973
    %v4047 = vunpack.c.l.b16 %v3974
    %v4048 = vunpack.c.h.b16 %v3974
    %v4049 = vunpack.c.l.b16 %v3975
    %v4050 = vunpack.c.h.b16 %v3975
    %v4051 = vunpack.c.l.b16 %v3976
    %v4052 = vunpack.c.h.b16 %v3976
    %v4053 = vunpack.c.l.b16 %v3977
    %v4054 = vunpack.c.h.b16 %v3977
    %v4055 = vunpack.c.l.b16 %v3978
    %v4056 = vunpack.c.h.b16 %v3978
    %v4057 = vunpack.c.l.b16 %v3979
    %v4058 = vunpack.c.h.b16 %v3979
    %v4059 = vunpack.c.l.b16 %v3980
    %v4060 = vunpack.c.h.b16 %v3980
    %v4061 = vunpack.c.l.b16 %v3981
    %v4062 = vunpack.c.h.b16 %v3981
    %v4063 = vunpack.c.l.b16 %v3982
    %v4064 = vunpack.c.h.b16 %v3982
    %v4065 = vunpack.c.l.b16 %v3983
    %v4066 = vunpack.c.h.b16 %v3983
    %v4067 = vunpack.c.l.b16 %v3984
    %v4068 = vunpack.c.h.b16 %v3984
    %v4069 = vunpack.c.l.b16 %v3985
    %v4070 = vunpack.c.h.b16 %v3985
    %v4071 = vunpack.c.l.b16 %v3986
    %v4072 = vunpack.c.h.b16 %v3986
    %v4073 = vunpack.c.l.b16 %v3987
    %v4074 = vunpack.c.h.b16 %v3987
    %v4075 = vunpack.c.l.b16 %v3988
    %v4076 = vunpack.c.h.b16 %v3988
    %v4077 = vunpack.c.l.b16 %v3989
    %v4078 = vunpack.c.h.b16 %v3989
    %v4079 = vunpack.c.l.b16 %v3990
    %v4080 = vunpack.c.h.b16 %v3990
    %v4081 = vunpack.c.l.b16 %v3991
    %v4082 = vunpack.c.h.b16 %v3991
    %v4083 = vunpack.c.l.b16 %v3992
    %v4084 = vunpack.c.h.b16 %v3992
    %v4085 = vunpack.c.l.b16 %v3993
    %v4086 = vunpack.c.h.b16 %v3993
    %v4087 = vunpack.c.l.b16 %v3994
    %v4088 = vunpack.c.h.b16 %v3994
    %v4089 = vunpack.c.l.b16 %v3995
    %v4090 = vunpack.c.h.b16 %v3995
    %v4091 = vunpack.c.l.b16 %v3996
    %v4092 = vunpack.c.h.b16 %v3996
    %v4093 = vunpack.c.l.b16 %v3997
    %v4094 = vunpack.c.h.b16 %v3997
    %v4095 = vunpack.c.l.b16 %v3998
    %v4096 = vunpack.c.h.b16 %v3998
    %v4097 = vunpack.c.l.b16 %v3999
    %v4098 = vunpack.c.h.b16 %v3999
    %v4099 = vunpack.c.l.b16 %v4000
    %v4100 = vunpack.c.h.b16 %v4000
    %v4101 = vunpack.c.l.b16 %v4001
    %v4102 = vunpack.c.h.b16 %v4001
    %v4103 = vunpack.c.l.b16 %v4002
    %v4104 = vunpack.c.h.b16 %v4002
    %v4105 = vunpack.c.l.b16 %v4003
    %v4106 = vunpack.c.h.b16 %v4003
    %v4107 = vunpack.c.l.b16 %v4004
    %v4108 = vunpack.c.h.b16 %v4004
    %v4109 = vpack.c.b16 %v4047, %v4045
    %v4110 = vpack.c.b16 %v4048, %v4046
    %v4111 = vpack.c.b16 %v4051, %v4049
    %v4112 = vpack.c.b16 %v4052, %v4050
    %v4113 = vpack.c.b16 %v4055, %v4053
    %v4114 = vpack.c.b16 %v4056, %v4054
    %v4115 = vpack.c.b16 %v4059, %v4057
    %v4116 = vpack.c.b16 %v4060, %v4058
    %v4117 = vpack.c.b16 %v4063, %v4061
    %v4118 = vpack.c.b16 %v4064, %v4062
    %v4119 = vpack.c.b16 %v4067, %v4065
    %v4120 = vpack.c.b16 %v4068, %v4066
    %v4121 = vpack.c.b16 %v4071, %v4069
    %v4122 = vpack.c.b16 %v4072, %v4070
    %v4123 = vpack.c.b16 %v4075, %v4073
    %v4124 = vpack.c.b16 %v4076, %v4074
    %v4125 = vpack.c.b16 %v4079, %v4077
    %v4126 = vpack.c.b16 %v4080, %v4078
    %v4127 = vpack.c.b16 %v4083, %v4081
    %v4128 = vpack.c.b16 %v4084, %v4082
    %v4129 = vpack.c.b16 %v4087, %v4085
    %v4130 = vpack.c.b16 %v4088, %v4086
    %v4131 = vpack.c.b16 %v4091, %v4089
    %v4132 = vpack.c.b16 %v4092, %v4090
    %v4133 = vpack.c.b16 %v4095, %v4093
    %v4134 = vpack.c.b16 %v4096, %v4094
    %v4135 = vpack.c.b16 %v4099, %v4097
    %v4136 = vpack.c.b16 %v4100, %v4098
    %v4137 = vpack.c.b16 %v4103, %v4101
    %v4138 = vpack.c.b16 %v4104, %v4102
    %v4139 = vpack.c.b16 %v4107, %v4105
    %v4140 = vpack.c.b16 %v4108, %v4106
    %4173 = vmatpush.bf16.msra.mxu0 %v4123
    %4174 = vmatpush.bf16.msra.mxu0 %v4121
    %4175 = vmatpush.bf16.msra.mxu0 %v4119
    %4176 = vmatpush.bf16.msra.mxu0 %v4117
    %4177 = vmatpush.bf16.msra.mxu0 %v4115
    %4178 = vmatpush.bf16.msra.mxu0 %v4113
    %4179 = vmatpush.bf16.msra.mxu0 %v4111
    %4180 = vmatpush.bf16.msra.mxu0 %v4109
    %4181 = vmatmul.bf16.gmra.mxu0 %v4006
    %v4182 = vpop.f32.mrf.mxu0
    %v4183 = vadd.f32 %v4009, %v4182
    %v4184 = vpop.f32.mrf.mxu0
    %4185 = vdwg.mxu0
    %4186 = vmatpush.bf16.msra.mxu0 %v4139
    %4187 = vmatpush.bf16.msra.mxu0 %v4137
    %4188 = vmatpush.bf16.msra.mxu0 %v4135
    %4189 = vmatpush.bf16.msra.mxu0 %v4133
    %4190 = vmatpush.bf16.msra.mxu0 %v4131
    %4191 = vmatpush.bf16.msra.mxu0 %v4129
    %4192 = vmatpush.bf16.msra.mxu0 %v4127
    %4193 = vmatpush.bf16.msra.mxu0 %v4125
    %4194 = vmatmul.bf16.gmra.mxu0 %v4007
    %v4195 = vpop.f32.mrf.mxu0
    %v4196 = vadd.f32 %v4183, %v4195
    %v4197 = vpop.f32.mrf.mxu0
    %4198 = vdwg.mxu0
    %4199 = vmatpush.bf16.msra.mxu0 %v4124
    %4200 = vmatpush.bf16.msra.mxu0 %v4122
    %4201 = vmatpush.bf16.msra.mxu0 %v4120
    %4202 = vmatpush.bf16.msra.mxu0 %v4118
    %4203 = vmatpush.bf16.msra.mxu0 %v4116
    %4204 = vmatpush.bf16.msra.mxu0 %v4114
    %4205 = vmatpush.bf16.msra.mxu0 %v4112
    %4206 = vmatpush.bf16.msra.mxu0 %v4110
    %4207 = vmatmul.bf16.gmra.mxu0 %v4006
    %v4208 = vpop.f32.mrf.mxu0
    %v4209 = vadd.f32 %v4010, %v4208
    %v4210 = vpop.f32.mrf.mxu0
    %4211 = vdwg.mxu0
    %4212 = vmatpush.bf16.msra.mxu0 %v4140
    %4213 = vmatpush.bf16.msra.mxu0 %v4138
    %4214 = vmatpush.bf16.msra.mxu0 %v4136
    %4215 = vmatpush.bf16.msra.mxu0 %v4134
    %4216 = vmatpush.bf16.msra.mxu0 %v4132
    %4217 = vmatpush.bf16.msra.mxu0 %v4130
    %4218 = vmatpush.bf16.msra.mxu0 %v4128
    %4219 = vmatpush.bf16.msra.mxu0 %v4126
    %4220 = vmatmul.bf16.gmra.mxu0 %v4007
    %v4221 = vpop.f32.mrf.mxu0
    %v4222 = vadd.f32 %v4209, %v4221
    %v4223 = vpop.f32.mrf.mxu0
    %4224 = vdwg.mxu0
    %v4225 = vmul.f32 %v4196, 0.01
    %v4226 = vmul.f32 %v4222, 0.01
    %v4227 = vmax.f32 %v4196, %v4225
    %v4228 = vmax.f32 %v4222, %v4226
    %v4229 = vld [vmem:[#allocation39] sm:$0xff]
    %v4230 = vld [vmem:[#allocation39 + $0x8] sm:$0xff]
    %v4231 = vld [vmem:[#allocation39 + $0x10] sm:$0xff]
    %v4232 = vld [vmem:[#allocation39 + $0x18] sm:$0xff]
    %v4233 = vld [vmem:[#allocation39 + $0x20] sm:$0xff]
    %v4234 = vld [vmem:[#allocation39 + $0x28] sm:$0xff]
    %v4235 = vld [vmem:[#allocation39 + $0x30] sm:$0xff]
    %v4236 = vld [vmem:[#allocation39 + $0x38] sm:$0xff]
    %v4237 = vld [vmem:[#allocation39 + $0x40] sm:$0xff]
    %v4238 = vld [vmem:[#allocation39 + $0x48] sm:$0xff]
    %v4239 = vld [vmem:[#allocation39 + $0x50] sm:$0xff]
    %v4240 = vld [vmem:[#allocation39 + $0x58] sm:$0xff]
    %v4241 = vld [vmem:[#allocation39 + $0x60] sm:$0xff]
    %v4242 = vld [vmem:[#allocation39 + $0x68] sm:$0xff]
    %v4243 = vld [vmem:[#allocation39 + $0x70] sm:$0xff]
    %v4244 = vld [vmem:[#allocation39 + $0x78] sm:$0xff]
    %v4245 = vld [vmem:[#allocation39 + $0x80] sm:$0xff]
    %v4246 = vld [vmem:[#allocation39 + $0x88] sm:$0xff]
    %v4247 = vld [vmem:[#allocation39 + $0x90] sm:$0xff]
    %v4248 = vld [vmem:[#allocation39 + $0x98] sm:$0xff]
    %v4249 = vld [vmem:[#allocation39 + $0xa0] sm:$0xff]
    %v4250 = vld [vmem:[#allocation39 + $0xa8] sm:$0xff]
    %v4251 = vld [vmem:[#allocation39 + $0xb0] sm:$0xff]
    %v4252 = vld [vmem:[#allocation39 + $0xb8] sm:$0xff]
    %v4253 = vld [vmem:[#allocation39 + $0xc0] sm:$0xff]
    %v4254 = vld [vmem:[#allocation39 + $0xc8] sm:$0xff]
    %v4255 = vld [vmem:[#allocation39 + $0xd0] sm:$0xff]
    %v4256 = vld [vmem:[#allocation39 + $0xd8] sm:$0xff]
    %v4257 = vld [vmem:[#allocation39 + $0xe0] sm:$0xff]
    %v4258 = vld [vmem:[#allocation39 + $0xe8] sm:$0xff]
    %v4259 = vld [vmem:[#allocation39 + $0xf0] sm:$0xff]
    %v4260 = vld [vmem:[#allocation39 + $0xf8] sm:$0xff]
    %v4261 = vld [vmem:[#allocation40] sm:$0x3]
    %v4262 = vpack.c.bf16 %v4227, %v4227
    %v4263 = vpack.c.bf16 %v4228, %v4228
    %v4265 = vperm.slane %v4261, 0
    %v4266 = vperm.slane %v4261, 1
    %v4301 = vunpack.c.l.b16 %v4229
    %v4302 = vunpack.c.h.b16 %v4229
    %v4303 = vunpack.c.l.b16 %v4230
    %v4304 = vunpack.c.h.b16 %v4230
    %v4305 = vunpack.c.l.b16 %v4231
    %v4306 = vunpack.c.h.b16 %v4231
    %v4307 = vunpack.c.l.b16 %v4232
    %v4308 = vunpack.c.h.b16 %v4232
    %v4309 = vunpack.c.l.b16 %v4233
    %v4310 = vunpack.c.h.b16 %v4233
    %v4311 = vunpack.c.l.b16 %v4234
    %v4312 = vunpack.c.h.b16 %v4234
    %v4313 = vunpack.c.l.b16 %v4235
    %v4314 = vunpack.c.h.b16 %v4235
    %v4315 = vunpack.c.l.b16 %v4236
    %v4316 = vunpack.c.h.b16 %v4236
    %v4317 = vunpack.c.l.b16 %v4237
    %v4318 = vunpack.c.h.b16 %v4237
    %v4319 = vunpack.c.l.b16 %v4238
    %v4320 = vunpack.c.h.b16 %v4238
    %v4321 = vunpack.c.l.b16 %v4239
    %v4322 = vunpack.c.h.b16 %v4239
    %v4323 = vunpack.c.l.b16 %v4240
    %v4324 = vunpack.c.h.b16 %v4240
    %v4325 = vunpack.c.l.b16 %v4241
    %v4326 = vunpack.c.h.b16 %v4241
    %v4327 = vunpack.c.l.b16 %v4242
    %v4328 = vunpack.c.h.b16 %v4242
    %v4329 = vunpack.c.l.b16 %v4243
    %v4330 = vunpack.c.h.b16 %v4243
    %v4331 = vunpack.c.l.b16 %v4244
    %v4332 = vunpack.c.h.b16 %v4244
    %v4333 = vunpack.c.l.b16 %v4245
    %v4334 = vunpack.c.h.b16 %v4245
    %v4335 = vunpack.c.l.b16 %v4246
    %v4336 = vunpack.c.h.b16 %v4246
    %v4337 = vunpack.c.l.b16 %v4247
    %v4338 = vunpack.c.h.b16 %v4247
    %v4339 = vunpack.c.l.b16 %v4248
    %v4340 = vunpack.c.h.b16 %v4248
    %v4341 = vunpack.c.l.b16 %v4249
    %v4342 = vunpack.c.h.b16 %v4249
    %v4343 = vunpack.c.l.b16 %v4250
    %v4344 = vunpack.c.h.b16 %v4250
    %v4345 = vunpack.c.l.b16 %v4251
    %v4346 = vunpack.c.h.b16 %v4251
    %v4347 = vunpack.c.l.b16 %v4252
    %v4348 = vunpack.c.h.b16 %v4252
    %v4349 = vunpack.c.l.b16 %v4253
    %v4350 = vunpack.c.h.b16 %v4253
    %v4351 = vunpack.c.l.b16 %v4254
    %v4352 = vunpack.c.h.b16 %v4254
    %v4353 = vunpack.c.l.b16 %v4255
    %v4354 = vunpack.c.h.b16 %v4255
    %v4355 = vunpack.c.l.b16 %v4256
    %v4356 = vunpack.c.h.b16 %v4256
    %v4357 = vunpack.c.l.b16 %v4257
    %v4358 = vunpack.c.h.b16 %v4257
    %v4359 = vunpack.c.l.b16 %v4258
    %v4360 = vunpack.c.h.b16 %v4258
    %v4361 = vunpack.c.l.b16 %v4259
    %v4362 = vunpack.c.h.b16 %v4259
    %v4363 = vunpack.c.l.b16 %v4260
    %v4364 = vunpack.c.h.b16 %v4260
    %v4365 = vpack.c.b16 %v4303, %v4301
    %v4366 = vpack.c.b16 %v4304, %v4302
    %v4367 = vpack.c.b16 %v4307, %v4305
    %v4368 = vpack.c.b16 %v4308, %v4306
    %v4369 = vpack.c.b16 %v4311, %v4309
    %v4370 = vpack.c.b16 %v4312, %v4310
    %v4371 = vpack.c.b16 %v4315, %v4313
    %v4372 = vpack.c.b16 %v4316, %v4314
    %v4373 = vpack.c.b16 %v4319, %v4317
    %v4374 = vpack.c.b16 %v4320, %v4318
    %v4375 = vpack.c.b16 %v4323, %v4321
    %v4376 = vpack.c.b16 %v4324, %v4322
    %v4377 = vpack.c.b16 %v4327, %v4325
    %v4378 = vpack.c.b16 %v4328, %v4326
    %v4379 = vpack.c.b16 %v4331, %v4329
    %v4380 = vpack.c.b16 %v4332, %v4330
    %v4381 = vpack.c.b16 %v4335, %v4333
    %v4382 = vpack.c.b16 %v4336, %v4334
    %v4383 = vpack.c.b16 %v4339, %v4337
    %v4384 = vpack.c.b16 %v4340, %v4338
    %v4385 = vpack.c.b16 %v4343, %v4341
    %v4386 = vpack.c.b16 %v4344, %v4342
    %v4387 = vpack.c.b16 %v4347, %v4345
    %v4388 = vpack.c.b16 %v4348, %v4346
    %v4389 = vpack.c.b16 %v4351, %v4349
    %v4390 = vpack.c.b16 %v4352, %v4350
    %v4391 = vpack.c.b16 %v4355, %v4353
    %v4392 = vpack.c.b16 %v4356, %v4354
    %v4393 = vpack.c.b16 %v4359, %v4357
    %v4394 = vpack.c.b16 %v4360, %v4358
    %v4395 = vpack.c.b16 %v4363, %v4361
    %v4396 = vpack.c.b16 %v4364, %v4362
    %4429 = vmatpush.bf16.msra.mxu0 %v4379
    %4430 = vmatpush.bf16.msra.mxu0 %v4377
    %4431 = vmatpush.bf16.msra.mxu0 %v4375
    %4432 = vmatpush.bf16.msra.mxu0 %v4373
    %4433 = vmatpush.bf16.msra.mxu0 %v4371
    %4434 = vmatpush.bf16.msra.mxu0 %v4369
    %4435 = vmatpush.bf16.msra.mxu0 %v4367
    %4436 = vmatpush.bf16.msra.mxu0 %v4365
    %4437 = vmatmul.bf16.gmra.mxu0 %v4262
    %v4438 = vpop.f32.mrf.mxu0
    %v4439 = vadd.f32 %v4265, %v4438
    %v4440 = vpop.f32.mrf.mxu0
    %4441 = vdwg.mxu0
    %4442 = vmatpush.bf16.msra.mxu0 %v4395
    %4443 = vmatpush.bf16.msra.mxu0 %v4393
    %4444 = vmatpush.bf16.msra.mxu0 %v4391
    %4445 = vmatpush.bf16.msra.mxu0 %v4389
    %4446 = vmatpush.bf16.msra.mxu0 %v4387
    %4447 = vmatpush.bf16.msra.mxu0 %v4385
    %4448 = vmatpush.bf16.msra.mxu0 %v4383
    %4449 = vmatpush.bf16.msra.mxu0 %v4381
    %4450 = vmatmul.bf16.gmra.mxu0 %v4263
    %v4451 = vpop.f32.mrf.mxu0
    %v4452 = vadd.f32 %v4439, %v4451
    %v4453 = vpop.f32.mrf.mxu0
    %4454 = vdwg.mxu0
    %4455 = vmatpush.bf16.msra.mxu0 %v4380
    %4456 = vmatpush.bf16.msra.mxu0 %v4378
    %4457 = vmatpush.bf16.msra.mxu0 %v4376
    %4458 = vmatpush.bf16.msra.mxu0 %v4374
    %4459 = vmatpush.bf16.msra.mxu0 %v4372
    %4460 = vmatpush.bf16.msra.mxu0 %v4370
    %4461 = vmatpush.bf16.msra.mxu0 %v4368
    %4462 = vmatpush.bf16.msra.mxu0 %v4366
    %4463 = vmatmul.bf16.gmra.mxu0 %v4262
    %v4464 = vpop.f32.mrf.mxu0
    %v4465 = vadd.f32 %v4266, %v4464
    %v4466 = vpop.f32.mrf.mxu0
    %4467 = vdwg.mxu0
    %4468 = vmatpush.bf16.msra.mxu0 %v4396
    %4469 = vmatpush.bf16.msra.mxu0 %v4394
    %4470 = vmatpush.bf16.msra.mxu0 %v4392
    %4471 = vmatpush.bf16.msra.mxu0 %v4390
    %4472 = vmatpush.bf16.msra.mxu0 %v4388
    %4473 = vmatpush.bf16.msra.mxu0 %v4386
    %4474 = vmatpush.bf16.msra.mxu0 %v4384
    %4475 = vmatpush.bf16.msra.mxu0 %v4382
    %4476 = vmatmul.bf16.gmra.mxu0 %v4263
    %v4477 = vpop.f32.mrf.mxu0
    %v4478 = vadd.f32 %v4465, %v4477
    %v4479 = vpop.f32.mrf.mxu0
    %4480 = vdwg.mxu0
    %v4481 = vmul.f32 %v4452, 0.01
    %v4482 = vmul.f32 %v4478, 0.01
    %v4483 = vmax.f32 %v4452, %v4481
    %v4484 = vmax.f32 %v4478, %v4482
    %v4485 = vld [vmem:[#allocation42] sm:$0xff]
    %v4486 = vld [vmem:[#allocation42 + $0x8] sm:$0xff]
    %v4487 = vld [vmem:[#allocation42 + $0x10] sm:$0xff]
    %v4488 = vld [vmem:[#allocation42 + $0x18] sm:$0xff]
    %v4489 = vld [vmem:[#allocation42 + $0x20] sm:$0xff]
    %v4490 = vld [vmem:[#allocation42 + $0x28] sm:$0xff]
    %v4491 = vld [vmem:[#allocation42 + $0x30] sm:$0xff]
    %v4492 = vld [vmem:[#allocation42 + $0x38] sm:$0xff]
    %v4493 = vld [vmem:[#allocation42 + $0x40] sm:$0xff]
    %v4494 = vld [vmem:[#allocation42 + $0x48] sm:$0xff]
    %v4495 = vld [vmem:[#allocation42 + $0x50] sm:$0xff]
    %v4496 = vld [vmem:[#allocation42 + $0x58] sm:$0xff]
    %v4497 = vld [vmem:[#allocation42 + $0x60] sm:$0xff]
    %v4498 = vld [vmem:[#allocation42 + $0x68] sm:$0xff]
    %v4499 = vld [vmem:[#allocation42 + $0x70] sm:$0xff]
    %v4500 = vld [vmem:[#allocation42 + $0x78] sm:$0xff]
    %v4501 = vld [vmem:[#allocation42 + $0x80] sm:$0xff]
    %v4502 = vld [vmem:[#allocation42 + $0x88] sm:$0xff]
    %v4503 = vld [vmem:[#allocation42 + $0x90] sm:$0xff]
    %v4504 = vld [vmem:[#allocation42 + $0x98] sm:$0xff]
    %v4505 = vld [vmem:[#allocation42 + $0xa0] sm:$0xff]
    %v4506 = vld [vmem:[#allocation42 + $0xa8] sm:$0xff]
    %v4507 = vld [vmem:[#allocation42 + $0xb0] sm:$0xff]
    %v4508 = vld [vmem:[#allocation42 + $0xb8] sm:$0xff]
    %v4509 = vld [vmem:[#allocation42 + $0xc0] sm:$0xff]
    %v4510 = vld [vmem:[#allocation42 + $0xc8] sm:$0xff]
    %v4511 = vld [vmem:[#allocation42 + $0xd0] sm:$0xff]
    %v4512 = vld [vmem:[#allocation42 + $0xd8] sm:$0xff]
    %v4513 = vld [vmem:[#allocation42 + $0xe0] sm:$0xff]
    %v4514 = vld [vmem:[#allocation42 + $0xe8] sm:$0xff]
    %v4515 = vld [vmem:[#allocation42 + $0xf0] sm:$0xff]
    %v4516 = vld [vmem:[#allocation42 + $0xf8] sm:$0xff]
    %v4517 = vld [vmem:[#allocation42 + $0x100] sm:$0xff]
    %v4518 = vld [vmem:[#allocation42 + $0x108] sm:$0xff]
    %v4519 = vld [vmem:[#allocation42 + $0x110] sm:$0xff]
    %v4520 = vld [vmem:[#allocation42 + $0x118] sm:$0xff]
    %v4521 = vld [vmem:[#allocation42 + $0x120] sm:$0xff]
    %v4522 = vld [vmem:[#allocation42 + $0x128] sm:$0xff]
    %v4523 = vld [vmem:[#allocation42 + $0x130] sm:$0xff]
    %v4524 = vld [vmem:[#allocation42 + $0x138] sm:$0xff]
    %v4525 = vld [vmem:[#allocation42 + $0x140] sm:$0xff]
    %v4526 = vld [vmem:[#allocation42 + $0x148] sm:$0xff]
    %v4527 = vld [vmem:[#allocation42 + $0x150] sm:$0xff]
    %v4528 = vld [vmem:[#allocation42 + $0x158] sm:$0xff]
    %v4529 = vld [vmem:[#allocation42 + $0x160] sm:$0xff]
    %v4530 = vld [vmem:[#allocation42 + $0x168] sm:$0xff]
    %v4531 = vld [vmem:[#allocation42 + $0x170] sm:$0xff]
    %v4532 = vld [vmem:[#allocation42 + $0x178] sm:$0xff]
    %v4533 = vld [vmem:[#allocation42 + $0x180] sm:$0xff]
    %v4534 = vld [vmem:[#allocation42 + $0x188] sm:$0xff]
    %v4535 = vld [vmem:[#allocation42 + $0x190] sm:$0xff]
    %v4536 = vld [vmem:[#allocation42 + $0x198] sm:$0xff]
    %v4537 = vld [vmem:[#allocation42 + $0x1a0] sm:$0xff]
    %v4538 = vld [vmem:[#allocation42 + $0x1a8] sm:$0xff]
    %v4539 = vld [vmem:[#allocation42 + $0x1b0] sm:$0xff]
    %v4540 = vld [vmem:[#allocation42 + $0x1b8] sm:$0xff]
    %v4541 = vld [vmem:[#allocation42 + $0x1c0] sm:$0xff]
    %v4542 = vld [vmem:[#allocation42 + $0x1c8] sm:$0xff]
    %v4543 = vld [vmem:[#allocation42 + $0x1d0] sm:$0xff]
    %v4544 = vld [vmem:[#allocation42 + $0x1d8] sm:$0xff]
    %v4545 = vld [vmem:[#allocation42 + $0x1e0] sm:$0xff]
    %v4546 = vld [vmem:[#allocation42 + $0x1e8] sm:$0xff]
    %v4547 = vld [vmem:[#allocation42 + $0x1f0] sm:$0xff]
    %v4548 = vld [vmem:[#allocation42 + $0x1f8] sm:$0xff]
    %v4549 = vld [vmem:[%s85] sm:$0xf]
    %v4550 = vpack.c.bf16 %v4483, %v4483
    %v4551 = vpack.c.bf16 %v4484, %v4484
    %v4553 = vperm.slane %v4549, 0
    %v4554 = vperm.slane %v4549, 1
    %v4555 = vperm.slane %v4549, 2
    %v4556 = vperm.slane %v4549, 3
    %v4625 = vunpack.c.l.b16 %v4485
    %v4626 = vunpack.c.h.b16 %v4485
    %v4627 = vunpack.c.l.b16 %v4486
    %v4628 = vunpack.c.h.b16 %v4486
    %v4629 = vunpack.c.l.b16 %v4487
    %v4630 = vunpack.c.h.b16 %v4487
    %v4631 = vunpack.c.l.b16 %v4488
    %v4632 = vunpack.c.h.b16 %v4488
    %v4633 = vunpack.c.l.b16 %v4489
    %v4634 = vunpack.c.h.b16 %v4489
    %v4635 = vunpack.c.l.b16 %v4490
    %v4636 = vunpack.c.h.b16 %v4490
    %v4637 = vunpack.c.l.b16 %v4491
    %v4638 = vunpack.c.h.b16 %v4491
    %v4639 = vunpack.c.l.b16 %v4492
    %v4640 = vunpack.c.h.b16 %v4492
    %v4641 = vunpack.c.l.b16 %v4493
    %v4642 = vunpack.c.h.b16 %v4493
    %v4643 = vunpack.c.l.b16 %v4494
    %v4644 = vunpack.c.h.b16 %v4494
    %v4645 = vunpack.c.l.b16 %v4495
    %v4646 = vunpack.c.h.b16 %v4495
    %v4647 = vunpack.c.l.b16 %v4496
    %v4648 = vunpack.c.h.b16 %v4496
    %v4649 = vunpack.c.l.b16 %v4497
    %v4650 = vunpack.c.h.b16 %v4497
    %v4651 = vunpack.c.l.b16 %v4498
    %v4652 = vunpack.c.h.b16 %v4498
    %v4653 = vunpack.c.l.b16 %v4499
    %v4654 = vunpack.c.h.b16 %v4499
    %v4655 = vunpack.c.l.b16 %v4500
    %v4656 = vunpack.c.h.b16 %v4500
    %v4657 = vunpack.c.l.b16 %v4501
    %v4658 = vunpack.c.h.b16 %v4501
    %v4659 = vunpack.c.l.b16 %v4502
    %v4660 = vunpack.c.h.b16 %v4502
    %v4661 = vunpack.c.l.b16 %v4503
    %v4662 = vunpack.c.h.b16 %v4503
    %v4663 = vunpack.c.l.b16 %v4504
    %v4664 = vunpack.c.h.b16 %v4504
    %v4665 = vunpack.c.l.b16 %v4505
    %v4666 = vunpack.c.h.b16 %v4505
    %v4667 = vunpack.c.l.b16 %v4506
    %v4668 = vunpack.c.h.b16 %v4506
    %v4669 = vunpack.c.l.b16 %v4507
    %v4670 = vunpack.c.h.b16 %v4507
    %v4671 = vunpack.c.l.b16 %v4508
    %v4672 = vunpack.c.h.b16 %v4508
    %v4673 = vunpack.c.l.b16 %v4509
    %v4674 = vunpack.c.h.b16 %v4509
    %v4675 = vunpack.c.l.b16 %v4510
    %v4676 = vunpack.c.h.b16 %v4510
    %v4677 = vunpack.c.l.b16 %v4511
    %v4678 = vunpack.c.h.b16 %v4511
    %v4679 = vunpack.c.l.b16 %v4512
    %v4680 = vunpack.c.h.b16 %v4512
    %v4681 = vunpack.c.l.b16 %v4513
    %v4682 = vunpack.c.h.b16 %v4513
    %v4683 = vunpack.c.l.b16 %v4514
    %v4684 = vunpack.c.h.b16 %v4514
    %v4685 = vunpack.c.l.b16 %v4515
    %v4686 = vunpack.c.h.b16 %v4515
    %v4687 = vunpack.c.l.b16 %v4516
    %v4688 = vunpack.c.h.b16 %v4516
    %v4689 = vunpack.c.l.b16 %v4517
    %v4690 = vunpack.c.h.b16 %v4517
    %v4691 = vunpack.c.l.b16 %v4518
    %v4692 = vunpack.c.h.b16 %v4518
    %v4693 = vunpack.c.l.b16 %v4519
    %v4694 = vunpack.c.h.b16 %v4519
    %v4695 = vunpack.c.l.b16 %v4520
    %v4696 = vunpack.c.h.b16 %v4520
    %v4697 = vunpack.c.l.b16 %v4521
    %v4698 = vunpack.c.h.b16 %v4521
    %v4699 = vunpack.c.l.b16 %v4522
    %v4700 = vunpack.c.h.b16 %v4522
    %v4701 = vunpack.c.l.b16 %v4523
    %v4702 = vunpack.c.h.b16 %v4523
    %v4703 = vunpack.c.l.b16 %v4524
    %v4704 = vunpack.c.h.b16 %v4524
    %v4705 = vunpack.c.l.b16 %v4525
    %v4706 = vunpack.c.h.b16 %v4525
    %v4707 = vunpack.c.l.b16 %v4526
    %v4708 = vunpack.c.h.b16 %v4526
    %v4709 = vunpack.c.l.b16 %v4527
    %v4710 = vunpack.c.h.b16 %v4527
    %v4711 = vunpack.c.l.b16 %v4528
    %v4712 = vunpack.c.h.b16 %v4528
    %v4713 = vunpack.c.l.b16 %v4529
    %v4714 = vunpack.c.h.b16 %v4529
    %v4715 = vunpack.c.l.b16 %v4530
    %v4716 = vunpack.c.h.b16 %v4530
    %v4717 = vunpack.c.l.b16 %v4531
    %v4718 = vunpack.c.h.b16 %v4531
    %v4719 = vunpack.c.l.b16 %v4532
    %v4720 = vunpack.c.h.b16 %v4532
    %v4721 = vunpack.c.l.b16 %v4533
    %v4722 = vunpack.c.h.b16 %v4533
    %v4723 = vunpack.c.l.b16 %v4534
    %v4724 = vunpack.c.h.b16 %v4534
    %v4725 = vunpack.c.l.b16 %v4535
    %v4726 = vunpack.c.h.b16 %v4535
    %v4727 = vunpack.c.l.b16 %v4536
    %v4728 = vunpack.c.h.b16 %v4536
    %v4729 = vunpack.c.l.b16 %v4537
    %v4730 = vunpack.c.h.b16 %v4537
    %v4731 = vunpack.c.l.b16 %v4538
    %v4732 = vunpack.c.h.b16 %v4538
    %v4733 = vunpack.c.l.b16 %v4539
    %v4734 = vunpack.c.h.b16 %v4539
    %v4735 = vunpack.c.l.b16 %v4540
    %v4736 = vunpack.c.h.b16 %v4540
    %v4737 = vunpack.c.l.b16 %v4541
    %v4738 = vunpack.c.h.b16 %v4541
    %v4739 = vunpack.c.l.b16 %v4542
    %v4740 = vunpack.c.h.b16 %v4542
    %v4741 = vunpack.c.l.b16 %v4543
    %v4742 = vunpack.c.h.b16 %v4543
    %v4743 = vunpack.c.l.b16 %v4544
    %v4744 = vunpack.c.h.b16 %v4544
    %v4745 = vunpack.c.l.b16 %v4545
    %v4746 = vunpack.c.h.b16 %v4545
    %v4747 = vunpack.c.l.b16 %v4546
    %v4748 = vunpack.c.h.b16 %v4546
    %v4749 = vunpack.c.l.b16 %v4547
    %v4750 = vunpack.c.h.b16 %v4547
    %v4751 = vunpack.c.l.b16 %v4548
    %v4752 = vunpack.c.h.b16 %v4548
    %v4753 = vpack.c.b16 %v4629, %v4625
    %v4754 = vpack.c.b16 %v4630, %v4626
    %v4755 = vpack.c.b16 %v4631, %v4627
    %v4756 = vpack.c.b16 %v4632, %v4628
    %v4757 = vpack.c.b16 %v4637, %v4633
    %v4758 = vpack.c.b16 %v4638, %v4634
    %v4759 = vpack.c.b16 %v4639, %v4635
    %v4760 = vpack.c.b16 %v4640, %v4636
    %v4761 = vpack.c.b16 %v4645, %v4641
    %v4762 = vpack.c.b16 %v4646, %v4642
    %v4763 = vpack.c.b16 %v4647, %v4643
    %v4764 = vpack.c.b16 %v4648, %v4644
    %v4765 = vpack.c.b16 %v4653, %v4649
    %v4766 = vpack.c.b16 %v4654, %v4650
    %v4767 = vpack.c.b16 %v4655, %v4651
    %v4768 = vpack.c.b16 %v4656, %v4652
    %v4769 = vpack.c.b16 %v4661, %v4657
    %v4770 = vpack.c.b16 %v4662, %v4658
    %v4771 = vpack.c.b16 %v4663, %v4659
    %v4772 = vpack.c.b16 %v4664, %v4660
    %v4773 = vpack.c.b16 %v4669, %v4665
    %v4774 = vpack.c.b16 %v4670, %v4666
    %v4775 = vpack.c.b16 %v4671, %v4667
    %v4776 = vpack.c.b16 %v4672, %v4668
    %v4777 = vpack.c.b16 %v4677, %v4673
    %v4778 = vpack.c.b16 %v4678, %v4674
    %v4779 = vpack.c.b16 %v4679, %v4675
    %v4780 = vpack.c.b16 %v4680, %v4676
    %v4781 = vpack.c.b16 %v4685, %v4681
    %v4782 = vpack.c.b16 %v4686, %v4682
    %v4783 = vpack.c.b16 %v4687, %v4683
    %v4784 = vpack.c.b16 %v4688, %v4684
    %v4785 = vpack.c.b16 %v4693, %v4689
    %v4786 = vpack.c.b16 %v4694, %v4690
    %v4787 = vpack.c.b16 %v4695, %v4691
    %v4788 = vpack.c.b16 %v4696, %v4692
    %v4789 = vpack.c.b16 %v4701, %v4697
    %v4790 = vpack.c.b16 %v4702, %v4698
    %v4791 = vpack.c.b16 %v4703, %v4699
    %v4792 = vpack.c.b16 %v4704, %v4700
    %v4793 = vpack.c.b16 %v4709, %v4705
    %v4794 = vpack.c.b16 %v4710, %v4706
    %v4795 = vpack.c.b16 %v4711, %v4707
    %v4796 = vpack.c.b16 %v4712, %v4708
    %v4797 = vpack.c.b16 %v4717, %v4713
    %v4798 = vpack.c.b16 %v4718, %v4714
    %v4799 = vpack.c.b16 %v4719, %v4715
    %v4800 = vpack.c.b16 %v4720, %v4716
    %v4801 = vpack.c.b16 %v4725, %v4721
    %v4802 = vpack.c.b16 %v4726, %v4722
    %v4803 = vpack.c.b16 %v4727, %v4723
    %v4804 = vpack.c.b16 %v4728, %v4724
    %v4805 = vpack.c.b16 %v4733, %v4729
    %v4806 = vpack.c.b16 %v4734, %v4730
    %v4807 = vpack.c.b16 %v4735, %v4731
    %v4808 = vpack.c.b16 %v4736, %v4732
    %v4809 = vpack.c.b16 %v4741, %v4737
    %v4810 = vpack.c.b16 %v4742, %v4738
    %v4811 = vpack.c.b16 %v4743, %v4739
    %v4812 = vpack.c.b16 %v4744, %v4740
    %v4813 = vpack.c.b16 %v4749, %v4745
    %v4814 = vpack.c.b16 %v4750, %v4746
    %v4815 = vpack.c.b16 %v4751, %v4747
    %v4816 = vpack.c.b16 %v4752, %v4748
    %4881 = vmatpush.bf16.msra.mxu0 %v4781
    %4882 = vmatpush.bf16.msra.mxu0 %v4777
    %4883 = vmatpush.bf16.msra.mxu0 %v4773
    %4884 = vmatpush.bf16.msra.mxu0 %v4769
    %4885 = vmatpush.bf16.msra.mxu0 %v4765
    %4886 = vmatpush.bf16.msra.mxu0 %v4761
    %4887 = vmatpush.bf16.msra.mxu0 %v4757
    %4888 = vmatpush.bf16.msra.mxu0 %v4753
    %4889 = vmatmul.bf16.gmra.mxu0 %v4550
    %v4890 = vpop.f32.mrf.mxu0
    %v4891 = vadd.f32 %v4553, %v4890
    %v4892 = vpop.f32.mrf.mxu0
    %4893 = vdwg.mxu0
    %4894 = vmatpush.bf16.msra.mxu0 %v4813
    %4895 = vmatpush.bf16.msra.mxu0 %v4809
    %4896 = vmatpush.bf16.msra.mxu0 %v4805
    %4897 = vmatpush.bf16.msra.mxu0 %v4801
    %4898 = vmatpush.bf16.msra.mxu0 %v4797
    %4899 = vmatpush.bf16.msra.mxu0 %v4793
    %4900 = vmatpush.bf16.msra.mxu0 %v4789
    %4901 = vmatpush.bf16.msra.mxu0 %v4785
    %4902 = vmatmul.bf16.gmra.mxu0 %v4551
    %v4903 = vpop.f32.mrf.mxu0
    %v4904 = vadd.f32 %v4891, %v4903
    %v4905 = vpop.f32.mrf.mxu0
    %4906 = vdwg.mxu0
    %4907 = vmatpush.bf16.msra.mxu0 %v4782
    %4908 = vmatpush.bf16.msra.mxu0 %v4778
    %4909 = vmatpush.bf16.msra.mxu0 %v4774
    %4910 = vmatpush.bf16.msra.mxu0 %v4770
    %4911 = vmatpush.bf16.msra.mxu0 %v4766
    %4912 = vmatpush.bf16.msra.mxu0 %v4762
    %4913 = vmatpush.bf16.msra.mxu0 %v4758
    %4914 = vmatpush.bf16.msra.mxu0 %v4754
    %4915 = vmatmul.bf16.gmra.mxu0 %v4550
    %v4916 = vpop.f32.mrf.mxu0
    %v4917 = vadd.f32 %v4554, %v4916
    %v4918 = vpop.f32.mrf.mxu0
    %4919 = vdwg.mxu0
    %4920 = vmatpush.bf16.msra.mxu0 %v4814
    %4921 = vmatpush.bf16.msra.mxu0 %v4810
    %4922 = vmatpush.bf16.msra.mxu0 %v4806
    %4923 = vmatpush.bf16.msra.mxu0 %v4802
    %4924 = vmatpush.bf16.msra.mxu0 %v4798
    %4925 = vmatpush.bf16.msra.mxu0 %v4794
    %4926 = vmatpush.bf16.msra.mxu0 %v4790
    %4927 = vmatpush.bf16.msra.mxu0 %v4786
    %4928 = vmatmul.bf16.gmra.mxu0 %v4551
    %v4929 = vpop.f32.mrf.mxu0
    %v4930 = vadd.f32 %v4917, %v4929
    %v4931 = vpop.f32.mrf.mxu0
    %4932 = vdwg.mxu0
    %4933 = vmatpush.bf16.msra.mxu0 %v4783
    %4934 = vmatpush.bf16.msra.mxu0 %v4779
    %4935 = vmatpush.bf16.msra.mxu0 %v4775
    %4936 = vmatpush.bf16.msra.mxu0 %v4771
    %4937 = vmatpush.bf16.msra.mxu0 %v4767
    %4938 = vmatpush.bf16.msra.mxu0 %v4763
    %4939 = vmatpush.bf16.msra.mxu0 %v4759
    %4940 = vmatpush.bf16.msra.mxu0 %v4755
    %4941 = vmatmul.bf16.gmra.mxu0 %v4550
    %v4942 = vpop.f32.mrf.mxu0
    %v4943 = vadd.f32 %v4555, %v4942
    %v4944 = vpop.f32.mrf.mxu0
    %4945 = vdwg.mxu0
    %4946 = vmatpush.bf16.msra.mxu0 %v4815
    %4947 = vmatpush.bf16.msra.mxu0 %v4811
    %4948 = vmatpush.bf16.msra.mxu0 %v4807
    %4949 = vmatpush.bf16.msra.mxu0 %v4803
    %4950 = vmatpush.bf16.msra.mxu0 %v4799
    %4951 = vmatpush.bf16.msra.mxu0 %v4795
    %4952 = vmatpush.bf16.msra.mxu0 %v4791
    %4953 = vmatpush.bf16.msra.mxu0 %v4787
    %4954 = vmatmul.bf16.gmra.mxu0 %v4551
    %v4955 = vpop.f32.mrf.mxu0
    %v4956 = vadd.f32 %v4943, %v4955
    %v4957 = vpop.f32.mrf.mxu0
    %4958 = vdwg.mxu0
    %4959 = vmatpush.bf16.msra.mxu0 %v4784
    %4960 = vmatpush.bf16.msra.mxu0 %v4780
    %4961 = vmatpush.bf16.msra.mxu0 %v4776
    %4962 = vmatpush.bf16.msra.mxu0 %v4772
    %4963 = vmatpush.bf16.msra.mxu0 %v4768
    %4964 = vmatpush.bf16.msra.mxu0 %v4764
    %4965 = vmatpush.bf16.msra.mxu0 %v4760
    %4966 = vmatpush.bf16.msra.mxu0 %v4756
    %4967 = vmatmul.bf16.gmra.mxu0 %v4550
    %v4968 = vpop.f32.mrf.mxu0
    %v4969 = vadd.f32 %v4556, %v4968
    %v4970 = vpop.f32.mrf.mxu0
    %4971 = vdwg.mxu0
    %4972 = vmatpush.bf16.msra.mxu0 %v4816
    %4973 = vmatpush.bf16.msra.mxu0 %v4812
    %4974 = vmatpush.bf16.msra.mxu0 %v4808
    %4975 = vmatpush.bf16.msra.mxu0 %v4804
    %4976 = vmatpush.bf16.msra.mxu0 %v4800
    %4977 = vmatpush.bf16.msra.mxu0 %v4796
    %4978 = vmatpush.bf16.msra.mxu0 %v4792
    %4979 = vmatpush.bf16.msra.mxu0 %v4788
    %4980 = vmatmul.bf16.gmra.mxu0 %v4551
    %v4981 = vpop.f32.mrf.mxu0
    %v4982 = vadd.f32 %v4969, %v4981
    %v4983 = vpop.f32.mrf.mxu0
    %4984 = vdwg.mxu0
    %4985 = vst [vmem:[%s91] sm:$0xff] %v3880
    %4986 = vst [vmem:[%s91 + $0x8] sm:$0xff] %v3906
    %4987 = vst [vmem:[%s93] sm:$0xff] %v4904
    %4988 = vst [vmem:[%s93 + $0x8] sm:$0xff] %v4930
    %4989 = vst [vmem:[%s93 + $0x10] sm:$0xff] %v4956
    %4990 = vst [vmem:[%s93 + $0x18] sm:$0xff] %v4982
    %4992 = vrot.lane.b32.xlu0 %v2292, 64
    %v4993 = vpop.permute.xlu0 %4992
    %4996 = vrot.lane.b32.xlu0 %v3048, 72
    %v4997 = vpop.permute.xlu0 %4996
    %5000 = vrot.lane.b32.xlu0 %v3077, 80
    %v5001 = vpop.permute.xlu0 %5000
    %v5003 = vsel %vm1589, %v1533, %v4993
    %vm5004 = vcmask 588800
    %v5005 = vsel %vm5004, %v5003, %v4997
    %vm5006 = vcmask 654336
    %v5007 = vsel %vm5006, %v5005, %v5001
    %vm5008 = vcmask 719872
    %v5009 = vsel %vm5008, %v5007, 0.0
    %5010 = vst [vmem:[%s89] sm:$0xff] %v5009
    // Predicated region
    $region282: #{forward_impl.5} parent=1 // pred_check
      _
    $region283: #{forward_impl.5} parent=1 // pred_check_branch
      %5012 = sbr.rel (0) target = $region285
    $region284: #{forward_impl.5} parent=1 // pred_region
      _
    $region285: #{forward_impl.5} parent=1 // pred_fallthru
      _
    // Predicated region
    $region286: #{forward_impl.5} parent=1 // pred_check
      _
    $region287: #{forward_impl.5} parent=1 // pred_check_branch
      %5014 = sbr.rel (0) target = $region289
    $region288: #{forward_impl.5} parent=1 // pred_region
      _
    $region289: #{forward_impl.5} parent=1 // pred_fallthru
      _
    // Predicated region
    $region290: #{forward_impl.5} parent=1 // pred_check
      _
    $region291: #{forward_impl.5} parent=1 // pred_check_branch
      %5016 = sbr.rel (0) target = $region293
    $region292: #{forward_impl.5} parent=1 // pred_region
      _
    $region293: #{forward_impl.5} parent=1 // pred_fallthru
      _
    // Predicated region
    $region294: #{forward_impl.5} parent=1 // pred_check
      _
    $region295: #{forward_impl.5} parent=1 // pred_check_branch
      %5018 = sbr.rel (0) target = $region297
    $region296: #{forward_impl.5} parent=1 // pred_region
      _
    $region297: #{forward_impl.5} parent=1 // pred_fallthru
      _
    // Predicated region
    $region298: #{forward_impl.5} parent=1 // pred_check
      _
    $region299: #{forward_impl.5} parent=1 // pred_check_branch
      %5020 = sbr.rel (0) target = $region301
    $region300: #{forward_impl.5} parent=1 // pred_region
      _
    $region301: #{forward_impl.5} parent=1 // pred_fallthru
      _
    // Predicated region
    $region302: #{forward_impl.5} parent=1 // pred_check
      _
    $region303: #{forward_impl.5} parent=1 // pred_check_branch
      %5022 = sbr.rel (0) target = $region305
    $region304: #{forward_impl.5} parent=1 // pred_region
      _
    $region305: #{forward_impl.5} parent=1 // pred_fallthru
      _
    // Predicated region
    $region306: #{forward_impl.5} parent=1 // pred_check
      _
    $region307: #{forward_impl.5} parent=1 // pred_check_branch
      %5024 = sbr.rel (0) target = $region309
    $region308: #{forward_impl.5} parent=1 // pred_region
      _
    $region309: #{forward_impl.5} parent=1 // pred_fallthru
      _
    // Predicated region
    $region310: #{forward_impl.5} parent=1 // pred_check
      _
    $region311: #{forward_impl.5} parent=1 // pred_check_branch
      %5026 = sbr.rel (0) target = $region313
    $region312: #{forward_impl.5} parent=1 // pred_region
      _
    $region313: #{forward_impl.5} parent=1 // pred_fallthru
      _
    %5027 = vsyncpa [#allocation3], 1
    %5028 = vsyncpa [#allocation5], 1
    %5029 = vsyncpa [#allocation8], 1
    %5030 = vsyncpa [#allocation11], 1
    %5031 = vsyncpa [#allocation14], 1
    %5032 = vsyncpa [#allocation17], 1
    %5033 = vsyncpa [#allocation20], 1
    %5034 = vsyncpa [#allocation23], 1
    %5035 = vsyncpa [#allocation26], 1
    %5036 = vsyncpa [#allocation29], 1
    %5037 = vsyncpa [#allocation32], 1
    %5038 = vsyncpa [#allocation35], 1
    %5039 = vsyncpa [#allocation38], 1
    %5040 = vsyncpa [#allocation41], 1

</llo_original>
